<compile_context>
chip_gen: v7x
topology: tpu7x:2x2x1
jax: 0.10.0
libtpu: 0.0.40
codegen_flags: <defaults>
</compile_context>

<pallas_src>
import math

import jax
import jax.numpy as jnp
from jax.experimental import pallas as pl
from jax.experimental.pallas import tpu as pltpu

# Small, module-consistent shapes: batch, seq, embed, heads, ffn hidden.
B, T, D, H, FF = 2, 8, 32, 4, 64
HD = D // H
BH = B * H
SCALE = 1.0 / math.sqrt(HD)          # scaled_dot_product_attention scale (1/sqrt(head_dim))


def encoder_block_kernel(x_ref, wqkv_ref, bqkv_ref, wo_ref, bo_ref,
                         w1_ref, b1_ref, w2_ref, b2_ref, out_ref):
    """Single invocation: all B*T rows at once, q/k/v and heads batched on one dim."""
    x = x_ref[...]                                            # (B*T, D)

    # Replicate x over heads and over the fused q/k/v stack. Leading-dim
    # reshapes/broadcasts only; the (T, D) minor tile is untouched (T == 8 sublanes),
    # so this is pure vreg replication, no relayout.
    xh = jnp.broadcast_to(x.reshape(B, 1, T, D), (B, H, T, D)).reshape(BH, T, D)
    xh3 = jnp.broadcast_to(xh.reshape(1, BH, T, D), (3, BH, T, D)).reshape(3 * BH, T, D)

    # Fused Q/K/V head projections: ONE batched matmul + ONE bias add.
    qkv = jnp.einsum('ntd,ndk->ntk', xh3, wqkv_ref[...],
                     preferred_element_type=jnp.float32) + bqkv_ref[...]   # (3BH, T, HD)
    q = qkv[:BH]                                              # (BH, T, HD)
    k = qkv[BH:2 * BH]
    v = qkv[2 * BH:]

    # Scores for all B*H heads at once; single fused softmax (encoder: no mask).
    s = jnp.einsum('nqd,nkd->nqk', q, k, preferred_element_type=jnp.float32) * SCALE
    s = s - jnp.max(s, axis=-1, keepdims=True)
    p = jnp.exp(s)
    p = p * pl.reciprocal(jnp.sum(p, axis=-1, keepdims=True), approx=True)

    ctx = jnp.einsum('nqk,nkd->nqd', p, v, preferred_element_type=jnp.float32)  # (BH, T, HD)

    # Head merge + output projection as an accumulation over heads (no concat):
    #   attn[b, t, :] = sum_h ctx[b*H+h, t, :] @ Wo[h*HD:(h+1)*HD, :]  + bo
    part = jnp.einsum('ntk,nkd->ntd', ctx, wo_ref[...],
                      preferred_element_type=jnp.float32)                 # (BH, T, D)
    attn = jnp.sum(part.reshape(B, H, T, D), axis=1).reshape(B * T, D) + bo_ref[...]

    x1 = x + attn                                                         # residual 1

    # Position-wise FFN: Linear -> (Dropout=id) -> ReLU -> Linear.
    hid = jnp.maximum(
        jnp.dot(x1, w1_ref[...], preferred_element_type=jnp.float32) + b1_ref[...], 0.0)
    ffn = jnp.dot(hid, w2_ref[...], preferred_element_type=jnp.float32) + b2_ref[...]

    out_ref[...] = x1 + ffn                                               # residual 2


@jax.jit
def encoder_block(x, params):
    """x: (B, T, D) float32. Weights are stored [in_features, out_features]."""
    wq, bq, wk, bk, wv, bv, wo, bo, w1, b1, w2, b2 = params

    # ---- wrapper-side layout plumbing (one-time reshapes/tiles, no compute) ----
    def head_cols(w):     # (D, D) -> (H, D, HD): head-h output columns
        return w.reshape(D, H, HD).transpose(1, 0, 2)

    def head_bias(b):     # (D,) -> (H, 1, HD)
        return b.reshape(H, 1, HD)

    # Stack q/k/v on the batch dim and tile over B so the kernel runs a single
    # 3*B*H-batched projection einsum.
    wqkv = jnp.concatenate(
        [jnp.tile(head_cols(w), (B, 1, 1)) for w in (wq, wk, wv)], axis=0)   # (3BH, D, HD)
    bqkv = jnp.concatenate(
        [jnp.tile(head_bias(b), (B, 1, 1)) for b in (bq, bk, bv)], axis=0)   # (3BH, 1, HD)
    wo_n = jnp.tile(wo.reshape(H, HD, D), (B, 1, 1))                         # (BH, HD, D)

    x2 = x.reshape(B * T, D)                                  # fold batch into rows
    vmem = pl.BlockSpec(memory_space=pltpu.MemorySpace.VMEM)  # full array, VMEM-resident
    out2 = pl.pallas_call(
        encoder_block_kernel,
        out_shape=jax.ShapeDtypeStruct((B * T, D), jnp.float32),
        in_specs=[vmem] * 9,
        out_specs=vmem,
    )(x2, wqkv, bqkv, wo_n, bo.reshape(1, D), w1, b1.reshape(1, FF), w2, b2.reshape(1, D))
    return out2.reshape(B, T, D)


# ----------------------------- pure-JAX reference -----------------------------
def encoder_block_ref(x, params):
    wq, bq, wk, bk, wv, bv, wo, bo, w1, b1, w2, b2 = params
    q = x @ wq + bq
    k = x @ wk + bk
    v = x @ wv + bv

    def split(t):  # (B, T, D) -> (B, H, T, HD)
        return t.reshape(B, T, H, HD).transpose(0, 2, 1, 3)

    qh, kh, vh = split(q), split(k), split(v)
    s = jnp.einsum('bhqd,bhkd->bhqk', qh, kh) * SCALE
    p = jax.nn.softmax(s, axis=-1)
    ctx = jnp.einsum('bhqk,bhkd->bhqd', p, vh)
    ctx = ctx.transpose(0, 2, 1, 3).reshape(B, T, D)
    x = x + (ctx @ wo + bo)                               # residual 1 (norms are dead code)
    hid = jnp.maximum(x @ w1 + b1, 0.0)
    return x + (hid @ w2 + b2)                            # residual 2


# ----------------------------- parameter creation -----------------------------
def _xavier_uniform(key, shape):
    fan_in, fan_out = shape
    bound = math.sqrt(6.0 / (fan_in + fan_out))
    return jax.random.uniform(key, shape, jnp.float32, -bound, bound)


def make_params(key):
    k = jax.random.split(key, 8)
    # Attention projections: xavier_uniform weights ([in, out] storage), zero biases.
    wq, wk, wv, wo = (_xavier_uniform(k[i], (D, D)) for i in range(4))
    bq = bk = bv = bo = jnp.zeros((D,), jnp.float32)
    # FFN linears: torch-default-style uniform(+-1/sqrt(fan_in)) init.
    w1 = jax.random.uniform(k[4], (D, FF), jnp.float32, -1 / math.sqrt(D), 1 / math.sqrt(D))
    b1 = jax.random.uniform(k[5], (FF,), jnp.float32, -1 / math.sqrt(D), 1 / math.sqrt(D))
    w2 = jax.random.uniform(k[6], (FF, D), jnp.float32, -1 / math.sqrt(FF), 1 / math.sqrt(FF))
    b2 = jax.random.uniform(k[7], (D,), jnp.float32, -1 / math.sqrt(FF), 1 / math.sqrt(FF))
    # norm1 / norm2 (LayerNorm) parameters exist in the module, but forward() discards
    # their outputs (x_new is immediately overwritten), so they are intentionally unused.
    return (wq, bq, wk, bk, wv, bv, wo, bo, w1, b1, w2, b2)


if __name__ == "__main__":
    root = jax.random.PRNGKey(0)
    kp, kx = jax.random.split(root)
    params = make_params(kp)
    x = jax.random.normal(kx, (B, T, D), jnp.float32)

    out = jax.block_until_ready(encoder_block(x, params))
    ref = encoder_block_ref(x, params)

    assert out.shape == (B, T, D)
    # Tolerance covers the approximate EUP reciprocal used in the in-kernel softmax.
    assert jnp.allclose(out, ref, atol=5e-3, rtol=5e-3), (
        f"Pallas kernel mismatch vs reference: max abs err {jnp.max(jnp.abs(out - ref))}")
    print("KERNEL_OK")
</pallas_src>

<mosaic_0001>
module attributes {stable_mosaic.version = 11 : i64} {
  func.func @encoder_block_kernel(%arg0: memref<16x32xf32, #tpu.memory_space<vmem>>, %arg1: memref<24x32x8xf32, #tpu.memory_space<vmem>>, %arg2: memref<24x1x8xf32, #tpu.memory_space<vmem>>, %arg3: memref<8x8x32xf32, #tpu.memory_space<vmem>>, %arg4: memref<1x32xf32, #tpu.memory_space<vmem>>, %arg5: memref<32x64xf32, #tpu.memory_space<vmem>>, %arg6: memref<1x64xf32, #tpu.memory_space<vmem>>, %arg7: memref<64x32xf32, #tpu.memory_space<vmem>>, %arg8: memref<1x32xf32, #tpu.memory_space<vmem>>, %arg9: memref<16x32xf32, #tpu.memory_space<vmem>>) attributes {dimension_semantics = [], scalar_prefetch = 0 : i64, scratch_operands = 0 : i64, tpu.core_type = #tpu.core_type<tc>} {
    %c0 = arith.constant 0 : index
    %c0_0 = arith.constant 0 : index
    %0 = vector.load %arg0[%c0, %c0_0] : memref<16x32xf32, #tpu.memory_space<vmem>>, vector<16x32xf32>
    %1 = vector.shape_cast %0 : vector<16x32xf32> to vector<2x1x8x32xf32>
    %2 = vector.shape_cast %1 : vector<2x1x8x32xf32> to vector<2x1x8x32xf32>
    %3 = vector.broadcast %2 : vector<2x1x8x32xf32> to vector<2x4x8x32xf32>
    %4 = vector.shape_cast %3 : vector<2x4x8x32xf32> to vector<8x8x32xf32>
    %5 = vector.shape_cast %4 : vector<8x8x32xf32> to vector<1x8x8x32xf32>
    %6 = vector.shape_cast %5 : vector<1x8x8x32xf32> to vector<1x8x8x32xf32>
    %7 = vector.broadcast %6 : vector<1x8x8x32xf32> to vector<3x8x8x32xf32>
    %8 = vector.shape_cast %7 : vector<3x8x8x32xf32> to vector<24x8x32xf32>
    %c0_1 = arith.constant 0 : index
    %c0_2 = arith.constant 0 : index
    %c0_3 = arith.constant 0 : index
    %9 = vector.load %arg1[%c0_1, %c0_2, %c0_3] : memref<24x32x8xf32, #tpu.memory_space<vmem>>, vector<24x32x8xf32>
    "tpu.trace_start"() <{level = 10 : i32, message = "ntd,ndk->ntk"}> : () -> ()
    %cst = arith.constant dense<0.000000e+00> : vector<24x8x8xf32>
    %10 = tpu.matmul %8, %9, %cst {dimension_numbers = #tpu.dot_dimension_numbers<[2], [1], [1], [2], [0, 0, 0, 1, 1, 2], [0], [0]>} : vector<24x8x32xf32>, vector<24x32x8xf32>, vector<24x8x8xf32> -> vector<24x8x8xf32>
    "tpu.trace_stop"() : () -> ()
    %c0_4 = arith.constant 0 : index
    %c0_5 = arith.constant 0 : index
    %c0_6 = arith.constant 0 : index
    %11 = vector.load %arg2[%c0_4, %c0_5, %c0_6] : memref<24x1x8xf32, #tpu.memory_space<vmem>>, vector<24x1x8xf32>
    %12 = vector.broadcast %11 : vector<24x1x8xf32> to vector<24x8x8xf32>
    %13 = arith.addf %10, %12 : vector<24x8x8xf32>
    %14 = vector.extract_strided_slice %13 {offsets = [0, 0, 0], sizes = [8, 8, 8], strides = [1, 1, 1]} : vector<24x8x8xf32> to vector<8x8x8xf32>
    %15 = vector.extract_strided_slice %13 {offsets = [8, 0, 0], sizes = [8, 8, 8], strides = [1, 1, 1]} : vector<24x8x8xf32> to vector<8x8x8xf32>
    %16 = vector.extract_strided_slice %13 {offsets = [16, 0, 0], sizes = [8, 8, 8], strides = [1, 1, 1]} : vector<24x8x8xf32> to vector<8x8x8xf32>
    "tpu.trace_start"() <{level = 10 : i32, message = "nqd,nkd->nqk"}> : () -> ()
    %cst_7 = arith.constant dense<0.000000e+00> : vector<8x8x8xf32>
    %17 = tpu.matmul %14, %15, %cst_7 {dimension_numbers = #tpu.dot_dimension_numbers<[2], [2], [1], [1], [0, 0, 0, 1, 1, 1], [0], [0]>} : vector<8x8x8xf32>, vector<8x8x8xf32>, vector<8x8x8xf32> -> vector<8x8x8xf32>
    "tpu.trace_stop"() : () -> ()
    %cst_8 = arith.constant 0.353553385 : f32
    %18 = vector.broadcast %cst_8 : f32 to vector<8x8x8xf32>
    %19 = arith.mulf %17, %18 : vector<8x8x8xf32>
    %cst_9 = arith.constant dense<0xFF800000> : vector<8x8xf32>
    %20 = vector.multi_reduction <maximumf>, %19, %cst_9 [2] : vector<8x8x8xf32> to vector<8x8xf32>
    %21 = vector.shape_cast %20 : vector<8x8xf32> to vector<8x8x1xf32>
    %22 = vector.broadcast %21 : vector<8x8x1xf32> to vector<8x8x8xf32>
    %23 = arith.subf %19, %22 : vector<8x8x8xf32>
    %24 = math.exp %23 : vector<8x8x8xf32>
    %cst_10 = arith.constant dense<0.000000e+00> : vector<8x8xf32>
    %25 = vector.multi_reduction <add>, %24, %cst_10 [2] : vector<8x8x8xf32> to vector<8x8xf32>
    %26 = vector.shape_cast %25 : vector<8x8xf32> to vector<8x8x1xf32>
    %27 = tpu.reciprocal %26 {approx = true} : vector<8x8x1xf32> -> vector<8x8x1xf32>
    %28 = vector.broadcast %27 : vector<8x8x1xf32> to vector<8x8x8xf32>
    %29 = arith.mulf %24, %28 : vector<8x8x8xf32>
    "tpu.trace_start"() <{level = 10 : i32, message = "nqk,nkd->nqd"}> : () -> ()
    %cst_11 = arith.constant dense<0.000000e+00> : vector<8x8x8xf32>
    %30 = tpu.matmul %29, %16, %cst_11 {dimension_numbers = #tpu.dot_dimension_numbers<[2], [1], [1], [2], [0, 0, 0, 1, 1, 2], [0], [0]>} : vector<8x8x8xf32>, vector<8x8x8xf32>, vector<8x8x8xf32> -> vector<8x8x8xf32>
    "tpu.trace_stop"() : () -> ()
    %c0_12 = arith.constant 0 : index
    %c0_13 = arith.constant 0 : index
    %c0_14 = arith.constant 0 : index
    %31 = vector.load %arg3[%c0_12, %c0_13, %c0_14] : memref<8x8x32xf32, #tpu.memory_space<vmem>>, vector<8x8x32xf32>
    "tpu.trace_start"() <{level = 10 : i32, message = "ntk,nkd->ntd"}> : () -> ()
    %cst_15 = arith.constant dense<0.000000e+00> : vector<8x8x32xf32>
    %32 = tpu.matmul %30, %31, %cst_15 {dimension_numbers = #tpu.dot_dimension_numbers<[2], [1], [1], [2], [0, 0, 0, 1, 1, 2], [0], [0]>} : vector<8x8x8xf32>, vector<8x8x32xf32>, vector<8x8x32xf32> -> vector<8x8x32xf32>
    "tpu.trace_stop"() : () -> ()
    %33 = vector.shape_cast %32 : vector<8x8x32xf32> to vector<2x4x8x32xf32>
    %cst_16 = arith.constant dense<0.000000e+00> : vector<2x8x32xf32>
    %34 = vector.multi_reduction <add>, %33, %cst_16 [1] : vector<2x4x8x32xf32> to vector<2x8x32xf32>
    %35 = vector.shape_cast %34 : vector<2x8x32xf32> to vector<16x32xf32>
    %c0_17 = arith.constant 0 : index
    %c0_18 = arith.constant 0 : index
    %36 = vector.load %arg4[%c0_17, %c0_18] : memref<1x32xf32, #tpu.memory_space<vmem>>, vector<1x32xf32>
    %37 = vector.broadcast %36 : vector<1x32xf32> to vector<16x32xf32>
    %38 = arith.addf %35, %37 : vector<16x32xf32>
    %39 = arith.addf %0, %38 : vector<16x32xf32>
    %c0_19 = arith.constant 0 : index
    %c0_20 = arith.constant 0 : index
    %40 = vector.load %arg5[%c0_19, %c0_20] : memref<32x64xf32, #tpu.memory_space<vmem>>, vector<32x64xf32>
    %cst_21 = arith.constant dense<0.000000e+00> : vector<16x64xf32>
    %41 = tpu.matmul %39, %40, %cst_21 {dimension_numbers = #tpu.dot_dimension_numbers<[1], [0], [0], [1], [0, 0, 1, 1], [], []>} : vector<16x32xf32>, vector<32x64xf32>, vector<16x64xf32> -> vector<16x64xf32>
    %c0_22 = arith.constant 0 : index
    %c0_23 = arith.constant 0 : index
    %42 = vector.load %arg6[%c0_22, %c0_23] : memref<1x64xf32, #tpu.memory_space<vmem>>, vector<1x64xf32>
    %43 = vector.broadcast %42 : vector<1x64xf32> to vector<16x64xf32>
    %44 = arith.addf %41, %43 : vector<16x64xf32>
    %cst_24 = arith.constant 0.000000e+00 : f32
    %45 = vector.broadcast %cst_24 : f32 to vector<16x64xf32>
    %46 = arith.maximumf %44, %45 : vector<16x64xf32>
    %c0_25 = arith.constant 0 : index
    %c0_26 = arith.constant 0 : index
    %47 = vector.load %arg7[%c0_25, %c0_26] : memref<64x32xf32, #tpu.memory_space<vmem>>, vector<64x32xf32>
    %cst_27 = arith.constant dense<0.000000e+00> : vector<16x32xf32>
    %48 = tpu.matmul %46, %47, %cst_27 {dimension_numbers = #tpu.dot_dimension_numbers<[1], [0], [0], [1], [0, 0, 1, 1], [], []>} : vector<16x64xf32>, vector<64x32xf32>, vector<16x32xf32> -> vector<16x32xf32>
    %c0_28 = arith.constant 0 : index
    %c0_29 = arith.constant 0 : index
    %49 = vector.load %arg8[%c0_28, %c0_29] : memref<1x32xf32, #tpu.memory_space<vmem>>, vector<1x32xf32>
    %50 = vector.broadcast %49 : vector<1x32xf32> to vector<16x32xf32>
    %51 = arith.addf %48, %50 : vector<16x32xf32>
    %52 = arith.addf %39, %51 : vector<16x32xf32>
    %c0_30 = arith.constant 0 : index
    %c0_31 = arith.constant 0 : index
    %53 = vector.load %arg9[%c0_30, %c0_31] : memref<16x32xf32, #tpu.memory_space<vmem>>, vector<16x32xf32>
    tpu.vector_store %arg9[%c0_30, %c0_31], %52 {strides = array<i32>} : memref<16x32xf32, #tpu.memory_space<vmem>>, vector<16x32xf32>,
    return
  }
}

</mosaic_0001>

<llo_original>
// kernel: encoder_block.1
$region0: #{encoder_block.1}
  #allocation0 [shape = 'u32[]', space=smem, size = 0x4, offset = 0x4, fixed_abs, tag = 'smem constant byte address 0x4 - core index']
  #allocation1 [shape = 'u32[144,128]{1,0:T(1,128)}', space=vmem, size = 0x12000, scoped, tag = 'internal scratch']
  %s0 = inlined_call_operand.vmem [shape: f32[16,32], index: 0, kind: input, shape index: {}]
  %s1 = inlined_call_operand.vmem [shape: f32[24,32,8], index: 1, kind: input, shape index: {}]
  %s2 = inlined_call_operand.vmem [shape: f32[24,1,8], index: 2, kind: input, shape index: {}]
  %s3 = inlined_call_operand.vmem [shape: f32[8,8,32], index: 3, kind: input, shape index: {}]
  %s4 = inlined_call_operand.vmem [shape: f32[1,32], index: 4, kind: input, shape index: {}]
  %s5 = inlined_call_operand.vmem [shape: f32[32,64], index: 5, kind: input, shape index: {}]
  %s6 = inlined_call_operand.vmem [shape: f32[1,64], index: 6, kind: input, shape index: {}]
  %s7 = inlined_call_operand.vmem [shape: f32[64,32], index: 7, kind: input, shape index: {}]
  %s8 = inlined_call_operand.vmem [shape: f32[1,32], index: 8, kind: input, shape index: {}]
  %s9 = inlined_call_operand.hbm [shape: f32[16,32], index: 9, kind: output, shape index: {}]
  %s10 = sld [smem:[#allocation0]]
  $region46: #{encoder_block.1} parent=0
    _
  %s12 = ssub.s32 1, %s10
  %s13 = scalar_select 0, %s12, %s10
  $region1: #{encoder_block.1} parent=0
    #allocation2 [shape = 'u8[8192]{0}', space=vmem, size = 0x2000, scoped, tag = 'output window, operand 0, single buffered']
    #allocation3 [shape = 's32[1]{0}', space=sflag, size = 0x4, scoped, tag = 'scoped memory for encoder_block.1']
    %14 = vsyncpa [#allocation3], 0
    // Predicated region
    $region2: #{encoder_block.1} parent=1 // pred_check
      _
    $region3: #{encoder_block.1} parent=1 // pred_check_branch
      %16 = sbr.rel (0) target = $region5
    $region4: #{encoder_block.1} parent=1 // pred_region
      _
    $region5: #{encoder_block.1} parent=1 // pred_fallthru
      _
    // Predicated region
    $region6: #{encoder_block.1} parent=1 // pred_check
      _
    $region7: #{encoder_block.1} parent=1 // pred_check_branch
      %18 = sbr.rel (0) target = $region9
    $region8: #{encoder_block.1} parent=1 // pred_region
      _
    $region9: #{encoder_block.1} parent=1 // pred_fallthru
      _
    // Predicated region
    $region10: #{encoder_block.1} parent=1 // pred_check
      _
    $region11: #{encoder_block.1} parent=1 // pred_check_branch
      %20 = sbr.rel (0) target = $region13
    $region12: #{encoder_block.1} parent=1 // pred_region
      _
    $region13: #{encoder_block.1} parent=1 // pred_fallthru
      _
    // Predicated region
    $region14: #{encoder_block.1} parent=1 // pred_check
      _
    $region15: #{encoder_block.1} parent=1 // pred_check_branch
      %22 = sbr.rel (0) target = $region17
    $region16: #{encoder_block.1} parent=1 // pred_region
      _
    $region17: #{encoder_block.1} parent=1 // pred_fallthru
      _
    // Predicated region
    $region18: #{encoder_block.1} parent=1 // pred_check
      _
    $region19: #{encoder_block.1} parent=1 // pred_check_branch
      %24 = sbr.rel (0) target = $region21
    $region20: #{encoder_block.1} parent=1 // pred_region
      _
    $region21: #{encoder_block.1} parent=1 // pred_fallthru
      _
    // Predicated region
    $region22: #{encoder_block.1} parent=1 // pred_check
      _
    $region23: #{encoder_block.1} parent=1 // pred_check_branch
      %26 = sbr.rel (0) target = $region25
    $region24: #{encoder_block.1} parent=1 // pred_region
      _
    $region25: #{encoder_block.1} parent=1 // pred_fallthru
      _
    // Predicated region
    $region26: #{encoder_block.1} parent=1 // pred_check
      _
    $region27: #{encoder_block.1} parent=1 // pred_check_branch
      %28 = sbr.rel (0) target = $region29
    $region28: #{encoder_block.1} parent=1 // pred_region
      _
    $region29: #{encoder_block.1} parent=1 // pred_fallthru
      _
    // Predicated region
    $region30: #{encoder_block.1} parent=1 // pred_check
      _
    $region31: #{encoder_block.1} parent=1 // pred_check_branch
      %30 = sbr.rel (0) target = $region33
    $region32: #{encoder_block.1} parent=1 // pred_region
      _
    $region33: #{encoder_block.1} parent=1 // pred_fallthru
      _
    // Predicated region
    $region34: #{encoder_block.1} parent=1 // pred_check
      _
    $region35: #{encoder_block.1} parent=1 // pred_check_branch
      %32 = sbr.rel (0) target = $region37
    $region36: #{encoder_block.1} parent=1 // pred_region
      _
    $region37: #{encoder_block.1} parent=1 // pred_fallthru
      _
    %v33 = vld [vmem:[%s0] sm:$0xff]
    %v34 = vld [vmem:[%s0 + $0x8] sm:$0xff]
    %v35 = vld [vmem:[%s1] sm:$0xff]
    %v36 = vld [vmem:[%s1 + $0x8] sm:$0xff]
    %v37 = vld [vmem:[%s1 + $0x10] sm:$0xff]
    %v38 = vld [vmem:[%s1 + $0x18] sm:$0xff]
    %v39 = vld [vmem:[%s1 + $0x20] sm:$0xff]
    %v40 = vld [vmem:[%s1 + $0x28] sm:$0xff]
    %v41 = vld [vmem:[%s1 + $0x30] sm:$0xff]
    %v42 = vld [vmem:[%s1 + $0x38] sm:$0xff]
    %v43 = vld [vmem:[%s1 + $0x40] sm:$0xff]
    %v44 = vld [vmem:[%s1 + $0x48] sm:$0xff]
    %v45 = vld [vmem:[%s1 + $0x50] sm:$0xff]
    %v46 = vld [vmem:[%s1 + $0x58] sm:$0xff]
    %v47 = vld [vmem:[%s1 + $0x60] sm:$0xff]
    %v48 = vld [vmem:[%s1 + $0x68] sm:$0xff]
    %v49 = vld [vmem:[%s1 + $0x70] sm:$0xff]
    %v50 = vld [vmem:[%s1 + $0x78] sm:$0xff]
    %v51 = vld [vmem:[%s1 + $0x80] sm:$0xff]
    %v52 = vld [vmem:[%s1 + $0x88] sm:$0xff]
    %v53 = vld [vmem:[%s1 + $0x90] sm:$0xff]
    %v54 = vld [vmem:[%s1 + $0x98] sm:$0xff]
    %v55 = vld [vmem:[%s1 + $0xa0] sm:$0xff]
    %v56 = vld [vmem:[%s1 + $0xa8] sm:$0xff]
    %v57 = vld [vmem:[%s1 + $0xb0] sm:$0xff]
    %v58 = vld [vmem:[%s1 + $0xb8] sm:$0xff]
    %v59 = vld [vmem:[%s1 + $0xc0] sm:$0xff]
    %v60 = vld [vmem:[%s1 + $0xc8] sm:$0xff]
    %v61 = vld [vmem:[%s1 + $0xd0] sm:$0xff]
    %v62 = vld [vmem:[%s1 + $0xd8] sm:$0xff]
    %v63 = vld [vmem:[%s1 + $0xe0] sm:$0xff]
    %v64 = vld [vmem:[%s1 + $0xe8] sm:$0xff]
    %v65 = vld [vmem:[%s1 + $0xf0] sm:$0xff]
    %v66 = vld [vmem:[%s1 + $0xf8] sm:$0xff]
    %v67 = vld [vmem:[%s1 + $0x100] sm:$0xff]
    %v68 = vld [vmem:[%s1 + $0x108] sm:$0xff]
    %v69 = vld [vmem:[%s1 + $0x110] sm:$0xff]
    %v70 = vld [vmem:[%s1 + $0x118] sm:$0xff]
    %v71 = vld [vmem:[%s1 + $0x120] sm:$0xff]
    %v72 = vld [vmem:[%s1 + $0x128] sm:$0xff]
    %v73 = vld [vmem:[%s1 + $0x130] sm:$0xff]
    %v74 = vld [vmem:[%s1 + $0x138] sm:$0xff]
    %v75 = vld [vmem:[%s1 + $0x140] sm:$0xff]
    %v76 = vld [vmem:[%s1 + $0x148] sm:$0xff]
    %v77 = vld [vmem:[%s1 + $0x150] sm:$0xff]
    %v78 = vld [vmem:[%s1 + $0x158] sm:$0xff]
    %v79 = vld [vmem:[%s1 + $0x160] sm:$0xff]
    %v80 = vld [vmem:[%s1 + $0x168] sm:$0xff]
    %v81 = vld [vmem:[%s1 + $0x170] sm:$0xff]
    %v82 = vld [vmem:[%s1 + $0x178] sm:$0xff]
    %v83 = vld [vmem:[%s1 + $0x180] sm:$0xff]
    %v84 = vld [vmem:[%s1 + $0x188] sm:$0xff]
    %v85 = vld [vmem:[%s1 + $0x190] sm:$0xff]
    %v86 = vld [vmem:[%s1 + $0x198] sm:$0xff]
    %v87 = vld [vmem:[%s1 + $0x1a0] sm:$0xff]
    %v88 = vld [vmem:[%s1 + $0x1a8] sm:$0xff]
    %v89 = vld [vmem:[%s1 + $0x1b0] sm:$0xff]
    %v90 = vld [vmem:[%s1 + $0x1b8] sm:$0xff]
    %v91 = vld [vmem:[%s1 + $0x1c0] sm:$0xff]
    %v92 = vld [vmem:[%s1 + $0x1c8] sm:$0xff]
    %v93 = vld [vmem:[%s1 + $0x1d0] sm:$0xff]
    %v94 = vld [vmem:[%s1 + $0x1d8] sm:$0xff]
    %v95 = vld [vmem:[%s1 + $0x1e0] sm:$0xff]
    %v96 = vld [vmem:[%s1 + $0x1e8] sm:$0xff]
    %v97 = vld [vmem:[%s1 + $0x1f0] sm:$0xff]
    %v98 = vld [vmem:[%s1 + $0x1f8] sm:$0xff]
    %v99 = vld [vmem:[%s1 + $0x200] sm:$0xff]
    %v100 = vld [vmem:[%s1 + $0x208] sm:$0xff]
    %v101 = vld [vmem:[%s1 + $0x210] sm:$0xff]
    %v102 = vld [vmem:[%s1 + $0x218] sm:$0xff]
    %v103 = vld [vmem:[%s1 + $0x220] sm:$0xff]
    %v104 = vld [vmem:[%s1 + $0x228] sm:$0xff]
    %v105 = vld [vmem:[%s1 + $0x230] sm:$0xff]
    %v106 = vld [vmem:[%s1 + $0x238] sm:$0xff]
    %v107 = vld [vmem:[%s1 + $0x240] sm:$0xff]
    %v108 = vld [vmem:[%s1 + $0x248] sm:$0xff]
    %v109 = vld [vmem:[%s1 + $0x250] sm:$0xff]
    %v110 = vld [vmem:[%s1 + $0x258] sm:$0xff]
    %v111 = vld [vmem:[%s1 + $0x260] sm:$0xff]
    %v112 = vld [vmem:[%s1 + $0x268] sm:$0xff]
    %v113 = vld [vmem:[%s1 + $0x270] sm:$0xff]
    %v114 = vld [vmem:[%s1 + $0x278] sm:$0xff]
    %v115 = vld [vmem:[%s1 + $0x280] sm:$0xff]
    %v116 = vld [vmem:[%s1 + $0x288] sm:$0xff]
    %v117 = vld [vmem:[%s1 + $0x290] sm:$0xff]
    %v118 = vld [vmem:[%s1 + $0x298] sm:$0xff]
    %v119 = vld [vmem:[%s1 + $0x2a0] sm:$0xff]
    %v120 = vld [vmem:[%s1 + $0x2a8] sm:$0xff]
    %v121 = vld [vmem:[%s1 + $0x2b0] sm:$0xff]
    %v122 = vld [vmem:[%s1 + $0x2b8] sm:$0xff]
    %v123 = vld [vmem:[%s1 + $0x2c0] sm:$0xff]
    %v124 = vld [vmem:[%s1 + $0x2c8] sm:$0xff]
    %v125 = vld [vmem:[%s1 + $0x2d0] sm:$0xff]
    %v126 = vld [vmem:[%s1 + $0x2d8] sm:$0xff]
    %v127 = vld [vmem:[%s1 + $0x2e0] sm:$0xff]
    %v128 = vld [vmem:[%s1 + $0x2e8] sm:$0xff]
    %v129 = vld [vmem:[%s1 + $0x2f0] sm:$0xff]
    %v130 = vld [vmem:[%s1 + $0x2f8] sm:$0xff]
    %v131 = vld [vmem:[%s2] sm:$0x1]
    %v132 = vld [vmem:[%s2 + $0x1] sm:$0x1]
    %v133 = vld [vmem:[%s2 + $0x2] sm:$0x1]
    %v134 = vld [vmem:[%s2 + $0x3] sm:$0x1]
    %v135 = vld [vmem:[%s2 + $0x4] sm:$0x1]
    %v136 = vld [vmem:[%s2 + $0x5] sm:$0x1]
    %v137 = vld [vmem:[%s2 + $0x6] sm:$0x1]
    %v138 = vld [vmem:[%s2 + $0x7] sm:$0x1]
    %v139 = vld [vmem:[%s2 + $0x8] sm:$0x1]
    %v140 = vld [vmem:[%s2 + $0x9] sm:$0x1]
    %v141 = vld [vmem:[%s2 + $0xa] sm:$0x1]
    %v142 = vld [vmem:[%s2 + $0xb] sm:$0x1]
    %v143 = vld [vmem:[%s2 + $0xc] sm:$0x1]
    %v144 = vld [vmem:[%s2 + $0xd] sm:$0x1]
    %v145 = vld [vmem:[%s2 + $0xe] sm:$0x1]
    %v146 = vld [vmem:[%s2 + $0xf] sm:$0x1]
    %v147 = vld [vmem:[%s2 + $0x10] sm:$0x1]
    %v148 = vld [vmem:[%s2 + $0x11] sm:$0x1]
    %v149 = vld [vmem:[%s2 + $0x12] sm:$0x1]
    %v150 = vld [vmem:[%s2 + $0x13] sm:$0x1]
    %v151 = vld [vmem:[%s2 + $0x14] sm:$0x1]
    %v152 = vld [vmem:[%s2 + $0x15] sm:$0x1]
    %v153 = vld [vmem:[%s2 + $0x16] sm:$0x1]
    %v154 = vld [vmem:[%s2 + $0x17] sm:$0x1]
    %v179 = vlaneseq
    %v180 = vshrl.u32 %v179, 7
    %v181 = vsub.s32 0, %v180
    %v182 = vrot.slane %v131, %v181
    %v183 = vlaneseq
    %v184 = vshrl.u32 %v183, 7
    %v185 = vsub.s32 0, %v184
    %v186 = vrot.slane %v132, %v185
    %v187 = vlaneseq
    %v188 = vshrl.u32 %v187, 7
    %v189 = vsub.s32 0, %v188
    %v190 = vrot.slane %v133, %v189
    %v191 = vlaneseq
    %v192 = vshrl.u32 %v191, 7
    %v193 = vsub.s32 0, %v192
    %v194 = vrot.slane %v134, %v193
    %v195 = vlaneseq
    %v196 = vshrl.u32 %v195, 7
    %v197 = vsub.s32 0, %v196
    %v198 = vrot.slane %v135, %v197
    %v199 = vlaneseq
    %v200 = vshrl.u32 %v199, 7
    %v201 = vsub.s32 0, %v200
    %v202 = vrot.slane %v136, %v201
    %v203 = vlaneseq
    %v204 = vshrl.u32 %v203, 7
    %v205 = vsub.s32 0, %v204
    %v206 = vrot.slane %v137, %v205
    %v207 = vlaneseq
    %v208 = vshrl.u32 %v207, 7
    %v209 = vsub.s32 0, %v208
    %v210 = vrot.slane %v138, %v209
    %v211 = vlaneseq
    %v212 = vshrl.u32 %v211, 7
    %v213 = vsub.s32 0, %v212
    %v214 = vrot.slane %v139, %v213
    %v215 = vlaneseq
    %v216 = vshrl.u32 %v215, 7
    %v217 = vsub.s32 0, %v216
    %v218 = vrot.slane %v140, %v217
    %v219 = vlaneseq
    %v220 = vshrl.u32 %v219, 7
    %v221 = vsub.s32 0, %v220
    %v222 = vrot.slane %v141, %v221
    %v223 = vlaneseq
    %v224 = vshrl.u32 %v223, 7
    %v225 = vsub.s32 0, %v224
    %v226 = vrot.slane %v142, %v225
    %v227 = vlaneseq
    %v228 = vshrl.u32 %v227, 7
    %v229 = vsub.s32 0, %v228
    %v230 = vrot.slane %v143, %v229
    %v231 = vlaneseq
    %v232 = vshrl.u32 %v231, 7
    %v233 = vsub.s32 0, %v232
    %v234 = vrot.slane %v144, %v233
    %v235 = vlaneseq
    %v236 = vshrl.u32 %v235, 7
    %v237 = vsub.s32 0, %v236
    %v238 = vrot.slane %v145, %v237
    %v239 = vlaneseq
    %v240 = vshrl.u32 %v239, 7
    %v241 = vsub.s32 0, %v240
    %v242 = vrot.slane %v146, %v241
    %v243 = vlaneseq
    %v244 = vshrl.u32 %v243, 7
    %v245 = vsub.s32 0, %v244
    %v246 = vrot.slane %v147, %v245
    %v247 = vlaneseq
    %v248 = vshrl.u32 %v247, 7
    %v249 = vsub.s32 0, %v248
    %v250 = vrot.slane %v148, %v249
    %v251 = vlaneseq
    %v252 = vshrl.u32 %v251, 7
    %v253 = vsub.s32 0, %v252
    %v254 = vrot.slane %v149, %v253
    %v255 = vlaneseq
    %v256 = vshrl.u32 %v255, 7
    %v257 = vsub.s32 0, %v256
    %v258 = vrot.slane %v150, %v257
    %v259 = vlaneseq
    %v260 = vshrl.u32 %v259, 7
    %v261 = vsub.s32 0, %v260
    %v262 = vrot.slane %v151, %v261
    %v263 = vlaneseq
    %v264 = vshrl.u32 %v263, 7
    %v265 = vsub.s32 0, %v264
    %v266 = vrot.slane %v152, %v265
    %v267 = vlaneseq
    %v268 = vshrl.u32 %v267, 7
    %v269 = vsub.s32 0, %v268
    %v270 = vrot.slane %v153, %v269
    %v271 = vlaneseq
    %v272 = vshrl.u32 %v271, 7
    %v273 = vsub.s32 0, %v272
    %v274 = vrot.slane %v154, %v273
    %vm299 = vcmask 261120
    %v301 = vsel %vm299, %v33, 0
    %303 = vmatprep.subr.mxu0 0.0
    %304 = vmatpush1.msra.mxu0 %v35
    %305 = vmatprep.subr.mxu0 0.0
    %306 = vmatpush1.msra.mxu0 %v36
    %307 = vmatprep.subr.mxu0 0.0
    %308 = vmatpush1.msra.mxu0 %v37
    %309 = vmatprep.subr.mxu0 0.0
    %310 = vmatpush1.msra.mxu0 %v38
    %311 = vmatprep.subr.mxu0 0.0
    %312 = vmatpush1.msra.mxu0 0.0
    %313 = vmatprep.subr.mxu0 0.0
    %314 = vmatpush1.msra.mxu0 0.0
    %315 = vmatprep.subr.mxu0 0.0
    %316 = vmatpush1.msra.mxu0 0.0
    %317 = vmatprep.subr.mxu0 0.0
    %318 = vmatpush1.msra.mxu0 0.0
    %319 = vmatprep.subr.mxu0 0.0
    %320 = vmatpush1.msra.mxu0 0.0
    %321 = vmatprep.subr.mxu0 0.0
    %322 = vmatpush1.msra.mxu0 0.0
    %323 = vmatprep.subr.mxu0 0.0
    %324 = vmatpush1.msra.mxu0 0.0
    %325 = vmatprep.subr.mxu0 0.0
    %326 = vmatpush1.msra.mxu0 0.0
    %327 = vmatprep.subr.mxu0 0.0
    %328 = vmatpush1.msra.mxu0 0.0
    %329 = vmatprep.subr.mxu0 0.0
    %330 = vmatpush1.msra.mxu0 0.0
    %331 = vmatprep.subr.mxu0 0.0
    %332 = vmatpush1.msra.mxu0 0.0
    %333 = vmatprep.subr.mxu0 0.0
    %334 = vmatpush1.msra.mxu0 0.0
    %335 = vmatprep.subr.mxu0 0.0
    %336 = vmatpush1.msra.mxu0 0.0
    %337 = vmatprep.subr.mxu0 0.0
    %338 = vmatpush1.msra.mxu0 0.0
    %339 = vmatprep.subr.mxu0 0.0
    %340 = vmatpush1.msra.mxu0 0.0
    %341 = vmatprep.subr.mxu0 0.0
    %342 = vmatpush1.msra.mxu0 0.0
    %343 = vmatprep.subr.mxu0 0.0
    %344 = vmatpush1.msra.mxu0 0.0
    %345 = vmatprep.subr.mxu0 0.0
    %346 = vmatpush1.msra.mxu0 0.0
    %347 = vmatprep.subr.mxu0 0.0
    %348 = vmatpush1.msra.mxu0 0.0
    %349 = vmatprep.subr.mxu0 0.0
    %350 = vmatpush1.msra.mxu0 0.0
    %351 = vmatprep.subr.mxu0 0.0
    %352 = vmatpush1.msra.mxu0 0.0
    %353 = vmatprep.subr.mxu0 0.0
    %354 = vmatpush1.msra.mxu0 0.0
    %355 = vmatprep.subr.mxu0 0.0
    %356 = vmatpush1.msra.mxu0 0.0
    %357 = vmatprep.subr.mxu0 0.0
    %358 = vmatpush1.msra.mxu0 0.0
    %359 = vmatprep.subr.mxu0 0.0
    %360 = vmatpush1.msra.mxu0 0.0
    %361 = vmatprep.subr.mxu0 0.0
    %362 = vmatpush1.msra.mxu0 0.0
    %363 = vmatprep.subr.mxu0 0.0
    %364 = vmatpush1.msra.mxu0 0.0
    %365 = vmatprep.subr.mxu0 0.0
    %366 = vmatpush1.msra.mxu0 0.0
    %367 = vmatprep.mubr.f32.mxu0 0.0
    %368 = vmatmul.mubr.f32.gmra.mrb[0].mxu0 %v301
    %v369 = vpop.f32.mrb[0].mxu0
    %v370 = vadd.f32 %v182, %v369
    %v371 = vpop.f32.mrb[0].mxu0
    %372 = vdwg.mxu0
    %373 = vmatprep.subr.mxu0 0.0
    %374 = vmatpush1.msra.mxu0 %v39
    %375 = vmatprep.subr.mxu0 0.0
    %376 = vmatpush1.msra.mxu0 %v40
    %377 = vmatprep.subr.mxu0 0.0
    %378 = vmatpush1.msra.mxu0 %v41
    %379 = vmatprep.subr.mxu0 0.0
    %380 = vmatpush1.msra.mxu0 %v42
    %381 = vmatprep.subr.mxu0 0.0
    %382 = vmatpush1.msra.mxu0 0.0
    %383 = vmatprep.subr.mxu0 0.0
    %384 = vmatpush1.msra.mxu0 0.0
    %385 = vmatprep.subr.mxu0 0.0
    %386 = vmatpush1.msra.mxu0 0.0
    %387 = vmatprep.subr.mxu0 0.0
    %388 = vmatpush1.msra.mxu0 0.0
    %389 = vmatprep.subr.mxu0 0.0
    %390 = vmatpush1.msra.mxu0 0.0
    %391 = vmatprep.subr.mxu0 0.0
    %392 = vmatpush1.msra.mxu0 0.0
    %393 = vmatprep.subr.mxu0 0.0
    %394 = vmatpush1.msra.mxu0 0.0
    %395 = vmatprep.subr.mxu0 0.0
    %396 = vmatpush1.msra.mxu0 0.0
    %397 = vmatprep.subr.mxu0 0.0
    %398 = vmatpush1.msra.mxu0 0.0
    %399 = vmatprep.subr.mxu0 0.0
    %400 = vmatpush1.msra.mxu0 0.0
    %401 = vmatprep.subr.mxu0 0.0
    %402 = vmatpush1.msra.mxu0 0.0
    %403 = vmatprep.subr.mxu0 0.0
    %404 = vmatpush1.msra.mxu0 0.0
    %405 = vmatprep.subr.mxu0 0.0
    %406 = vmatpush1.msra.mxu0 0.0
    %407 = vmatprep.subr.mxu0 0.0
    %408 = vmatpush1.msra.mxu0 0.0
    %409 = vmatprep.subr.mxu0 0.0
    %410 = vmatpush1.msra.mxu0 0.0
    %411 = vmatprep.subr.mxu0 0.0
    %412 = vmatpush1.msra.mxu0 0.0
    %413 = vmatprep.subr.mxu0 0.0
    %414 = vmatpush1.msra.mxu0 0.0
    %415 = vmatprep.subr.mxu0 0.0
    %416 = vmatpush1.msra.mxu0 0.0
    %417 = vmatprep.subr.mxu0 0.0
    %418 = vmatpush1.msra.mxu0 0.0
    %419 = vmatprep.subr.mxu0 0.0
    %420 = vmatpush1.msra.mxu0 0.0
    %421 = vmatprep.subr.mxu0 0.0
    %422 = vmatpush1.msra.mxu0 0.0
    %423 = vmatprep.subr.mxu0 0.0
    %424 = vmatpush1.msra.mxu0 0.0
    %425 = vmatprep.subr.mxu0 0.0
    %426 = vmatpush1.msra.mxu0 0.0
    %427 = vmatprep.subr.mxu0 0.0
    %428 = vmatpush1.msra.mxu0 0.0
    %429 = vmatprep.subr.mxu0 0.0
    %430 = vmatpush1.msra.mxu0 0.0
    %431 = vmatprep.subr.mxu0 0.0
    %432 = vmatpush1.msra.mxu0 0.0
    %433 = vmatprep.subr.mxu0 0.0
    %434 = vmatpush1.msra.mxu0 0.0
    %435 = vmatprep.subr.mxu0 0.0
    %436 = vmatpush1.msra.mxu0 0.0
    %437 = vmatprep.mubr.f32.mxu0 0.0
    %438 = vmatmul.mubr.f32.gmra.mrb[0].mxu0 %v301
    %v439 = vpop.f32.mrb[0].mxu0
    %v440 = vadd.f32 %v186, %v439
    %v441 = vpop.f32.mrb[0].mxu0
    %442 = vdwg.mxu0
    %443 = vmatprep.subr.mxu0 0.0
    %444 = vmatpush1.msra.mxu0 %v43
    %445 = vmatprep.subr.mxu0 0.0
    %446 = vmatpush1.msra.mxu0 %v44
    %447 = vmatprep.subr.mxu0 0.0
    %448 = vmatpush1.msra.mxu0 %v45
    %449 = vmatprep.subr.mxu0 0.0
    %450 = vmatpush1.msra.mxu0 %v46
    %451 = vmatprep.subr.mxu0 0.0
    %452 = vmatpush1.msra.mxu0 0.0
    %453 = vmatprep.subr.mxu0 0.0
    %454 = vmatpush1.msra.mxu0 0.0
    %455 = vmatprep.subr.mxu0 0.0
    %456 = vmatpush1.msra.mxu0 0.0
    %457 = vmatprep.subr.mxu0 0.0
    %458 = vmatpush1.msra.mxu0 0.0
    %459 = vmatprep.subr.mxu0 0.0
    %460 = vmatpush1.msra.mxu0 0.0
    %461 = vmatprep.subr.mxu0 0.0
    %462 = vmatpush1.msra.mxu0 0.0
    %463 = vmatprep.subr.mxu0 0.0
    %464 = vmatpush1.msra.mxu0 0.0
    %465 = vmatprep.subr.mxu0 0.0
    %466 = vmatpush1.msra.mxu0 0.0
    %467 = vmatprep.subr.mxu0 0.0
    %468 = vmatpush1.msra.mxu0 0.0
    %469 = vmatprep.subr.mxu0 0.0
    %470 = vmatpush1.msra.mxu0 0.0
    %471 = vmatprep.subr.mxu0 0.0
    %472 = vmatpush1.msra.mxu0 0.0
    %473 = vmatprep.subr.mxu0 0.0
    %474 = vmatpush1.msra.mxu0 0.0
    %475 = vmatprep.subr.mxu0 0.0
    %476 = vmatpush1.msra.mxu0 0.0
    %477 = vmatprep.subr.mxu0 0.0
    %478 = vmatpush1.msra.mxu0 0.0
    %479 = vmatprep.subr.mxu0 0.0
    %480 = vmatpush1.msra.mxu0 0.0
    %481 = vmatprep.subr.mxu0 0.0
    %482 = vmatpush1.msra.mxu0 0.0
    %483 = vmatprep.subr.mxu0 0.0
    %484 = vmatpush1.msra.mxu0 0.0
    %485 = vmatprep.subr.mxu0 0.0
    %486 = vmatpush1.msra.mxu0 0.0
    %487 = vmatprep.subr.mxu0 0.0
    %488 = vmatpush1.msra.mxu0 0.0
    %489 = vmatprep.subr.mxu0 0.0
    %490 = vmatpush1.msra.mxu0 0.0
    %491 = vmatprep.subr.mxu0 0.0
    %492 = vmatpush1.msra.mxu0 0.0
    %493 = vmatprep.subr.mxu0 0.0
    %494 = vmatpush1.msra.mxu0 0.0
    %495 = vmatprep.subr.mxu0 0.0
    %496 = vmatpush1.msra.mxu0 0.0
    %497 = vmatprep.subr.mxu0 0.0
    %498 = vmatpush1.msra.mxu0 0.0
    %499 = vmatprep.subr.mxu0 0.0
    %500 = vmatpush1.msra.mxu0 0.0
    %501 = vmatprep.subr.mxu0 0.0
    %502 = vmatpush1.msra.mxu0 0.0
    %503 = vmatprep.subr.mxu0 0.0
    %504 = vmatpush1.msra.mxu0 0.0
    %505 = vmatprep.subr.mxu0 0.0
    %506 = vmatpush1.msra.mxu0 0.0
    %507 = vmatprep.mubr.f32.mxu0 0.0
    %508 = vmatmul.mubr.f32.gmra.mrb[0].mxu0 %v301
    %v509 = vpop.f32.mrb[0].mxu0
    %v510 = vadd.f32 %v190, %v509
    %v511 = vpop.f32.mrb[0].mxu0
    %512 = vdwg.mxu0
    %513 = vmatprep.subr.mxu0 0.0
    %514 = vmatpush1.msra.mxu0 %v47
    %515 = vmatprep.subr.mxu0 0.0
    %516 = vmatpush1.msra.mxu0 %v48
    %517 = vmatprep.subr.mxu0 0.0
    %518 = vmatpush1.msra.mxu0 %v49
    %519 = vmatprep.subr.mxu0 0.0
    %520 = vmatpush1.msra.mxu0 %v50
    %521 = vmatprep.subr.mxu0 0.0
    %522 = vmatpush1.msra.mxu0 0.0
    %523 = vmatprep.subr.mxu0 0.0
    %524 = vmatpush1.msra.mxu0 0.0
    %525 = vmatprep.subr.mxu0 0.0
    %526 = vmatpush1.msra.mxu0 0.0
    %527 = vmatprep.subr.mxu0 0.0
    %528 = vmatpush1.msra.mxu0 0.0
    %529 = vmatprep.subr.mxu0 0.0
    %530 = vmatpush1.msra.mxu0 0.0
    %531 = vmatprep.subr.mxu0 0.0
    %532 = vmatpush1.msra.mxu0 0.0
    %533 = vmatprep.subr.mxu0 0.0
    %534 = vmatpush1.msra.mxu0 0.0
    %535 = vmatprep.subr.mxu0 0.0
    %536 = vmatpush1.msra.mxu0 0.0
    %537 = vmatprep.subr.mxu0 0.0
    %538 = vmatpush1.msra.mxu0 0.0
    %539 = vmatprep.subr.mxu0 0.0
    %540 = vmatpush1.msra.mxu0 0.0
    %541 = vmatprep.subr.mxu0 0.0
    %542 = vmatpush1.msra.mxu0 0.0
    %543 = vmatprep.subr.mxu0 0.0
    %544 = vmatpush1.msra.mxu0 0.0
    %545 = vmatprep.subr.mxu0 0.0
    %546 = vmatpush1.msra.mxu0 0.0
    %547 = vmatprep.subr.mxu0 0.0
    %548 = vmatpush1.msra.mxu0 0.0
    %549 = vmatprep.subr.mxu0 0.0
    %550 = vmatpush1.msra.mxu0 0.0
    %551 = vmatprep.subr.mxu0 0.0
    %552 = vmatpush1.msra.mxu0 0.0
    %553 = vmatprep.subr.mxu0 0.0
    %554 = vmatpush1.msra.mxu0 0.0
    %555 = vmatprep.subr.mxu0 0.0
    %556 = vmatpush1.msra.mxu0 0.0
    %557 = vmatprep.subr.mxu0 0.0
    %558 = vmatpush1.msra.mxu0 0.0
    %559 = vmatprep.subr.mxu0 0.0
    %560 = vmatpush1.msra.mxu0 0.0
    %561 = vmatprep.subr.mxu0 0.0
    %562 = vmatpush1.msra.mxu0 0.0
    %563 = vmatprep.subr.mxu0 0.0
    %564 = vmatpush1.msra.mxu0 0.0
    %565 = vmatprep.subr.mxu0 0.0
    %566 = vmatpush1.msra.mxu0 0.0
    %567 = vmatprep.subr.mxu0 0.0
    %568 = vmatpush1.msra.mxu0 0.0
    %569 = vmatprep.subr.mxu0 0.0
    %570 = vmatpush1.msra.mxu0 0.0
    %571 = vmatprep.subr.mxu0 0.0
    %572 = vmatpush1.msra.mxu0 0.0
    %573 = vmatprep.subr.mxu0 0.0
    %574 = vmatpush1.msra.mxu0 0.0
    %575 = vmatprep.subr.mxu0 0.0
    %576 = vmatpush1.msra.mxu0 0.0
    %577 = vmatprep.mubr.f32.mxu0 0.0
    %578 = vmatmul.mubr.f32.gmra.mrb[0].mxu0 %v301
    %v579 = vpop.f32.mrb[0].mxu0
    %v580 = vadd.f32 %v194, %v579
    %v581 = vpop.f32.mrb[0].mxu0
    %582 = vdwg.mxu0
    %v584 = vsel %vm299, %v34, 0
    %586 = vmatprep.subr.mxu0 0.0
    %587 = vmatpush1.msra.mxu0 %v51
    %588 = vmatprep.subr.mxu0 0.0
    %589 = vmatpush1.msra.mxu0 %v52
    %590 = vmatprep.subr.mxu0 0.0
    %591 = vmatpush1.msra.mxu0 %v53
    %592 = vmatprep.subr.mxu0 0.0
    %593 = vmatpush1.msra.mxu0 %v54
    %594 = vmatprep.subr.mxu0 0.0
    %595 = vmatpush1.msra.mxu0 0.0
    %596 = vmatprep.subr.mxu0 0.0
    %597 = vmatpush1.msra.mxu0 0.0
    %598 = vmatprep.subr.mxu0 0.0
    %599 = vmatpush1.msra.mxu0 0.0
    %600 = vmatprep.subr.mxu0 0.0
    %601 = vmatpush1.msra.mxu0 0.0
    %602 = vmatprep.subr.mxu0 0.0
    %603 = vmatpush1.msra.mxu0 0.0
    %604 = vmatprep.subr.mxu0 0.0
    %605 = vmatpush1.msra.mxu0 0.0
    %606 = vmatprep.subr.mxu0 0.0
    %607 = vmatpush1.msra.mxu0 0.0
    %608 = vmatprep.subr.mxu0 0.0
    %609 = vmatpush1.msra.mxu0 0.0
    %610 = vmatprep.subr.mxu0 0.0
    %611 = vmatpush1.msra.mxu0 0.0
    %612 = vmatprep.subr.mxu0 0.0
    %613 = vmatpush1.msra.mxu0 0.0
    %614 = vmatprep.subr.mxu0 0.0
    %615 = vmatpush1.msra.mxu0 0.0
    %616 = vmatprep.subr.mxu0 0.0
    %617 = vmatpush1.msra.mxu0 0.0
    %618 = vmatprep.subr.mxu0 0.0
    %619 = vmatpush1.msra.mxu0 0.0
    %620 = vmatprep.subr.mxu0 0.0
    %621 = vmatpush1.msra.mxu0 0.0
    %622 = vmatprep.subr.mxu0 0.0
    %623 = vmatpush1.msra.mxu0 0.0
    %624 = vmatprep.subr.mxu0 0.0
    %625 = vmatpush1.msra.mxu0 0.0
    %626 = vmatprep.subr.mxu0 0.0
    %627 = vmatpush1.msra.mxu0 0.0
    %628 = vmatprep.subr.mxu0 0.0
    %629 = vmatpush1.msra.mxu0 0.0
    %630 = vmatprep.subr.mxu0 0.0
    %631 = vmatpush1.msra.mxu0 0.0
    %632 = vmatprep.subr.mxu0 0.0
    %633 = vmatpush1.msra.mxu0 0.0
    %634 = vmatprep.subr.mxu0 0.0
    %635 = vmatpush1.msra.mxu0 0.0
    %636 = vmatprep.subr.mxu0 0.0
    %637 = vmatpush1.msra.mxu0 0.0
    %638 = vmatprep.subr.mxu0 0.0
    %639 = vmatpush1.msra.mxu0 0.0
    %640 = vmatprep.subr.mxu0 0.0
    %641 = vmatpush1.msra.mxu0 0.0
    %642 = vmatprep.subr.mxu0 0.0
    %643 = vmatpush1.msra.mxu0 0.0
    %644 = vmatprep.subr.mxu0 0.0
    %645 = vmatpush1.msra.mxu0 0.0
    %646 = vmatprep.subr.mxu0 0.0
    %647 = vmatpush1.msra.mxu0 0.0
    %648 = vmatprep.subr.mxu0 0.0
    %649 = vmatpush1.msra.mxu0 0.0
    %650 = vmatprep.mubr.f32.mxu0 0.0
    %651 = vmatmul.mubr.f32.gmra.mrb[0].mxu0 %v584
    %v652 = vpop.f32.mrb[0].mxu0
    %v653 = vadd.f32 %v198, %v652
    %v654 = vpop.f32.mrb[0].mxu0
    %655 = vdwg.mxu0
    %656 = vmatprep.subr.mxu0 0.0
    %657 = vmatpush1.msra.mxu0 %v55
    %658 = vmatprep.subr.mxu0 0.0
    %659 = vmatpush1.msra.mxu0 %v56
    %660 = vmatprep.subr.mxu0 0.0
    %661 = vmatpush1.msra.mxu0 %v57
    %662 = vmatprep.subr.mxu0 0.0
    %663 = vmatpush1.msra.mxu0 %v58
    %664 = vmatprep.subr.mxu0 0.0
    %665 = vmatpush1.msra.mxu0 0.0
    %666 = vmatprep.subr.mxu0 0.0
    %667 = vmatpush1.msra.mxu0 0.0
    %668 = vmatprep.subr.mxu0 0.0
    %669 = vmatpush1.msra.mxu0 0.0
    %670 = vmatprep.subr.mxu0 0.0
    %671 = vmatpush1.msra.mxu0 0.0
    %672 = vmatprep.subr.mxu0 0.0
    %673 = vmatpush1.msra.mxu0 0.0
    %674 = vmatprep.subr.mxu0 0.0
    %675 = vmatpush1.msra.mxu0 0.0
    %676 = vmatprep.subr.mxu0 0.0
    %677 = vmatpush1.msra.mxu0 0.0
    %678 = vmatprep.subr.mxu0 0.0
    %679 = vmatpush1.msra.mxu0 0.0
    %680 = vmatprep.subr.mxu0 0.0
    %681 = vmatpush1.msra.mxu0 0.0
    %682 = vmatprep.subr.mxu0 0.0
    %683 = vmatpush1.msra.mxu0 0.0
    %684 = vmatprep.subr.mxu0 0.0
    %685 = vmatpush1.msra.mxu0 0.0
    %686 = vmatprep.subr.mxu0 0.0
    %687 = vmatpush1.msra.mxu0 0.0
    %688 = vmatprep.subr.mxu0 0.0
    %689 = vmatpush1.msra.mxu0 0.0
    %690 = vmatprep.subr.mxu0 0.0
    %691 = vmatpush1.msra.mxu0 0.0
    %692 = vmatprep.subr.mxu0 0.0
    %693 = vmatpush1.msra.mxu0 0.0
    %694 = vmatprep.subr.mxu0 0.0
    %695 = vmatpush1.msra.mxu0 0.0
    %696 = vmatprep.subr.mxu0 0.0
    %697 = vmatpush1.msra.mxu0 0.0
    %698 = vmatprep.subr.mxu0 0.0
    %699 = vmatpush1.msra.mxu0 0.0
    %700 = vmatprep.subr.mxu0 0.0
    %701 = vmatpush1.msra.mxu0 0.0
    %702 = vmatprep.subr.mxu0 0.0
    %703 = vmatpush1.msra.mxu0 0.0
    %704 = vmatprep.subr.mxu0 0.0
    %705 = vmatpush1.msra.mxu0 0.0
    %706 = vmatprep.subr.mxu0 0.0
    %707 = vmatpush1.msra.mxu0 0.0
    %708 = vmatprep.subr.mxu0 0.0
    %709 = vmatpush1.msra.mxu0 0.0
    %710 = vmatprep.subr.mxu0 0.0
    %711 = vmatpush1.msra.mxu0 0.0
    %712 = vmatprep.subr.mxu0 0.0
    %713 = vmatpush1.msra.mxu0 0.0
    %714 = vmatprep.subr.mxu0 0.0
    %715 = vmatpush1.msra.mxu0 0.0
    %716 = vmatprep.subr.mxu0 0.0
    %717 = vmatpush1.msra.mxu0 0.0
    %718 = vmatprep.subr.mxu0 0.0
    %719 = vmatpush1.msra.mxu0 0.0
    %720 = vmatprep.mubr.f32.mxu0 0.0
    %721 = vmatmul.mubr.f32.gmra.mrb[0].mxu0 %v584
    %v722 = vpop.f32.mrb[0].mxu0
    %v723 = vadd.f32 %v202, %v722
    %v724 = vpop.f32.mrb[0].mxu0
    %725 = vdwg.mxu0
    %726 = vmatprep.subr.mxu0 0.0
    %727 = vmatpush1.msra.mxu0 %v59
    %728 = vmatprep.subr.mxu0 0.0
    %729 = vmatpush1.msra.mxu0 %v60
    %730 = vmatprep.subr.mxu0 0.0
    %731 = vmatpush1.msra.mxu0 %v61
    %732 = vmatprep.subr.mxu0 0.0
    %733 = vmatpush1.msra.mxu0 %v62
    %734 = vmatprep.subr.mxu0 0.0
    %735 = vmatpush1.msra.mxu0 0.0
    %736 = vmatprep.subr.mxu0 0.0
    %737 = vmatpush1.msra.mxu0 0.0
    %738 = vmatprep.subr.mxu0 0.0
    %739 = vmatpush1.msra.mxu0 0.0
    %740 = vmatprep.subr.mxu0 0.0
    %741 = vmatpush1.msra.mxu0 0.0
    %742 = vmatprep.subr.mxu0 0.0
    %743 = vmatpush1.msra.mxu0 0.0
    %744 = vmatprep.subr.mxu0 0.0
    %745 = vmatpush1.msra.mxu0 0.0
    %746 = vmatprep.subr.mxu0 0.0
    %747 = vmatpush1.msra.mxu0 0.0
    %748 = vmatprep.subr.mxu0 0.0
    %749 = vmatpush1.msra.mxu0 0.0
    %750 = vmatprep.subr.mxu0 0.0
    %751 = vmatpush1.msra.mxu0 0.0
    %752 = vmatprep.subr.mxu0 0.0
    %753 = vmatpush1.msra.mxu0 0.0
    %754 = vmatprep.subr.mxu0 0.0
    %755 = vmatpush1.msra.mxu0 0.0
    %756 = vmatprep.subr.mxu0 0.0
    %757 = vmatpush1.msra.mxu0 0.0
    %758 = vmatprep.subr.mxu0 0.0
    %759 = vmatpush1.msra.mxu0 0.0
    %760 = vmatprep.subr.mxu0 0.0
    %761 = vmatpush1.msra.mxu0 0.0
    %762 = vmatprep.subr.mxu0 0.0
    %763 = vmatpush1.msra.mxu0 0.0
    %764 = vmatprep.subr.mxu0 0.0
    %765 = vmatpush1.msra.mxu0 0.0
    %766 = vmatprep.subr.mxu0 0.0
    %767 = vmatpush1.msra.mxu0 0.0
    %768 = vmatprep.subr.mxu0 0.0
    %769 = vmatpush1.msra.mxu0 0.0
    %770 = vmatprep.subr.mxu0 0.0
    %771 = vmatpush1.msra.mxu0 0.0
    %772 = vmatprep.subr.mxu0 0.0
    %773 = vmatpush1.msra.mxu0 0.0
    %774 = vmatprep.subr.mxu0 0.0
    %775 = vmatpush1.msra.mxu0 0.0
    %776 = vmatprep.subr.mxu0 0.0
    %777 = vmatpush1.msra.mxu0 0.0
    %778 = vmatprep.subr.mxu0 0.0
    %779 = vmatpush1.msra.mxu0 0.0
    %780 = vmatprep.subr.mxu0 0.0
    %781 = vmatpush1.msra.mxu0 0.0
    %782 = vmatprep.subr.mxu0 0.0
    %783 = vmatpush1.msra.mxu0 0.0
    %784 = vmatprep.subr.mxu0 0.0
    %785 = vmatpush1.msra.mxu0 0.0
    %786 = vmatprep.subr.mxu0 0.0
    %787 = vmatpush1.msra.mxu0 0.0
    %788 = vmatprep.subr.mxu0 0.0
    %789 = vmatpush1.msra.mxu0 0.0
    %790 = vmatprep.mubr.f32.mxu0 0.0
    %791 = vmatmul.mubr.f32.gmra.mrb[0].mxu0 %v584
    %v792 = vpop.f32.mrb[0].mxu0
    %v793 = vadd.f32 %v206, %v792
    %v794 = vpop.f32.mrb[0].mxu0
    %795 = vdwg.mxu0
    %796 = vmatprep.subr.mxu0 0.0
    %797 = vmatpush1.msra.mxu0 %v63
    %798 = vmatprep.subr.mxu0 0.0
    %799 = vmatpush1.msra.mxu0 %v64
    %800 = vmatprep.subr.mxu0 0.0
    %801 = vmatpush1.msra.mxu0 %v65
    %802 = vmatprep.subr.mxu0 0.0
    %803 = vmatpush1.msra.mxu0 %v66
    %804 = vmatprep.subr.mxu0 0.0
    %805 = vmatpush1.msra.mxu0 0.0
    %806 = vmatprep.subr.mxu0 0.0
    %807 = vmatpush1.msra.mxu0 0.0
    %808 = vmatprep.subr.mxu0 0.0
    %809 = vmatpush1.msra.mxu0 0.0
    %810 = vmatprep.subr.mxu0 0.0
    %811 = vmatpush1.msra.mxu0 0.0
    %812 = vmatprep.subr.mxu0 0.0
    %813 = vmatpush1.msra.mxu0 0.0
    %814 = vmatprep.subr.mxu0 0.0
    %815 = vmatpush1.msra.mxu0 0.0
    %816 = vmatprep.subr.mxu0 0.0
    %817 = vmatpush1.msra.mxu0 0.0
    %818 = vmatprep.subr.mxu0 0.0
    %819 = vmatpush1.msra.mxu0 0.0
    %820 = vmatprep.subr.mxu0 0.0
    %821 = vmatpush1.msra.mxu0 0.0
    %822 = vmatprep.subr.mxu0 0.0
    %823 = vmatpush1.msra.mxu0 0.0
    %824 = vmatprep.subr.mxu0 0.0
    %825 = vmatpush1.msra.mxu0 0.0
    %826 = vmatprep.subr.mxu0 0.0
    %827 = vmatpush1.msra.mxu0 0.0
    %828 = vmatprep.subr.mxu0 0.0
    %829 = vmatpush1.msra.mxu0 0.0
    %830 = vmatprep.subr.mxu0 0.0
    %831 = vmatpush1.msra.mxu0 0.0
    %832 = vmatprep.subr.mxu0 0.0
    %833 = vmatpush1.msra.mxu0 0.0
    %834 = vmatprep.subr.mxu0 0.0
    %835 = vmatpush1.msra.mxu0 0.0
    %836 = vmatprep.subr.mxu0 0.0
    %837 = vmatpush1.msra.mxu0 0.0
    %838 = vmatprep.subr.mxu0 0.0
    %839 = vmatpush1.msra.mxu0 0.0
    %840 = vmatprep.subr.mxu0 0.0
    %841 = vmatpush1.msra.mxu0 0.0
    %842 = vmatprep.subr.mxu0 0.0
    %843 = vmatpush1.msra.mxu0 0.0
    %844 = vmatprep.subr.mxu0 0.0
    %845 = vmatpush1.msra.mxu0 0.0
    %846 = vmatprep.subr.mxu0 0.0
    %847 = vmatpush1.msra.mxu0 0.0
    %848 = vmatprep.subr.mxu0 0.0
    %849 = vmatpush1.msra.mxu0 0.0
    %850 = vmatprep.subr.mxu0 0.0
    %851 = vmatpush1.msra.mxu0 0.0
    %852 = vmatprep.subr.mxu0 0.0
    %853 = vmatpush1.msra.mxu0 0.0
    %854 = vmatprep.subr.mxu0 0.0
    %855 = vmatpush1.msra.mxu0 0.0
    %856 = vmatprep.subr.mxu0 0.0
    %857 = vmatpush1.msra.mxu0 0.0
    %858 = vmatprep.subr.mxu0 0.0
    %859 = vmatpush1.msra.mxu0 0.0
    %860 = vmatprep.mubr.f32.mxu0 0.0
    %861 = vmatmul.mubr.f32.gmra.mrb[0].mxu0 %v584
    %v862 = vpop.f32.mrb[0].mxu0
    %v863 = vadd.f32 %v210, %v862
    %v864 = vpop.f32.mrb[0].mxu0
    %865 = vdwg.mxu0
    %866 = vmatprep.subr.mxu0 0.0
    %867 = vmatpush1.msra.mxu0 %v67
    %868 = vmatprep.subr.mxu0 0.0
    %869 = vmatpush1.msra.mxu0 %v68
    %870 = vmatprep.subr.mxu0 0.0
    %871 = vmatpush1.msra.mxu0 %v69
    %872 = vmatprep.subr.mxu0 0.0
    %873 = vmatpush1.msra.mxu0 %v70
    %874 = vmatprep.subr.mxu0 0.0
    %875 = vmatpush1.msra.mxu0 0.0
    %876 = vmatprep.subr.mxu0 0.0
    %877 = vmatpush1.msra.mxu0 0.0
    %878 = vmatprep.subr.mxu0 0.0
    %879 = vmatpush1.msra.mxu0 0.0
    %880 = vmatprep.subr.mxu0 0.0
    %881 = vmatpush1.msra.mxu0 0.0
    %882 = vmatprep.subr.mxu0 0.0
    %883 = vmatpush1.msra.mxu0 0.0
    %884 = vmatprep.subr.mxu0 0.0
    %885 = vmatpush1.msra.mxu0 0.0
    %886 = vmatprep.subr.mxu0 0.0
    %887 = vmatpush1.msra.mxu0 0.0
    %888 = vmatprep.subr.mxu0 0.0
    %889 = vmatpush1.msra.mxu0 0.0
    %890 = vmatprep.subr.mxu0 0.0
    %891 = vmatpush1.msra.mxu0 0.0
    %892 = vmatprep.subr.mxu0 0.0
    %893 = vmatpush1.msra.mxu0 0.0
    %894 = vmatprep.subr.mxu0 0.0
    %895 = vmatpush1.msra.mxu0 0.0
    %896 = vmatprep.subr.mxu0 0.0
    %897 = vmatpush1.msra.mxu0 0.0
    %898 = vmatprep.subr.mxu0 0.0
    %899 = vmatpush1.msra.mxu0 0.0
    %900 = vmatprep.subr.mxu0 0.0
    %901 = vmatpush1.msra.mxu0 0.0
    %902 = vmatprep.subr.mxu0 0.0
    %903 = vmatpush1.msra.mxu0 0.0
    %904 = vmatprep.subr.mxu0 0.0
    %905 = vmatpush1.msra.mxu0 0.0
    %906 = vmatprep.subr.mxu0 0.0
    %907 = vmatpush1.msra.mxu0 0.0
    %908 = vmatprep.subr.mxu0 0.0
    %909 = vmatpush1.msra.mxu0 0.0
    %910 = vmatprep.subr.mxu0 0.0
    %911 = vmatpush1.msra.mxu0 0.0
    %912 = vmatprep.subr.mxu0 0.0
    %913 = vmatpush1.msra.mxu0 0.0
    %914 = vmatprep.subr.mxu0 0.0
    %915 = vmatpush1.msra.mxu0 0.0
    %916 = vmatprep.subr.mxu0 0.0
    %917 = vmatpush1.msra.mxu0 0.0
    %918 = vmatprep.subr.mxu0 0.0
    %919 = vmatpush1.msra.mxu0 0.0
    %920 = vmatprep.subr.mxu0 0.0
    %921 = vmatpush1.msra.mxu0 0.0
    %922 = vmatprep.subr.mxu0 0.0
    %923 = vmatpush1.msra.mxu0 0.0
    %924 = vmatprep.subr.mxu0 0.0
    %925 = vmatpush1.msra.mxu0 0.0
    %926 = vmatprep.subr.mxu0 0.0
    %927 = vmatpush1.msra.mxu0 0.0
    %928 = vmatprep.subr.mxu0 0.0
    %929 = vmatpush1.msra.mxu0 0.0
    %930 = vmatprep.mubr.f32.mxu0 0.0
    %931 = vmatmul.mubr.f32.gmra.mrb[0].mxu0 %v301
    %v932 = vpop.f32.mrb[0].mxu0
    %v933 = vadd.f32 %v214, %v932
    %v934 = vpop.f32.mrb[0].mxu0
    %935 = vdwg.mxu0
    %936 = vmatprep.subr.mxu0 0.0
    %937 = vmatpush1.msra.mxu0 %v71
    %938 = vmatprep.subr.mxu0 0.0
    %939 = vmatpush1.msra.mxu0 %v72
    %940 = vmatprep.subr.mxu0 0.0
    %941 = vmatpush1.msra.mxu0 %v73
    %942 = vmatprep.subr.mxu0 0.0
    %943 = vmatpush1.msra.mxu0 %v74
    %944 = vmatprep.subr.mxu0 0.0
    %945 = vmatpush1.msra.mxu0 0.0
    %946 = vmatprep.subr.mxu0 0.0
    %947 = vmatpush1.msra.mxu0 0.0
    %948 = vmatprep.subr.mxu0 0.0
    %949 = vmatpush1.msra.mxu0 0.0
    %950 = vmatprep.subr.mxu0 0.0
    %951 = vmatpush1.msra.mxu0 0.0
    %952 = vmatprep.subr.mxu0 0.0
    %953 = vmatpush1.msra.mxu0 0.0
    %954 = vmatprep.subr.mxu0 0.0
    %955 = vmatpush1.msra.mxu0 0.0
    %956 = vmatprep.subr.mxu0 0.0
    %957 = vmatpush1.msra.mxu0 0.0
    %958 = vmatprep.subr.mxu0 0.0
    %959 = vmatpush1.msra.mxu0 0.0
    %960 = vmatprep.subr.mxu0 0.0
    %961 = vmatpush1.msra.mxu0 0.0
    %962 = vmatprep.subr.mxu0 0.0
    %963 = vmatpush1.msra.mxu0 0.0
    %964 = vmatprep.subr.mxu0 0.0
    %965 = vmatpush1.msra.mxu0 0.0
    %966 = vmatprep.subr.mxu0 0.0
    %967 = vmatpush1.msra.mxu0 0.0
    %968 = vmatprep.subr.mxu0 0.0
    %969 = vmatpush1.msra.mxu0 0.0
    %970 = vmatprep.subr.mxu0 0.0
    %971 = vmatpush1.msra.mxu0 0.0
    %972 = vmatprep.subr.mxu0 0.0
    %973 = vmatpush1.msra.mxu0 0.0
    %974 = vmatprep.subr.mxu0 0.0
    %975 = vmatpush1.msra.mxu0 0.0
    %976 = vmatprep.subr.mxu0 0.0
    %977 = vmatpush1.msra.mxu0 0.0
    %978 = vmatprep.subr.mxu0 0.0
    %979 = vmatpush1.msra.mxu0 0.0
    %980 = vmatprep.subr.mxu0 0.0
    %981 = vmatpush1.msra.mxu0 0.0
    %982 = vmatprep.subr.mxu0 0.0
    %983 = vmatpush1.msra.mxu0 0.0
    %984 = vmatprep.subr.mxu0 0.0
    %985 = vmatpush1.msra.mxu0 0.0
    %986 = vmatprep.subr.mxu0 0.0
    %987 = vmatpush1.msra.mxu0 0.0
    %988 = vmatprep.subr.mxu0 0.0
    %989 = vmatpush1.msra.mxu0 0.0
    %990 = vmatprep.subr.mxu0 0.0
    %991 = vmatpush1.msra.mxu0 0.0
    %992 = vmatprep.subr.mxu0 0.0
    %993 = vmatpush1.msra.mxu0 0.0
    %994 = vmatprep.subr.mxu0 0.0
    %995 = vmatpush1.msra.mxu0 0.0
    %996 = vmatprep.subr.mxu0 0.0
    %997 = vmatpush1.msra.mxu0 0.0
    %998 = vmatprep.subr.mxu0 0.0
    %999 = vmatpush1.msra.mxu0 0.0
    %1000 = vmatprep.mubr.f32.mxu0 0.0
    %1001 = vmatmul.mubr.f32.gmra.mrb[0].mxu0 %v301
    %v1002 = vpop.f32.mrb[0].mxu0
    %v1003 = vadd.f32 %v218, %v1002
    %v1004 = vpop.f32.mrb[0].mxu0
    %1005 = vdwg.mxu0
    %1006 = vmatprep.subr.mxu0 0.0
    %1007 = vmatpush1.msra.mxu0 %v75
    %1008 = vmatprep.subr.mxu0 0.0
    %1009 = vmatpush1.msra.mxu0 %v76
    %1010 = vmatprep.subr.mxu0 0.0
    %1011 = vmatpush1.msra.mxu0 %v77
    %1012 = vmatprep.subr.mxu0 0.0
    %1013 = vmatpush1.msra.mxu0 %v78
    %1014 = vmatprep.subr.mxu0 0.0
    %1015 = vmatpush1.msra.mxu0 0.0
    %1016 = vmatprep.subr.mxu0 0.0
    %1017 = vmatpush1.msra.mxu0 0.0
    %1018 = vmatprep.subr.mxu0 0.0
    %1019 = vmatpush1.msra.mxu0 0.0
    %1020 = vmatprep.subr.mxu0 0.0
    %1021 = vmatpush1.msra.mxu0 0.0
    %1022 = vmatprep.subr.mxu0 0.0
    %1023 = vmatpush1.msra.mxu0 0.0
    %1024 = vmatprep.subr.mxu0 0.0
    %1025 = vmatpush1.msra.mxu0 0.0
    %1026 = vmatprep.subr.mxu0 0.0
    %1027 = vmatpush1.msra.mxu0 0.0
    %1028 = vmatprep.subr.mxu0 0.0
    %1029 = vmatpush1.msra.mxu0 0.0
    %1030 = vmatprep.subr.mxu0 0.0
    %1031 = vmatpush1.msra.mxu0 0.0
    %1032 = vmatprep.subr.mxu0 0.0
    %1033 = vmatpush1.msra.mxu0 0.0
    %1034 = vmatprep.subr.mxu0 0.0
    %1035 = vmatpush1.msra.mxu0 0.0
    %1036 = vmatprep.subr.mxu0 0.0
    %1037 = vmatpush1.msra.mxu0 0.0
    %1038 = vmatprep.subr.mxu0 0.0
    %1039 = vmatpush1.msra.mxu0 0.0
    %1040 = vmatprep.subr.mxu0 0.0
    %1041 = vmatpush1.msra.mxu0 0.0
    %1042 = vmatprep.subr.mxu0 0.0
    %1043 = vmatpush1.msra.mxu0 0.0
    %1044 = vmatprep.subr.mxu0 0.0
    %1045 = vmatpush1.msra.mxu0 0.0
    %1046 = vmatprep.subr.mxu0 0.0
    %1047 = vmatpush1.msra.mxu0 0.0
    %1048 = vmatprep.subr.mxu0 0.0
    %1049 = vmatpush1.msra.mxu0 0.0
    %1050 = vmatprep.subr.mxu0 0.0
    %1051 = vmatpush1.msra.mxu0 0.0
    %1052 = vmatprep.subr.mxu0 0.0
    %1053 = vmatpush1.msra.mxu0 0.0
    %1054 = vmatprep.subr.mxu0 0.0
    %1055 = vmatpush1.msra.mxu0 0.0
    %1056 = vmatprep.subr.mxu0 0.0
    %1057 = vmatpush1.msra.mxu0 0.0
    %1058 = vmatprep.subr.mxu0 0.0
    %1059 = vmatpush1.msra.mxu0 0.0
    %1060 = vmatprep.subr.mxu0 0.0
    %1061 = vmatpush1.msra.mxu0 0.0
    %1062 = vmatprep.subr.mxu0 0.0
    %1063 = vmatpush1.msra.mxu0 0.0
    %1064 = vmatprep.subr.mxu0 0.0
    %1065 = vmatpush1.msra.mxu0 0.0
    %1066 = vmatprep.subr.mxu0 0.0
    %1067 = vmatpush1.msra.mxu0 0.0
    %1068 = vmatprep.subr.mxu0 0.0
    %1069 = vmatpush1.msra.mxu0 0.0
    %1070 = vmatprep.mubr.f32.mxu0 0.0
    %1071 = vmatmul.mubr.f32.gmra.mrb[0].mxu0 %v301
    %v1072 = vpop.f32.mrb[0].mxu0
    %v1073 = vadd.f32 %v222, %v1072
    %v1074 = vpop.f32.mrb[0].mxu0
    %1075 = vdwg.mxu0
    %1076 = vmatprep.subr.mxu0 0.0
    %1077 = vmatpush1.msra.mxu0 %v79
    %1078 = vmatprep.subr.mxu0 0.0
    %1079 = vmatpush1.msra.mxu0 %v80
    %1080 = vmatprep.subr.mxu0 0.0
    %1081 = vmatpush1.msra.mxu0 %v81
    %1082 = vmatprep.subr.mxu0 0.0
    %1083 = vmatpush1.msra.mxu0 %v82
    %1084 = vmatprep.subr.mxu0 0.0
    %1085 = vmatpush1.msra.mxu0 0.0
    %1086 = vmatprep.subr.mxu0 0.0
    %1087 = vmatpush1.msra.mxu0 0.0
    %1088 = vmatprep.subr.mxu0 0.0
    %1089 = vmatpush1.msra.mxu0 0.0
    %1090 = vmatprep.subr.mxu0 0.0
    %1091 = vmatpush1.msra.mxu0 0.0
    %1092 = vmatprep.subr.mxu0 0.0
    %1093 = vmatpush1.msra.mxu0 0.0
    %1094 = vmatprep.subr.mxu0 0.0
    %1095 = vmatpush1.msra.mxu0 0.0
    %1096 = vmatprep.subr.mxu0 0.0
    %1097 = vmatpush1.msra.mxu0 0.0
    %1098 = vmatprep.subr.mxu0 0.0
    %1099 = vmatpush1.msra.mxu0 0.0
    %1100 = vmatprep.subr.mxu0 0.0
    %1101 = vmatpush1.msra.mxu0 0.0
    %1102 = vmatprep.subr.mxu0 0.0
    %1103 = vmatpush1.msra.mxu0 0.0
    %1104 = vmatprep.subr.mxu0 0.0
    %1105 = vmatpush1.msra.mxu0 0.0
    %1106 = vmatprep.subr.mxu0 0.0
    %1107 = vmatpush1.msra.mxu0 0.0
    %1108 = vmatprep.subr.mxu0 0.0
    %1109 = vmatpush1.msra.mxu0 0.0
    %1110 = vmatprep.subr.mxu0 0.0
    %1111 = vmatpush1.msra.mxu0 0.0
    %1112 = vmatprep.subr.mxu0 0.0
    %1113 = vmatpush1.msra.mxu0 0.0
    %1114 = vmatprep.subr.mxu0 0.0
    %1115 = vmatpush1.msra.mxu0 0.0
    %1116 = vmatprep.subr.mxu0 0.0
    %1117 = vmatpush1.msra.mxu0 0.0
    %1118 = vmatprep.subr.mxu0 0.0
    %1119 = vmatpush1.msra.mxu0 0.0
    %1120 = vmatprep.subr.mxu0 0.0
    %1121 = vmatpush1.msra.mxu0 0.0
    %1122 = vmatprep.subr.mxu0 0.0
    %1123 = vmatpush1.msra.mxu0 0.0
    %1124 = vmatprep.subr.mxu0 0.0
    %1125 = vmatpush1.msra.mxu0 0.0
    %1126 = vmatprep.subr.mxu0 0.0
    %1127 = vmatpush1.msra.mxu0 0.0
    %1128 = vmatprep.subr.mxu0 0.0
    %1129 = vmatpush1.msra.mxu0 0.0
    %1130 = vmatprep.subr.mxu0 0.0
    %1131 = vmatpush1.msra.mxu0 0.0
    %1132 = vmatprep.subr.mxu0 0.0
    %1133 = vmatpush1.msra.mxu0 0.0
    %1134 = vmatprep.subr.mxu0 0.0
    %1135 = vmatpush1.msra.mxu0 0.0
    %1136 = vmatprep.subr.mxu0 0.0
    %1137 = vmatpush1.msra.mxu0 0.0
    %1138 = vmatprep.subr.mxu0 0.0
    %1139 = vmatpush1.msra.mxu0 0.0
    %1140 = vmatprep.mubr.f32.mxu0 0.0
    %1141 = vmatmul.mubr.f32.gmra.mrb[0].mxu0 %v301
    %v1142 = vpop.f32.mrb[0].mxu0
    %v1143 = vadd.f32 %v226, %v1142
    %v1144 = vpop.f32.mrb[0].mxu0
    %1145 = vdwg.mxu0
    %1146 = vmatprep.subr.mxu0 0.0
    %1147 = vmatpush1.msra.mxu0 %v83
    %1148 = vmatprep.subr.mxu0 0.0
    %1149 = vmatpush1.msra.mxu0 %v84
    %1150 = vmatprep.subr.mxu0 0.0
    %1151 = vmatpush1.msra.mxu0 %v85
    %1152 = vmatprep.subr.mxu0 0.0
    %1153 = vmatpush1.msra.mxu0 %v86
    %1154 = vmatprep.subr.mxu0 0.0
    %1155 = vmatpush1.msra.mxu0 0.0
    %1156 = vmatprep.subr.mxu0 0.0
    %1157 = vmatpush1.msra.mxu0 0.0
    %1158 = vmatprep.subr.mxu0 0.0
    %1159 = vmatpush1.msra.mxu0 0.0
    %1160 = vmatprep.subr.mxu0 0.0
    %1161 = vmatpush1.msra.mxu0 0.0
    %1162 = vmatprep.subr.mxu0 0.0
    %1163 = vmatpush1.msra.mxu0 0.0
    %1164 = vmatprep.subr.mxu0 0.0
    %1165 = vmatpush1.msra.mxu0 0.0
    %1166 = vmatprep.subr.mxu0 0.0
    %1167 = vmatpush1.msra.mxu0 0.0
    %1168 = vmatprep.subr.mxu0 0.0
    %1169 = vmatpush1.msra.mxu0 0.0
    %1170 = vmatprep.subr.mxu0 0.0
    %1171 = vmatpush1.msra.mxu0 0.0
    %1172 = vmatprep.subr.mxu0 0.0
    %1173 = vmatpush1.msra.mxu0 0.0
    %1174 = vmatprep.subr.mxu0 0.0
    %1175 = vmatpush1.msra.mxu0 0.0
    %1176 = vmatprep.subr.mxu0 0.0
    %1177 = vmatpush1.msra.mxu0 0.0
    %1178 = vmatprep.subr.mxu0 0.0
    %1179 = vmatpush1.msra.mxu0 0.0
    %1180 = vmatprep.subr.mxu0 0.0
    %1181 = vmatpush1.msra.mxu0 0.0
    %1182 = vmatprep.subr.mxu0 0.0
    %1183 = vmatpush1.msra.mxu0 0.0
    %1184 = vmatprep.subr.mxu0 0.0
    %1185 = vmatpush1.msra.mxu0 0.0
    %1186 = vmatprep.subr.mxu0 0.0
    %1187 = vmatpush1.msra.mxu0 0.0
    %1188 = vmatprep.subr.mxu0 0.0
    %1189 = vmatpush1.msra.mxu0 0.0
    %1190 = vmatprep.subr.mxu0 0.0
    %1191 = vmatpush1.msra.mxu0 0.0
    %1192 = vmatprep.subr.mxu0 0.0
    %1193 = vmatpush1.msra.mxu0 0.0
    %1194 = vmatprep.subr.mxu0 0.0
    %1195 = vmatpush1.msra.mxu0 0.0
    %1196 = vmatprep.subr.mxu0 0.0
    %1197 = vmatpush1.msra.mxu0 0.0
    %1198 = vmatprep.subr.mxu0 0.0
    %1199 = vmatpush1.msra.mxu0 0.0
    %1200 = vmatprep.subr.mxu0 0.0
    %1201 = vmatpush1.msra.mxu0 0.0
    %1202 = vmatprep.subr.mxu0 0.0
    %1203 = vmatpush1.msra.mxu0 0.0
    %1204 = vmatprep.subr.mxu0 0.0
    %1205 = vmatpush1.msra.mxu0 0.0
    %1206 = vmatprep.subr.mxu0 0.0
    %1207 = vmatpush1.msra.mxu0 0.0
    %1208 = vmatprep.subr.mxu0 0.0
    %1209 = vmatpush1.msra.mxu0 0.0
    %1210 = vmatprep.mubr.f32.mxu0 0.0
    %1211 = vmatmul.mubr.f32.gmra.mrb[0].mxu0 %v584
    %v1212 = vpop.f32.mrb[0].mxu0
    %v1213 = vadd.f32 %v230, %v1212
    %v1214 = vpop.f32.mrb[0].mxu0
    %1215 = vdwg.mxu0
    %1216 = vmatprep.subr.mxu0 0.0
    %1217 = vmatpush1.msra.mxu0 %v87
    %1218 = vmatprep.subr.mxu0 0.0
    %1219 = vmatpush1.msra.mxu0 %v88
    %1220 = vmatprep.subr.mxu0 0.0
    %1221 = vmatpush1.msra.mxu0 %v89
    %1222 = vmatprep.subr.mxu0 0.0
    %1223 = vmatpush1.msra.mxu0 %v90
    %1224 = vmatprep.subr.mxu0 0.0
    %1225 = vmatpush1.msra.mxu0 0.0
    %1226 = vmatprep.subr.mxu0 0.0
    %1227 = vmatpush1.msra.mxu0 0.0
    %1228 = vmatprep.subr.mxu0 0.0
    %1229 = vmatpush1.msra.mxu0 0.0
    %1230 = vmatprep.subr.mxu0 0.0
    %1231 = vmatpush1.msra.mxu0 0.0
    %1232 = vmatprep.subr.mxu0 0.0
    %1233 = vmatpush1.msra.mxu0 0.0
    %1234 = vmatprep.subr.mxu0 0.0
    %1235 = vmatpush1.msra.mxu0 0.0
    %1236 = vmatprep.subr.mxu0 0.0
    %1237 = vmatpush1.msra.mxu0 0.0
    %1238 = vmatprep.subr.mxu0 0.0
    %1239 = vmatpush1.msra.mxu0 0.0
    %1240 = vmatprep.subr.mxu0 0.0
    %1241 = vmatpush1.msra.mxu0 0.0
    %1242 = vmatprep.subr.mxu0 0.0
    %1243 = vmatpush1.msra.mxu0 0.0
    %1244 = vmatprep.subr.mxu0 0.0
    %1245 = vmatpush1.msra.mxu0 0.0
    %1246 = vmatprep.subr.mxu0 0.0
    %1247 = vmatpush1.msra.mxu0 0.0
    %1248 = vmatprep.subr.mxu0 0.0
    %1249 = vmatpush1.msra.mxu0 0.0
    %1250 = vmatprep.subr.mxu0 0.0
    %1251 = vmatpush1.msra.mxu0 0.0
    %1252 = vmatprep.subr.mxu0 0.0
    %1253 = vmatpush1.msra.mxu0 0.0
    %1254 = vmatprep.subr.mxu0 0.0
    %1255 = vmatpush1.msra.mxu0 0.0
    %1256 = vmatprep.subr.mxu0 0.0
    %1257 = vmatpush1.msra.mxu0 0.0
    %1258 = vmatprep.subr.mxu0 0.0
    %1259 = vmatpush1.msra.mxu0 0.0
    %1260 = vmatprep.subr.mxu0 0.0
    %1261 = vmatpush1.msra.mxu0 0.0
    %1262 = vmatprep.subr.mxu0 0.0
    %1263 = vmatpush1.msra.mxu0 0.0
    %1264 = vmatprep.subr.mxu0 0.0
    %1265 = vmatpush1.msra.mxu0 0.0
    %1266 = vmatprep.subr.mxu0 0.0
    %1267 = vmatpush1.msra.mxu0 0.0
    %1268 = vmatprep.subr.mxu0 0.0
    %1269 = vmatpush1.msra.mxu0 0.0
    %1270 = vmatprep.subr.mxu0 0.0
    %1271 = vmatpush1.msra.mxu0 0.0
    %1272 = vmatprep.subr.mxu0 0.0
    %1273 = vmatpush1.msra.mxu0 0.0
    %1274 = vmatprep.subr.mxu0 0.0
    %1275 = vmatpush1.msra.mxu0 0.0
    %1276 = vmatprep.subr.mxu0 0.0
    %1277 = vmatpush1.msra.mxu0 0.0
    %1278 = vmatprep.subr.mxu0 0.0
    %1279 = vmatpush1.msra.mxu0 0.0
    %1280 = vmatprep.mubr.f32.mxu0 0.0
    %1281 = vmatmul.mubr.f32.gmra.mrb[0].mxu0 %v584
    %v1282 = vpop.f32.mrb[0].mxu0
    %v1283 = vadd.f32 %v234, %v1282
    %v1284 = vpop.f32.mrb[0].mxu0
    %1285 = vdwg.mxu0
    %1286 = vmatprep.subr.mxu0 0.0
    %1287 = vmatpush1.msra.mxu0 %v91
    %1288 = vmatprep.subr.mxu0 0.0
    %1289 = vmatpush1.msra.mxu0 %v92
    %1290 = vmatprep.subr.mxu0 0.0
    %1291 = vmatpush1.msra.mxu0 %v93
    %1292 = vmatprep.subr.mxu0 0.0
    %1293 = vmatpush1.msra.mxu0 %v94
    %1294 = vmatprep.subr.mxu0 0.0
    %1295 = vmatpush1.msra.mxu0 0.0
    %1296 = vmatprep.subr.mxu0 0.0
    %1297 = vmatpush1.msra.mxu0 0.0
    %1298 = vmatprep.subr.mxu0 0.0
    %1299 = vmatpush1.msra.mxu0 0.0
    %1300 = vmatprep.subr.mxu0 0.0
    %1301 = vmatpush1.msra.mxu0 0.0
    %1302 = vmatprep.subr.mxu0 0.0
    %1303 = vmatpush1.msra.mxu0 0.0
    %1304 = vmatprep.subr.mxu0 0.0
    %1305 = vmatpush1.msra.mxu0 0.0
    %1306 = vmatprep.subr.mxu0 0.0
    %1307 = vmatpush1.msra.mxu0 0.0
    %1308 = vmatprep.subr.mxu0 0.0
    %1309 = vmatpush1.msra.mxu0 0.0
    %1310 = vmatprep.subr.mxu0 0.0
    %1311 = vmatpush1.msra.mxu0 0.0
    %1312 = vmatprep.subr.mxu0 0.0
    %1313 = vmatpush1.msra.mxu0 0.0
    %1314 = vmatprep.subr.mxu0 0.0
    %1315 = vmatpush1.msra.mxu0 0.0
    %1316 = vmatprep.subr.mxu0 0.0
    %1317 = vmatpush1.msra.mxu0 0.0
    %1318 = vmatprep.subr.mxu0 0.0
    %1319 = vmatpush1.msra.mxu0 0.0
    %1320 = vmatprep.subr.mxu0 0.0
    %1321 = vmatpush1.msra.mxu0 0.0
    %1322 = vmatprep.subr.mxu0 0.0
    %1323 = vmatpush1.msra.mxu0 0.0
    %1324 = vmatprep.subr.mxu0 0.0
    %1325 = vmatpush1.msra.mxu0 0.0
    %1326 = vmatprep.subr.mxu0 0.0
    %1327 = vmatpush1.msra.mxu0 0.0
    %1328 = vmatprep.subr.mxu0 0.0
    %1329 = vmatpush1.msra.mxu0 0.0
    %1330 = vmatprep.subr.mxu0 0.0
    %1331 = vmatpush1.msra.mxu0 0.0
    %1332 = vmatprep.subr.mxu0 0.0
    %1333 = vmatpush1.msra.mxu0 0.0
    %1334 = vmatprep.subr.mxu0 0.0
    %1335 = vmatpush1.msra.mxu0 0.0
    %1336 = vmatprep.subr.mxu0 0.0
    %1337 = vmatpush1.msra.mxu0 0.0
    %1338 = vmatprep.subr.mxu0 0.0
    %1339 = vmatpush1.msra.mxu0 0.0
    %1340 = vmatprep.subr.mxu0 0.0
    %1341 = vmatpush1.msra.mxu0 0.0
    %1342 = vmatprep.subr.mxu0 0.0
    %1343 = vmatpush1.msra.mxu0 0.0
    %1344 = vmatprep.subr.mxu0 0.0
    %1345 = vmatpush1.msra.mxu0 0.0
    %1346 = vmatprep.subr.mxu0 0.0
    %1347 = vmatpush1.msra.mxu0 0.0
    %1348 = vmatprep.subr.mxu0 0.0
    %1349 = vmatpush1.msra.mxu0 0.0
    %1350 = vmatprep.mubr.f32.mxu0 0.0
    %1351 = vmatmul.mubr.f32.gmra.mrb[0].mxu0 %v584
    %v1352 = vpop.f32.mrb[0].mxu0
    %v1353 = vadd.f32 %v238, %v1352
    %v1354 = vpop.f32.mrb[0].mxu0
    %1355 = vdwg.mxu0
    %1356 = vmatprep.subr.mxu0 0.0
    %1357 = vmatpush1.msra.mxu0 %v95
    %1358 = vmatprep.subr.mxu0 0.0
    %1359 = vmatpush1.msra.mxu0 %v96
    %1360 = vmatprep.subr.mxu0 0.0
    %1361 = vmatpush1.msra.mxu0 %v97
    %1362 = vmatprep.subr.mxu0 0.0
    %1363 = vmatpush1.msra.mxu0 %v98
    %1364 = vmatprep.subr.mxu0 0.0
    %1365 = vmatpush1.msra.mxu0 0.0
    %1366 = vmatprep.subr.mxu0 0.0
    %1367 = vmatpush1.msra.mxu0 0.0
    %1368 = vmatprep.subr.mxu0 0.0
    %1369 = vmatpush1.msra.mxu0 0.0
    %1370 = vmatprep.subr.mxu0 0.0
    %1371 = vmatpush1.msra.mxu0 0.0
    %1372 = vmatprep.subr.mxu0 0.0
    %1373 = vmatpush1.msra.mxu0 0.0
    %1374 = vmatprep.subr.mxu0 0.0
    %1375 = vmatpush1.msra.mxu0 0.0
    %1376 = vmatprep.subr.mxu0 0.0
    %1377 = vmatpush1.msra.mxu0 0.0
    %1378 = vmatprep.subr.mxu0 0.0
    %1379 = vmatpush1.msra.mxu0 0.0
    %1380 = vmatprep.subr.mxu0 0.0
    %1381 = vmatpush1.msra.mxu0 0.0
    %1382 = vmatprep.subr.mxu0 0.0
    %1383 = vmatpush1.msra.mxu0 0.0
    %1384 = vmatprep.subr.mxu0 0.0
    %1385 = vmatpush1.msra.mxu0 0.0
    %1386 = vmatprep.subr.mxu0 0.0
    %1387 = vmatpush1.msra.mxu0 0.0
    %1388 = vmatprep.subr.mxu0 0.0
    %1389 = vmatpush1.msra.mxu0 0.0
    %1390 = vmatprep.subr.mxu0 0.0
    %1391 = vmatpush1.msra.mxu0 0.0
    %1392 = vmatprep.subr.mxu0 0.0
    %1393 = vmatpush1.msra.mxu0 0.0
    %1394 = vmatprep.subr.mxu0 0.0
    %1395 = vmatpush1.msra.mxu0 0.0
    %1396 = vmatprep.subr.mxu0 0.0
    %1397 = vmatpush1.msra.mxu0 0.0
    %1398 = vmatprep.subr.mxu0 0.0
    %1399 = vmatpush1.msra.mxu0 0.0
    %1400 = vmatprep.subr.mxu0 0.0
    %1401 = vmatpush1.msra.mxu0 0.0
    %1402 = vmatprep.subr.mxu0 0.0
    %1403 = vmatpush1.msra.mxu0 0.0
    %1404 = vmatprep.subr.mxu0 0.0
    %1405 = vmatpush1.msra.mxu0 0.0
    %1406 = vmatprep.subr.mxu0 0.0
    %1407 = vmatpush1.msra.mxu0 0.0
    %1408 = vmatprep.subr.mxu0 0.0
    %1409 = vmatpush1.msra.mxu0 0.0
    %1410 = vmatprep.subr.mxu0 0.0
    %1411 = vmatpush1.msra.mxu0 0.0
    %1412 = vmatprep.subr.mxu0 0.0
    %1413 = vmatpush1.msra.mxu0 0.0
    %1414 = vmatprep.subr.mxu0 0.0
    %1415 = vmatpush1.msra.mxu0 0.0
    %1416 = vmatprep.subr.mxu0 0.0
    %1417 = vmatpush1.msra.mxu0 0.0
    %1418 = vmatprep.subr.mxu0 0.0
    %1419 = vmatpush1.msra.mxu0 0.0
    %1420 = vmatprep.mubr.f32.mxu0 0.0
    %1421 = vmatmul.mubr.f32.gmra.mrb[0].mxu0 %v584
    %v1422 = vpop.f32.mrb[0].mxu0
    %v1423 = vadd.f32 %v242, %v1422
    %v1424 = vpop.f32.mrb[0].mxu0
    %1425 = vdwg.mxu0
    %1426 = vmatprep.subr.mxu0 0.0
    %1427 = vmatpush1.msra.mxu0 %v99
    %1428 = vmatprep.subr.mxu0 0.0
    %1429 = vmatpush1.msra.mxu0 %v100
    %1430 = vmatprep.subr.mxu0 0.0
    %1431 = vmatpush1.msra.mxu0 %v101
    %1432 = vmatprep.subr.mxu0 0.0
    %1433 = vmatpush1.msra.mxu0 %v102
    %1434 = vmatprep.subr.mxu0 0.0
    %1435 = vmatpush1.msra.mxu0 0.0
    %1436 = vmatprep.subr.mxu0 0.0
    %1437 = vmatpush1.msra.mxu0 0.0
    %1438 = vmatprep.subr.mxu0 0.0
    %1439 = vmatpush1.msra.mxu0 0.0
    %1440 = vmatprep.subr.mxu0 0.0
    %1441 = vmatpush1.msra.mxu0 0.0
    %1442 = vmatprep.subr.mxu0 0.0
    %1443 = vmatpush1.msra.mxu0 0.0
    %1444 = vmatprep.subr.mxu0 0.0
    %1445 = vmatpush1.msra.mxu0 0.0
    %1446 = vmatprep.subr.mxu0 0.0
    %1447 = vmatpush1.msra.mxu0 0.0
    %1448 = vmatprep.subr.mxu0 0.0
    %1449 = vmatpush1.msra.mxu0 0.0
    %1450 = vmatprep.subr.mxu0 0.0
    %1451 = vmatpush1.msra.mxu0 0.0
    %1452 = vmatprep.subr.mxu0 0.0
    %1453 = vmatpush1.msra.mxu0 0.0
    %1454 = vmatprep.subr.mxu0 0.0
    %1455 = vmatpush1.msra.mxu0 0.0
    %1456 = vmatprep.subr.mxu0 0.0
    %1457 = vmatpush1.msra.mxu0 0.0
    %1458 = vmatprep.subr.mxu0 0.0
    %1459 = vmatpush1.msra.mxu0 0.0
    %1460 = vmatprep.subr.mxu0 0.0
    %1461 = vmatpush1.msra.mxu0 0.0
    %1462 = vmatprep.subr.mxu0 0.0
    %1463 = vmatpush1.msra.mxu0 0.0
    %1464 = vmatprep.subr.mxu0 0.0
    %1465 = vmatpush1.msra.mxu0 0.0
    %1466 = vmatprep.subr.mxu0 0.0
    %1467 = vmatpush1.msra.mxu0 0.0
    %1468 = vmatprep.subr.mxu0 0.0
    %1469 = vmatpush1.msra.mxu0 0.0
    %1470 = vmatprep.subr.mxu0 0.0
    %1471 = vmatpush1.msra.mxu0 0.0
    %1472 = vmatprep.subr.mxu0 0.0
    %1473 = vmatpush1.msra.mxu0 0.0
    %1474 = vmatprep.subr.mxu0 0.0
    %1475 = vmatpush1.msra.mxu0 0.0
    %1476 = vmatprep.subr.mxu0 0.0
    %1477 = vmatpush1.msra.mxu0 0.0
    %1478 = vmatprep.subr.mxu0 0.0
    %1479 = vmatpush1.msra.mxu0 0.0
    %1480 = vmatprep.subr.mxu0 0.0
    %1481 = vmatpush1.msra.mxu0 0.0
    %1482 = vmatprep.subr.mxu0 0.0
    %1483 = vmatpush1.msra.mxu0 0.0
    %1484 = vmatprep.subr.mxu0 0.0
    %1485 = vmatpush1.msra.mxu0 0.0
    %1486 = vmatprep.subr.mxu0 0.0
    %1487 = vmatpush1.msra.mxu0 0.0
    %1488 = vmatprep.subr.mxu0 0.0
    %1489 = vmatpush1.msra.mxu0 0.0
    %1490 = vmatprep.mubr.f32.mxu0 0.0
    %1491 = vmatmul.mubr.f32.gmra.mrb[0].mxu0 %v301
    %v1492 = vpop.f32.mrb[0].mxu0
    %v1493 = vadd.f32 %v246, %v1492
    %v1494 = vpop.f32.mrb[0].mxu0
    %1495 = vdwg.mxu0
    %1496 = vmatprep.subr.mxu0 0.0
    %1497 = vmatpush1.msra.mxu0 %v103
    %1498 = vmatprep.subr.mxu0 0.0
    %1499 = vmatpush1.msra.mxu0 %v104
    %1500 = vmatprep.subr.mxu0 0.0
    %1501 = vmatpush1.msra.mxu0 %v105
    %1502 = vmatprep.subr.mxu0 0.0
    %1503 = vmatpush1.msra.mxu0 %v106
    %1504 = vmatprep.subr.mxu0 0.0
    %1505 = vmatpush1.msra.mxu0 0.0
    %1506 = vmatprep.subr.mxu0 0.0
    %1507 = vmatpush1.msra.mxu0 0.0
    %1508 = vmatprep.subr.mxu0 0.0
    %1509 = vmatpush1.msra.mxu0 0.0
    %1510 = vmatprep.subr.mxu0 0.0
    %1511 = vmatpush1.msra.mxu0 0.0
    %1512 = vmatprep.subr.mxu0 0.0
    %1513 = vmatpush1.msra.mxu0 0.0
    %1514 = vmatprep.subr.mxu0 0.0
    %1515 = vmatpush1.msra.mxu0 0.0
    %1516 = vmatprep.subr.mxu0 0.0
    %1517 = vmatpush1.msra.mxu0 0.0
    %1518 = vmatprep.subr.mxu0 0.0
    %1519 = vmatpush1.msra.mxu0 0.0
    %1520 = vmatprep.subr.mxu0 0.0
    %1521 = vmatpush1.msra.mxu0 0.0
    %1522 = vmatprep.subr.mxu0 0.0
    %1523 = vmatpush1.msra.mxu0 0.0
    %1524 = vmatprep.subr.mxu0 0.0
    %1525 = vmatpush1.msra.mxu0 0.0
    %1526 = vmatprep.subr.mxu0 0.0
    %1527 = vmatpush1.msra.mxu0 0.0
    %1528 = vmatprep.subr.mxu0 0.0
    %1529 = vmatpush1.msra.mxu0 0.0
    %1530 = vmatprep.subr.mxu0 0.0
    %1531 = vmatpush1.msra.mxu0 0.0
    %1532 = vmatprep.subr.mxu0 0.0
    %1533 = vmatpush1.msra.mxu0 0.0
    %1534 = vmatprep.subr.mxu0 0.0
    %1535 = vmatpush1.msra.mxu0 0.0
    %1536 = vmatprep.subr.mxu0 0.0
    %1537 = vmatpush1.msra.mxu0 0.0
    %1538 = vmatprep.subr.mxu0 0.0
    %1539 = vmatpush1.msra.mxu0 0.0
    %1540 = vmatprep.subr.mxu0 0.0
    %1541 = vmatpush1.msra.mxu0 0.0
    %1542 = vmatprep.subr.mxu0 0.0
    %1543 = vmatpush1.msra.mxu0 0.0
    %1544 = vmatprep.subr.mxu0 0.0
    %1545 = vmatpush1.msra.mxu0 0.0
    %1546 = vmatprep.subr.mxu0 0.0
    %1547 = vmatpush1.msra.mxu0 0.0
    %1548 = vmatprep.subr.mxu0 0.0
    %1549 = vmatpush1.msra.mxu0 0.0
    %1550 = vmatprep.subr.mxu0 0.0
    %1551 = vmatpush1.msra.mxu0 0.0
    %1552 = vmatprep.subr.mxu0 0.0
    %1553 = vmatpush1.msra.mxu0 0.0
    %1554 = vmatprep.subr.mxu0 0.0
    %1555 = vmatpush1.msra.mxu0 0.0
    %1556 = vmatprep.subr.mxu0 0.0
    %1557 = vmatpush1.msra.mxu0 0.0
    %1558 = vmatprep.subr.mxu0 0.0
    %1559 = vmatpush1.msra.mxu0 0.0
    %1560 = vmatprep.mubr.f32.mxu0 0.0
    %1561 = vmatmul.mubr.f32.gmra.mrb[0].mxu0 %v301
    %v1562 = vpop.f32.mrb[0].mxu0
    %v1563 = vadd.f32 %v250, %v1562
    %v1564 = vpop.f32.mrb[0].mxu0
    %1565 = vdwg.mxu0
    %1566 = vmatprep.subr.mxu0 0.0
    %1567 = vmatpush1.msra.mxu0 %v107
    %1568 = vmatprep.subr.mxu0 0.0
    %1569 = vmatpush1.msra.mxu0 %v108
    %1570 = vmatprep.subr.mxu0 0.0
    %1571 = vmatpush1.msra.mxu0 %v109
    %1572 = vmatprep.subr.mxu0 0.0
    %1573 = vmatpush1.msra.mxu0 %v110
    %1574 = vmatprep.subr.mxu0 0.0
    %1575 = vmatpush1.msra.mxu0 0.0
    %1576 = vmatprep.subr.mxu0 0.0
    %1577 = vmatpush1.msra.mxu0 0.0
    %1578 = vmatprep.subr.mxu0 0.0
    %1579 = vmatpush1.msra.mxu0 0.0
    %1580 = vmatprep.subr.mxu0 0.0
    %1581 = vmatpush1.msra.mxu0 0.0
    %1582 = vmatprep.subr.mxu0 0.0
    %1583 = vmatpush1.msra.mxu0 0.0
    %1584 = vmatprep.subr.mxu0 0.0
    %1585 = vmatpush1.msra.mxu0 0.0
    %1586 = vmatprep.subr.mxu0 0.0
    %1587 = vmatpush1.msra.mxu0 0.0
    %1588 = vmatprep.subr.mxu0 0.0
    %1589 = vmatpush1.msra.mxu0 0.0
    %1590 = vmatprep.subr.mxu0 0.0
    %1591 = vmatpush1.msra.mxu0 0.0
    %1592 = vmatprep.subr.mxu0 0.0
    %1593 = vmatpush1.msra.mxu0 0.0
    %1594 = vmatprep.subr.mxu0 0.0
    %1595 = vmatpush1.msra.mxu0 0.0
    %1596 = vmatprep.subr.mxu0 0.0
    %1597 = vmatpush1.msra.mxu0 0.0
    %1598 = vmatprep.subr.mxu0 0.0
    %1599 = vmatpush1.msra.mxu0 0.0
    %1600 = vmatprep.subr.mxu0 0.0
    %1601 = vmatpush1.msra.mxu0 0.0
    %1602 = vmatprep.subr.mxu0 0.0
    %1603 = vmatpush1.msra.mxu0 0.0
    %1604 = vmatprep.subr.mxu0 0.0
    %1605 = vmatpush1.msra.mxu0 0.0
    %1606 = vmatprep.subr.mxu0 0.0
    %1607 = vmatpush1.msra.mxu0 0.0
    %1608 = vmatprep.subr.mxu0 0.0
    %1609 = vmatpush1.msra.mxu0 0.0
    %1610 = vmatprep.subr.mxu0 0.0
    %1611 = vmatpush1.msra.mxu0 0.0
    %1612 = vmatprep.subr.mxu0 0.0
    %1613 = vmatpush1.msra.mxu0 0.0
    %1614 = vmatprep.subr.mxu0 0.0
    %1615 = vmatpush1.msra.mxu0 0.0
    %1616 = vmatprep.subr.mxu0 0.0
    %1617 = vmatpush1.msra.mxu0 0.0
    %1618 = vmatprep.subr.mxu0 0.0
    %1619 = vmatpush1.msra.mxu0 0.0
    %1620 = vmatprep.subr.mxu0 0.0
    %1621 = vmatpush1.msra.mxu0 0.0
    %1622 = vmatprep.subr.mxu0 0.0
    %1623 = vmatpush1.msra.mxu0 0.0
    %1624 = vmatprep.subr.mxu0 0.0
    %1625 = vmatpush1.msra.mxu0 0.0
    %1626 = vmatprep.subr.mxu0 0.0
    %1627 = vmatpush1.msra.mxu0 0.0
    %1628 = vmatprep.subr.mxu0 0.0
    %1629 = vmatpush1.msra.mxu0 0.0
    %1630 = vmatprep.mubr.f32.mxu0 0.0
    %1631 = vmatmul.mubr.f32.gmra.mrb[0].mxu0 %v301
    %v1632 = vpop.f32.mrb[0].mxu0
    %v1633 = vadd.f32 %v254, %v1632
    %v1634 = vpop.f32.mrb[0].mxu0
    %1635 = vdwg.mxu0
    %1636 = vmatprep.subr.mxu0 0.0
    %1637 = vmatpush1.msra.mxu0 %v111
    %1638 = vmatprep.subr.mxu0 0.0
    %1639 = vmatpush1.msra.mxu0 %v112
    %1640 = vmatprep.subr.mxu0 0.0
    %1641 = vmatpush1.msra.mxu0 %v113
    %1642 = vmatprep.subr.mxu0 0.0
    %1643 = vmatpush1.msra.mxu0 %v114
    %1644 = vmatprep.subr.mxu0 0.0
    %1645 = vmatpush1.msra.mxu0 0.0
    %1646 = vmatprep.subr.mxu0 0.0
    %1647 = vmatpush1.msra.mxu0 0.0
    %1648 = vmatprep.subr.mxu0 0.0
    %1649 = vmatpush1.msra.mxu0 0.0
    %1650 = vmatprep.subr.mxu0 0.0
    %1651 = vmatpush1.msra.mxu0 0.0
    %1652 = vmatprep.subr.mxu0 0.0
    %1653 = vmatpush1.msra.mxu0 0.0
    %1654 = vmatprep.subr.mxu0 0.0
    %1655 = vmatpush1.msra.mxu0 0.0
    %1656 = vmatprep.subr.mxu0 0.0
    %1657 = vmatpush1.msra.mxu0 0.0
    %1658 = vmatprep.subr.mxu0 0.0
    %1659 = vmatpush1.msra.mxu0 0.0
    %1660 = vmatprep.subr.mxu0 0.0
    %1661 = vmatpush1.msra.mxu0 0.0
    %1662 = vmatprep.subr.mxu0 0.0
    %1663 = vmatpush1.msra.mxu0 0.0
    %1664 = vmatprep.subr.mxu0 0.0
    %1665 = vmatpush1.msra.mxu0 0.0
    %1666 = vmatprep.subr.mxu0 0.0
    %1667 = vmatpush1.msra.mxu0 0.0
    %1668 = vmatprep.subr.mxu0 0.0
    %1669 = vmatpush1.msra.mxu0 0.0
    %1670 = vmatprep.subr.mxu0 0.0
    %1671 = vmatpush1.msra.mxu0 0.0
    %1672 = vmatprep.subr.mxu0 0.0
    %1673 = vmatpush1.msra.mxu0 0.0
    %1674 = vmatprep.subr.mxu0 0.0
    %1675 = vmatpush1.msra.mxu0 0.0
    %1676 = vmatprep.subr.mxu0 0.0
    %1677 = vmatpush1.msra.mxu0 0.0
    %1678 = vmatprep.subr.mxu0 0.0
    %1679 = vmatpush1.msra.mxu0 0.0
    %1680 = vmatprep.subr.mxu0 0.0
    %1681 = vmatpush1.msra.mxu0 0.0
    %1682 = vmatprep.subr.mxu0 0.0
    %1683 = vmatpush1.msra.mxu0 0.0
    %1684 = vmatprep.subr.mxu0 0.0
    %1685 = vmatpush1.msra.mxu0 0.0
    %1686 = vmatprep.subr.mxu0 0.0
    %1687 = vmatpush1.msra.mxu0 0.0
    %1688 = vmatprep.subr.mxu0 0.0
    %1689 = vmatpush1.msra.mxu0 0.0
    %1690 = vmatprep.subr.mxu0 0.0
    %1691 = vmatpush1.msra.mxu0 0.0
    %1692 = vmatprep.subr.mxu0 0.0
    %1693 = vmatpush1.msra.mxu0 0.0
    %1694 = vmatprep.subr.mxu0 0.0
    %1695 = vmatpush1.msra.mxu0 0.0
    %1696 = vmatprep.subr.mxu0 0.0
    %1697 = vmatpush1.msra.mxu0 0.0
    %1698 = vmatprep.subr.mxu0 0.0
    %1699 = vmatpush1.msra.mxu0 0.0
    %1700 = vmatprep.mubr.f32.mxu0 0.0
    %1701 = vmatmul.mubr.f32.gmra.mrb[0].mxu0 %v301
    %v1702 = vpop.f32.mrb[0].mxu0
    %v1703 = vadd.f32 %v258, %v1702
    %v1704 = vpop.f32.mrb[0].mxu0
    %1705 = vdwg.mxu0
    %1706 = vmatprep.subr.mxu0 0.0
    %1707 = vmatpush1.msra.mxu0 %v115
    %1708 = vmatprep.subr.mxu0 0.0
    %1709 = vmatpush1.msra.mxu0 %v116
    %1710 = vmatprep.subr.mxu0 0.0
    %1711 = vmatpush1.msra.mxu0 %v117
    %1712 = vmatprep.subr.mxu0 0.0
    %1713 = vmatpush1.msra.mxu0 %v118
    %1714 = vmatprep.subr.mxu0 0.0
    %1715 = vmatpush1.msra.mxu0 0.0
    %1716 = vmatprep.subr.mxu0 0.0
    %1717 = vmatpush1.msra.mxu0 0.0
    %1718 = vmatprep.subr.mxu0 0.0
    %1719 = vmatpush1.msra.mxu0 0.0
    %1720 = vmatprep.subr.mxu0 0.0
    %1721 = vmatpush1.msra.mxu0 0.0
    %1722 = vmatprep.subr.mxu0 0.0
    %1723 = vmatpush1.msra.mxu0 0.0
    %1724 = vmatprep.subr.mxu0 0.0
    %1725 = vmatpush1.msra.mxu0 0.0
    %1726 = vmatprep.subr.mxu0 0.0
    %1727 = vmatpush1.msra.mxu0 0.0
    %1728 = vmatprep.subr.mxu0 0.0
    %1729 = vmatpush1.msra.mxu0 0.0
    %1730 = vmatprep.subr.mxu0 0.0
    %1731 = vmatpush1.msra.mxu0 0.0
    %1732 = vmatprep.subr.mxu0 0.0
    %1733 = vmatpush1.msra.mxu0 0.0
    %1734 = vmatprep.subr.mxu0 0.0
    %1735 = vmatpush1.msra.mxu0 0.0
    %1736 = vmatprep.subr.mxu0 0.0
    %1737 = vmatpush1.msra.mxu0 0.0
    %1738 = vmatprep.subr.mxu0 0.0
    %1739 = vmatpush1.msra.mxu0 0.0
    %1740 = vmatprep.subr.mxu0 0.0
    %1741 = vmatpush1.msra.mxu0 0.0
    %1742 = vmatprep.subr.mxu0 0.0
    %1743 = vmatpush1.msra.mxu0 0.0
    %1744 = vmatprep.subr.mxu0 0.0
    %1745 = vmatpush1.msra.mxu0 0.0
    %1746 = vmatprep.subr.mxu0 0.0
    %1747 = vmatpush1.msra.mxu0 0.0
    %1748 = vmatprep.subr.mxu0 0.0
    %1749 = vmatpush1.msra.mxu0 0.0
    %1750 = vmatprep.subr.mxu0 0.0
    %1751 = vmatpush1.msra.mxu0 0.0
    %1752 = vmatprep.subr.mxu0 0.0
    %1753 = vmatpush1.msra.mxu0 0.0
    %1754 = vmatprep.subr.mxu0 0.0
    %1755 = vmatpush1.msra.mxu0 0.0
    %1756 = vmatprep.subr.mxu0 0.0
    %1757 = vmatpush1.msra.mxu0 0.0
    %1758 = vmatprep.subr.mxu0 0.0
    %1759 = vmatpush1.msra.mxu0 0.0
    %1760 = vmatprep.subr.mxu0 0.0
    %1761 = vmatpush1.msra.mxu0 0.0
    %1762 = vmatprep.subr.mxu0 0.0
    %1763 = vmatpush1.msra.mxu0 0.0
    %1764 = vmatprep.subr.mxu0 0.0
    %1765 = vmatpush1.msra.mxu0 0.0
    %1766 = vmatprep.subr.mxu0 0.0
    %1767 = vmatpush1.msra.mxu0 0.0
    %1768 = vmatprep.subr.mxu0 0.0
    %1769 = vmatpush1.msra.mxu0 0.0
    %1770 = vmatprep.mubr.f32.mxu0 0.0
    %1771 = vmatmul.mubr.f32.gmra.mrb[0].mxu0 %v584
    %v1772 = vpop.f32.mrb[0].mxu0
    %v1773 = vadd.f32 %v262, %v1772
    %v1774 = vpop.f32.mrb[0].mxu0
    %1775 = vdwg.mxu0
    %1776 = vmatprep.subr.mxu0 0.0
    %1777 = vmatpush1.msra.mxu0 %v119
    %1778 = vmatprep.subr.mxu0 0.0
    %1779 = vmatpush1.msra.mxu0 %v120
    %1780 = vmatprep.subr.mxu0 0.0
    %1781 = vmatpush1.msra.mxu0 %v121
    %1782 = vmatprep.subr.mxu0 0.0
    %1783 = vmatpush1.msra.mxu0 %v122
    %1784 = vmatprep.subr.mxu0 0.0
    %1785 = vmatpush1.msra.mxu0 0.0
    %1786 = vmatprep.subr.mxu0 0.0
    %1787 = vmatpush1.msra.mxu0 0.0
    %1788 = vmatprep.subr.mxu0 0.0
    %1789 = vmatpush1.msra.mxu0 0.0
    %1790 = vmatprep.subr.mxu0 0.0
    %1791 = vmatpush1.msra.mxu0 0.0
    %1792 = vmatprep.subr.mxu0 0.0
    %1793 = vmatpush1.msra.mxu0 0.0
    %1794 = vmatprep.subr.mxu0 0.0
    %1795 = vmatpush1.msra.mxu0 0.0
    %1796 = vmatprep.subr.mxu0 0.0
    %1797 = vmatpush1.msra.mxu0 0.0
    %1798 = vmatprep.subr.mxu0 0.0
    %1799 = vmatpush1.msra.mxu0 0.0
    %1800 = vmatprep.subr.mxu0 0.0
    %1801 = vmatpush1.msra.mxu0 0.0
    %1802 = vmatprep.subr.mxu0 0.0
    %1803 = vmatpush1.msra.mxu0 0.0
    %1804 = vmatprep.subr.mxu0 0.0
    %1805 = vmatpush1.msra.mxu0 0.0
    %1806 = vmatprep.subr.mxu0 0.0
    %1807 = vmatpush1.msra.mxu0 0.0
    %1808 = vmatprep.subr.mxu0 0.0
    %1809 = vmatpush1.msra.mxu0 0.0
    %1810 = vmatprep.subr.mxu0 0.0
    %1811 = vmatpush1.msra.mxu0 0.0
    %1812 = vmatprep.subr.mxu0 0.0
    %1813 = vmatpush1.msra.mxu0 0.0
    %1814 = vmatprep.subr.mxu0 0.0
    %1815 = vmatpush1.msra.mxu0 0.0
    %1816 = vmatprep.subr.mxu0 0.0
    %1817 = vmatpush1.msra.mxu0 0.0
    %1818 = vmatprep.subr.mxu0 0.0
    %1819 = vmatpush1.msra.mxu0 0.0
    %1820 = vmatprep.subr.mxu0 0.0
    %1821 = vmatpush1.msra.mxu0 0.0
    %1822 = vmatprep.subr.mxu0 0.0
    %1823 = vmatpush1.msra.mxu0 0.0
    %1824 = vmatprep.subr.mxu0 0.0
    %1825 = vmatpush1.msra.mxu0 0.0
    %1826 = vmatprep.subr.mxu0 0.0
    %1827 = vmatpush1.msra.mxu0 0.0
    %1828 = vmatprep.subr.mxu0 0.0
    %1829 = vmatpush1.msra.mxu0 0.0
    %1830 = vmatprep.subr.mxu0 0.0
    %1831 = vmatpush1.msra.mxu0 0.0
    %1832 = vmatprep.subr.mxu0 0.0
    %1833 = vmatpush1.msra.mxu0 0.0
    %1834 = vmatprep.subr.mxu0 0.0
    %1835 = vmatpush1.msra.mxu0 0.0
    %1836 = vmatprep.subr.mxu0 0.0
    %1837 = vmatpush1.msra.mxu0 0.0
    %1838 = vmatprep.subr.mxu0 0.0
    %1839 = vmatpush1.msra.mxu0 0.0
    %1840 = vmatprep.mubr.f32.mxu0 0.0
    %1841 = vmatmul.mubr.f32.gmra.mrb[0].mxu0 %v584
    %v1842 = vpop.f32.mrb[0].mxu0
    %v1843 = vadd.f32 %v266, %v1842
    %v1844 = vpop.f32.mrb[0].mxu0
    %1845 = vdwg.mxu0
    %1846 = vmatprep.subr.mxu0 0.0
    %1847 = vmatpush1.msra.mxu0 %v123
    %1848 = vmatprep.subr.mxu0 0.0
    %1849 = vmatpush1.msra.mxu0 %v124
    %1850 = vmatprep.subr.mxu0 0.0
    %1851 = vmatpush1.msra.mxu0 %v125
    %1852 = vmatprep.subr.mxu0 0.0
    %1853 = vmatpush1.msra.mxu0 %v126
    %1854 = vmatprep.subr.mxu0 0.0
    %1855 = vmatpush1.msra.mxu0 0.0
    %1856 = vmatprep.subr.mxu0 0.0
    %1857 = vmatpush1.msra.mxu0 0.0
    %1858 = vmatprep.subr.mxu0 0.0
    %1859 = vmatpush1.msra.mxu0 0.0
    %1860 = vmatprep.subr.mxu0 0.0
    %1861 = vmatpush1.msra.mxu0 0.0
    %1862 = vmatprep.subr.mxu0 0.0
    %1863 = vmatpush1.msra.mxu0 0.0
    %1864 = vmatprep.subr.mxu0 0.0
    %1865 = vmatpush1.msra.mxu0 0.0
    %1866 = vmatprep.subr.mxu0 0.0
    %1867 = vmatpush1.msra.mxu0 0.0
    %1868 = vmatprep.subr.mxu0 0.0
    %1869 = vmatpush1.msra.mxu0 0.0
    %1870 = vmatprep.subr.mxu0 0.0
    %1871 = vmatpush1.msra.mxu0 0.0
    %1872 = vmatprep.subr.mxu0 0.0
    %1873 = vmatpush1.msra.mxu0 0.0
    %1874 = vmatprep.subr.mxu0 0.0
    %1875 = vmatpush1.msra.mxu0 0.0
    %1876 = vmatprep.subr.mxu0 0.0
    %1877 = vmatpush1.msra.mxu0 0.0
    %1878 = vmatprep.subr.mxu0 0.0
    %1879 = vmatpush1.msra.mxu0 0.0
    %1880 = vmatprep.subr.mxu0 0.0
    %1881 = vmatpush1.msra.mxu0 0.0
    %1882 = vmatprep.subr.mxu0 0.0
    %1883 = vmatpush1.msra.mxu0 0.0
    %1884 = vmatprep.subr.mxu0 0.0
    %1885 = vmatpush1.msra.mxu0 0.0
    %1886 = vmatprep.subr.mxu0 0.0
    %1887 = vmatpush1.msra.mxu0 0.0
    %1888 = vmatprep.subr.mxu0 0.0
    %1889 = vmatpush1.msra.mxu0 0.0
    %1890 = vmatprep.subr.mxu0 0.0
    %1891 = vmatpush1.msra.mxu0 0.0
    %1892 = vmatprep.subr.mxu0 0.0
    %1893 = vmatpush1.msra.mxu0 0.0
    %1894 = vmatprep.subr.mxu0 0.0
    %1895 = vmatpush1.msra.mxu0 0.0
    %1896 = vmatprep.subr.mxu0 0.0
    %1897 = vmatpush1.msra.mxu0 0.0
    %1898 = vmatprep.subr.mxu0 0.0
    %1899 = vmatpush1.msra.mxu0 0.0
    %1900 = vmatprep.subr.mxu0 0.0
    %1901 = vmatpush1.msra.mxu0 0.0
    %1902 = vmatprep.subr.mxu0 0.0
    %1903 = vmatpush1.msra.mxu0 0.0
    %1904 = vmatprep.subr.mxu0 0.0
    %1905 = vmatpush1.msra.mxu0 0.0
    %1906 = vmatprep.subr.mxu0 0.0
    %1907 = vmatpush1.msra.mxu0 0.0
    %1908 = vmatprep.subr.mxu0 0.0
    %1909 = vmatpush1.msra.mxu0 0.0
    %1910 = vmatprep.mubr.f32.mxu0 0.0
    %1911 = vmatmul.mubr.f32.gmra.mrb[0].mxu0 %v584
    %v1912 = vpop.f32.mrb[0].mxu0
    %v1913 = vadd.f32 %v270, %v1912
    %v1914 = vpop.f32.mrb[0].mxu0
    %1915 = vdwg.mxu0
    %1916 = vmatprep.subr.mxu0 0.0
    %1917 = vmatpush1.msra.mxu0 %v127
    %1918 = vmatprep.subr.mxu0 0.0
    %1919 = vmatpush1.msra.mxu0 %v128
    %1920 = vmatprep.subr.mxu0 0.0
    %1921 = vmatpush1.msra.mxu0 %v129
    %1922 = vmatprep.subr.mxu0 0.0
    %1923 = vmatpush1.msra.mxu0 %v130
    %1924 = vmatprep.subr.mxu0 0.0
    %1925 = vmatpush1.msra.mxu0 0.0
    %1926 = vmatprep.subr.mxu0 0.0
    %1927 = vmatpush1.msra.mxu0 0.0
    %1928 = vmatprep.subr.mxu0 0.0
    %1929 = vmatpush1.msra.mxu0 0.0
    %1930 = vmatprep.subr.mxu0 0.0
    %1931 = vmatpush1.msra.mxu0 0.0
    %1932 = vmatprep.subr.mxu0 0.0
    %1933 = vmatpush1.msra.mxu0 0.0
    %1934 = vmatprep.subr.mxu0 0.0
    %1935 = vmatpush1.msra.mxu0 0.0
    %1936 = vmatprep.subr.mxu0 0.0
    %1937 = vmatpush1.msra.mxu0 0.0
    %1938 = vmatprep.subr.mxu0 0.0
    %1939 = vmatpush1.msra.mxu0 0.0
    %1940 = vmatprep.subr.mxu0 0.0
    %1941 = vmatpush1.msra.mxu0 0.0
    %1942 = vmatprep.subr.mxu0 0.0
    %1943 = vmatpush1.msra.mxu0 0.0
    %1944 = vmatprep.subr.mxu0 0.0
    %1945 = vmatpush1.msra.mxu0 0.0
    %1946 = vmatprep.subr.mxu0 0.0
    %1947 = vmatpush1.msra.mxu0 0.0
    %1948 = vmatprep.subr.mxu0 0.0
    %1949 = vmatpush1.msra.mxu0 0.0
    %1950 = vmatprep.subr.mxu0 0.0
    %1951 = vmatpush1.msra.mxu0 0.0
    %1952 = vmatprep.subr.mxu0 0.0
    %1953 = vmatpush1.msra.mxu0 0.0
    %1954 = vmatprep.subr.mxu0 0.0
    %1955 = vmatpush1.msra.mxu0 0.0
    %1956 = vmatprep.subr.mxu0 0.0
    %1957 = vmatpush1.msra.mxu0 0.0
    %1958 = vmatprep.subr.mxu0 0.0
    %1959 = vmatpush1.msra.mxu0 0.0
    %1960 = vmatprep.subr.mxu0 0.0
    %1961 = vmatpush1.msra.mxu0 0.0
    %1962 = vmatprep.subr.mxu0 0.0
    %1963 = vmatpush1.msra.mxu0 0.0
    %1964 = vmatprep.subr.mxu0 0.0
    %1965 = vmatpush1.msra.mxu0 0.0
    %1966 = vmatprep.subr.mxu0 0.0
    %1967 = vmatpush1.msra.mxu0 0.0
    %1968 = vmatprep.subr.mxu0 0.0
    %1969 = vmatpush1.msra.mxu0 0.0
    %1970 = vmatprep.subr.mxu0 0.0
    %1971 = vmatpush1.msra.mxu0 0.0
    %1972 = vmatprep.subr.mxu0 0.0
    %1973 = vmatpush1.msra.mxu0 0.0
    %1974 = vmatprep.subr.mxu0 0.0
    %1975 = vmatpush1.msra.mxu0 0.0
    %1976 = vmatprep.subr.mxu0 0.0
    %1977 = vmatpush1.msra.mxu0 0.0
    %1978 = vmatprep.subr.mxu0 0.0
    %1979 = vmatpush1.msra.mxu0 0.0
    %1980 = vmatprep.mubr.f32.mxu0 0.0
    %1981 = vmatmul.mubr.f32.gmra.mrb[0].mxu0 %v584
    %v1982 = vpop.f32.mrb[0].mxu0
    %v1983 = vadd.f32 %v274, %v1982
    %v1984 = vpop.f32.mrb[0].mxu0
    %1985 = vdwg.mxu0
    %vm1986 = vcmask 64512
    %v1988 = vsel %vm1986, %v370, 0
    %v1991 = vsel %vm1986, %v933, 0
    %1993 = vmatprep.subr.mxu0 0.0
    %1994 = vmatpush1.xpose.msra.mxu0 %v1991
    %1995 = vmatprep.subr.mxu0 0.0
    %1996 = vmatpush1.xpose.msra.mxu0 0.0
    %1997 = vmatprep.subr.mxu0 0.0
    %1998 = vmatpush1.xpose.msra.mxu0 0.0
    %1999 = vmatprep.subr.mxu0 0.0
    %2000 = vmatpush1.xpose.msra.mxu0 0.0
    %2001 = vmatprep.subr.mxu0 0.0
    %2002 = vmatpush1.xpose.msra.mxu0 0.0
    %2003 = vmatprep.subr.mxu0 0.0
    %2004 = vmatpush1.xpose.msra.mxu0 0.0
    %2005 = vmatprep.subr.mxu0 0.0
    %2006 = vmatpush1.xpose.msra.mxu0 0.0
    %2007 = vmatprep.subr.mxu0 0.0
    %2008 = vmatpush1.xpose.msra.mxu0 0.0
    %2009 = vmatprep.subr.mxu0 0.0
    %2010 = vmatpush1.xpose.msra.mxu0 0.0
    %2011 = vmatprep.subr.mxu0 0.0
    %2012 = vmatpush1.xpose.msra.mxu0 0.0
    %2013 = vmatprep.subr.mxu0 0.0
    %2014 = vmatpush1.xpose.msra.mxu0 0.0
    %2015 = vmatprep.subr.mxu0 0.0
    %2016 = vmatpush1.xpose.msra.mxu0 0.0
    %2017 = vmatprep.subr.mxu0 0.0
    %2018 = vmatpush1.xpose.msra.mxu0 0.0
    %2019 = vmatprep.subr.mxu0 0.0
    %2020 = vmatpush1.xpose.msra.mxu0 0.0
    %2021 = vmatprep.subr.mxu0 0.0
    %2022 = vmatpush1.xpose.msra.mxu0 0.0
    %2023 = vmatprep.subr.mxu0 0.0
    %2024 = vmatpush1.xpose.msra.mxu0 0.0
    %2025 = vmatprep.subr.mxu0 0.0
    %2026 = vmatpush1.xpose.msra.mxu0 0.0
    %2027 = vmatprep.subr.mxu0 0.0
    %2028 = vmatpush1.xpose.msra.mxu0 0.0
    %2029 = vmatprep.subr.mxu0 0.0
    %2030 = vmatpush1.xpose.msra.mxu0 0.0
    %2031 = vmatprep.subr.mxu0 0.0
    %2032 = vmatpush1.xpose.msra.mxu0 0.0
    %2033 = vmatprep.subr.mxu0 0.0
    %2034 = vmatpush1.xpose.msra.mxu0 0.0
    %2035 = vmatprep.subr.mxu0 0.0
    %2036 = vmatpush1.xpose.msra.mxu0 0.0
    %2037 = vmatprep.subr.mxu0 0.0
    %2038 = vmatpush1.xpose.msra.mxu0 0.0
    %2039 = vmatprep.subr.mxu0 0.0
    %2040 = vmatpush1.xpose.msra.mxu0 0.0
    %2041 = vmatprep.subr.mxu0 0.0
    %2042 = vmatpush1.xpose.msra.mxu0 0.0
    %2043 = vmatprep.subr.mxu0 0.0
    %2044 = vmatpush1.xpose.msra.mxu0 0.0
    %2045 = vmatprep.subr.mxu0 0.0
    %2046 = vmatpush1.xpose.msra.mxu0 0.0
    %2047 = vmatprep.subr.mxu0 0.0
    %2048 = vmatpush1.xpose.msra.mxu0 0.0
    %2049 = vmatprep.subr.mxu0 0.0
    %2050 = vmatpush1.xpose.msra.mxu0 0.0
    %2051 = vmatprep.subr.mxu0 0.0
    %2052 = vmatpush1.xpose.msra.mxu0 0.0
    %2053 = vmatprep.subr.mxu0 0.0
    %2054 = vmatpush1.xpose.msra.mxu0 0.0
    %2055 = vmatprep.subr.mxu0 0.0
    %2056 = vmatpush1.xpose.msra.mxu0 0.0
    %2057 = vmatprep.mubr.f32.mxu0 0.0
    %2058 = vmatmul.mubr.f32.gmra.mrb[0].mxu0 %v1988
    %v2059 = vpop.f32.mrb[0].mxu0
    %v2060 = vadd.f32 0.0, %v2059
    %v2061 = vpop.f32.mrb[0].mxu0
    %2062 = vdwg.mxu0
    %v2064 = vsel %vm1986, %v440, 0
    %v2067 = vsel %vm1986, %v1003, 0
    %2069 = vmatprep.subr.mxu0 0.0
    %2070 = vmatpush1.xpose.msra.mxu0 %v2067
    %2071 = vmatprep.subr.mxu0 0.0
    %2072 = vmatpush1.xpose.msra.mxu0 0.0
    %2073 = vmatprep.subr.mxu0 0.0
    %2074 = vmatpush1.xpose.msra.mxu0 0.0
    %2075 = vmatprep.subr.mxu0 0.0
    %2076 = vmatpush1.xpose.msra.mxu0 0.0
    %2077 = vmatprep.subr.mxu0 0.0
    %2078 = vmatpush1.xpose.msra.mxu0 0.0
    %2079 = vmatprep.subr.mxu0 0.0
    %2080 = vmatpush1.xpose.msra.mxu0 0.0
    %2081 = vmatprep.subr.mxu0 0.0
    %2082 = vmatpush1.xpose.msra.mxu0 0.0
    %2083 = vmatprep.subr.mxu0 0.0
    %2084 = vmatpush1.xpose.msra.mxu0 0.0
    %2085 = vmatprep.subr.mxu0 0.0
    %2086 = vmatpush1.xpose.msra.mxu0 0.0
    %2087 = vmatprep.subr.mxu0 0.0
    %2088 = vmatpush1.xpose.msra.mxu0 0.0
    %2089 = vmatprep.subr.mxu0 0.0
    %2090 = vmatpush1.xpose.msra.mxu0 0.0
    %2091 = vmatprep.subr.mxu0 0.0
    %2092 = vmatpush1.xpose.msra.mxu0 0.0
    %2093 = vmatprep.subr.mxu0 0.0
    %2094 = vmatpush1.xpose.msra.mxu0 0.0
    %2095 = vmatprep.subr.mxu0 0.0
    %2096 = vmatpush1.xpose.msra.mxu0 0.0
    %2097 = vmatprep.subr.mxu0 0.0
    %2098 = vmatpush1.xpose.msra.mxu0 0.0
    %2099 = vmatprep.subr.mxu0 0.0
    %2100 = vmatpush1.xpose.msra.mxu0 0.0
    %2101 = vmatprep.subr.mxu0 0.0
    %2102 = vmatpush1.xpose.msra.mxu0 0.0
    %2103 = vmatprep.subr.mxu0 0.0
    %2104 = vmatpush1.xpose.msra.mxu0 0.0
    %2105 = vmatprep.subr.mxu0 0.0
    %2106 = vmatpush1.xpose.msra.mxu0 0.0
    %2107 = vmatprep.subr.mxu0 0.0
    %2108 = vmatpush1.xpose.msra.mxu0 0.0
    %2109 = vmatprep.subr.mxu0 0.0
    %2110 = vmatpush1.xpose.msra.mxu0 0.0
    %2111 = vmatprep.subr.mxu0 0.0
    %2112 = vmatpush1.xpose.msra.mxu0 0.0
    %2113 = vmatprep.subr.mxu0 0.0
    %2114 = vmatpush1.xpose.msra.mxu0 0.0
    %2115 = vmatprep.subr.mxu0 0.0
    %2116 = vmatpush1.xpose.msra.mxu0 0.0
    %2117 = vmatprep.subr.mxu0 0.0
    %2118 = vmatpush1.xpose.msra.mxu0 0.0
    %2119 = vmatprep.subr.mxu0 0.0
    %2120 = vmatpush1.xpose.msra.mxu0 0.0
    %2121 = vmatprep.subr.mxu0 0.0
    %2122 = vmatpush1.xpose.msra.mxu0 0.0
    %2123 = vmatprep.subr.mxu0 0.0
    %2124 = vmatpush1.xpose.msra.mxu0 0.0
    %2125 = vmatprep.subr.mxu0 0.0
    %2126 = vmatpush1.xpose.msra.mxu0 0.0
    %2127 = vmatprep.subr.mxu0 0.0
    %2128 = vmatpush1.xpose.msra.mxu0 0.0
    %2129 = vmatprep.subr.mxu0 0.0
    %2130 = vmatpush1.xpose.msra.mxu0 0.0
    %2131 = vmatprep.subr.mxu0 0.0
    %2132 = vmatpush1.xpose.msra.mxu0 0.0
    %2133 = vmatprep.mubr.f32.mxu0 0.0
    %2134 = vmatmul.mubr.f32.gmra.mrb[0].mxu0 %v2064
    %v2135 = vpop.f32.mrb[0].mxu0
    %v2136 = vadd.f32 0.0, %v2135
    %v2137 = vpop.f32.mrb[0].mxu0
    %2138 = vdwg.mxu0
    %v2140 = vsel %vm1986, %v510, 0
    %v2143 = vsel %vm1986, %v1073, 0
    %2145 = vmatprep.subr.mxu0 0.0
    %2146 = vmatpush1.xpose.msra.mxu0 %v2143
    %2147 = vmatprep.subr.mxu0 0.0
    %2148 = vmatpush1.xpose.msra.mxu0 0.0
    %2149 = vmatprep.subr.mxu0 0.0
    %2150 = vmatpush1.xpose.msra.mxu0 0.0
    %2151 = vmatprep.subr.mxu0 0.0
    %2152 = vmatpush1.xpose.msra.mxu0 0.0
    %2153 = vmatprep.subr.mxu0 0.0
    %2154 = vmatpush1.xpose.msra.mxu0 0.0
    %2155 = vmatprep.subr.mxu0 0.0
    %2156 = vmatpush1.xpose.msra.mxu0 0.0
    %2157 = vmatprep.subr.mxu0 0.0
    %2158 = vmatpush1.xpose.msra.mxu0 0.0
    %2159 = vmatprep.subr.mxu0 0.0
    %2160 = vmatpush1.xpose.msra.mxu0 0.0
    %2161 = vmatprep.subr.mxu0 0.0
    %2162 = vmatpush1.xpose.msra.mxu0 0.0
    %2163 = vmatprep.subr.mxu0 0.0
    %2164 = vmatpush1.xpose.msra.mxu0 0.0
    %2165 = vmatprep.subr.mxu0 0.0
    %2166 = vmatpush1.xpose.msra.mxu0 0.0
    %2167 = vmatprep.subr.mxu0 0.0
    %2168 = vmatpush1.xpose.msra.mxu0 0.0
    %2169 = vmatprep.subr.mxu0 0.0
    %2170 = vmatpush1.xpose.msra.mxu0 0.0
    %2171 = vmatprep.subr.mxu0 0.0
    %2172 = vmatpush1.xpose.msra.mxu0 0.0
    %2173 = vmatprep.subr.mxu0 0.0
    %2174 = vmatpush1.xpose.msra.mxu0 0.0
    %2175 = vmatprep.subr.mxu0 0.0
    %2176 = vmatpush1.xpose.msra.mxu0 0.0
    %2177 = vmatprep.subr.mxu0 0.0
    %2178 = vmatpush1.xpose.msra.mxu0 0.0
    %2179 = vmatprep.subr.mxu0 0.0
    %2180 = vmatpush1.xpose.msra.mxu0 0.0
    %2181 = vmatprep.subr.mxu0 0.0
    %2182 = vmatpush1.xpose.msra.mxu0 0.0
    %2183 = vmatprep.subr.mxu0 0.0
    %2184 = vmatpush1.xpose.msra.mxu0 0.0
    %2185 = vmatprep.subr.mxu0 0.0
    %2186 = vmatpush1.xpose.msra.mxu0 0.0
    %2187 = vmatprep.subr.mxu0 0.0
    %2188 = vmatpush1.xpose.msra.mxu0 0.0
    %2189 = vmatprep.subr.mxu0 0.0
    %2190 = vmatpush1.xpose.msra.mxu0 0.0
    %2191 = vmatprep.subr.mxu0 0.0
    %2192 = vmatpush1.xpose.msra.mxu0 0.0
    %2193 = vmatprep.subr.mxu0 0.0
    %2194 = vmatpush1.xpose.msra.mxu0 0.0
    %2195 = vmatprep.subr.mxu0 0.0
    %2196 = vmatpush1.xpose.msra.mxu0 0.0
    %2197 = vmatprep.subr.mxu0 0.0
    %2198 = vmatpush1.xpose.msra.mxu0 0.0
    %2199 = vmatprep.subr.mxu0 0.0
    %2200 = vmatpush1.xpose.msra.mxu0 0.0
    %2201 = vmatprep.subr.mxu0 0.0
    %2202 = vmatpush1.xpose.msra.mxu0 0.0
    %2203 = vmatprep.subr.mxu0 0.0
    %2204 = vmatpush1.xpose.msra.mxu0 0.0
    %2205 = vmatprep.subr.mxu0 0.0
    %2206 = vmatpush1.xpose.msra.mxu0 0.0
    %2207 = vmatprep.subr.mxu0 0.0
    %2208 = vmatpush1.xpose.msra.mxu0 0.0
    %2209 = vmatprep.mubr.f32.mxu0 0.0
    %2210 = vmatmul.mubr.f32.gmra.mrb[0].mxu0 %v2140
    %v2211 = vpop.f32.mrb[0].mxu0
    %v2212 = vadd.f32 0.0, %v2211
    %v2213 = vpop.f32.mrb[0].mxu0
    %2214 = vdwg.mxu0
    %v2216 = vsel %vm1986, %v580, 0
    %v2219 = vsel %vm1986, %v1143, 0
    %2221 = vmatprep.subr.mxu0 0.0
    %2222 = vmatpush1.xpose.msra.mxu0 %v2219
    %2223 = vmatprep.subr.mxu0 0.0
    %2224 = vmatpush1.xpose.msra.mxu0 0.0
    %2225 = vmatprep.subr.mxu0 0.0
    %2226 = vmatpush1.xpose.msra.mxu0 0.0
    %2227 = vmatprep.subr.mxu0 0.0
    %2228 = vmatpush1.xpose.msra.mxu0 0.0
    %2229 = vmatprep.subr.mxu0 0.0
    %2230 = vmatpush1.xpose.msra.mxu0 0.0
    %2231 = vmatprep.subr.mxu0 0.0
    %2232 = vmatpush1.xpose.msra.mxu0 0.0
    %2233 = vmatprep.subr.mxu0 0.0
    %2234 = vmatpush1.xpose.msra.mxu0 0.0
    %2235 = vmatprep.subr.mxu0 0.0
    %2236 = vmatpush1.xpose.msra.mxu0 0.0
    %2237 = vmatprep.subr.mxu0 0.0
    %2238 = vmatpush1.xpose.msra.mxu0 0.0
    %2239 = vmatprep.subr.mxu0 0.0
    %2240 = vmatpush1.xpose.msra.mxu0 0.0
    %2241 = vmatprep.subr.mxu0 0.0
    %2242 = vmatpush1.xpose.msra.mxu0 0.0
    %2243 = vmatprep.subr.mxu0 0.0
    %2244 = vmatpush1.xpose.msra.mxu0 0.0
    %2245 = vmatprep.subr.mxu0 0.0
    %2246 = vmatpush1.xpose.msra.mxu0 0.0
    %2247 = vmatprep.subr.mxu0 0.0
    %2248 = vmatpush1.xpose.msra.mxu0 0.0
    %2249 = vmatprep.subr.mxu0 0.0
    %2250 = vmatpush1.xpose.msra.mxu0 0.0
    %2251 = vmatprep.subr.mxu0 0.0
    %2252 = vmatpush1.xpose.msra.mxu0 0.0
    %2253 = vmatprep.subr.mxu0 0.0
    %2254 = vmatpush1.xpose.msra.mxu0 0.0
    %2255 = vmatprep.subr.mxu0 0.0
    %2256 = vmatpush1.xpose.msra.mxu0 0.0
    %2257 = vmatprep.subr.mxu0 0.0
    %2258 = vmatpush1.xpose.msra.mxu0 0.0
    %2259 = vmatprep.subr.mxu0 0.0
    %2260 = vmatpush1.xpose.msra.mxu0 0.0
    %2261 = vmatprep.subr.mxu0 0.0
    %2262 = vmatpush1.xpose.msra.mxu0 0.0
    %2263 = vmatprep.subr.mxu0 0.0
    %2264 = vmatpush1.xpose.msra.mxu0 0.0
    %2265 = vmatprep.subr.mxu0 0.0
    %2266 = vmatpush1.xpose.msra.mxu0 0.0
    %2267 = vmatprep.subr.mxu0 0.0
    %2268 = vmatpush1.xpose.msra.mxu0 0.0
    %2269 = vmatprep.subr.mxu0 0.0
    %2270 = vmatpush1.xpose.msra.mxu0 0.0
    %2271 = vmatprep.subr.mxu0 0.0
    %2272 = vmatpush1.xpose.msra.mxu0 0.0
    %2273 = vmatprep.subr.mxu0 0.0
    %2274 = vmatpush1.xpose.msra.mxu0 0.0
    %2275 = vmatprep.subr.mxu0 0.0
    %2276 = vmatpush1.xpose.msra.mxu0 0.0
    %2277 = vmatprep.subr.mxu0 0.0
    %2278 = vmatpush1.xpose.msra.mxu0 0.0
    %2279 = vmatprep.subr.mxu0 0.0
    %2280 = vmatpush1.xpose.msra.mxu0 0.0
    %2281 = vmatprep.subr.mxu0 0.0
    %2282 = vmatpush1.xpose.msra.mxu0 0.0
    %2283 = vmatprep.subr.mxu0 0.0
    %2284 = vmatpush1.xpose.msra.mxu0 0.0
    %2285 = vmatprep.mubr.f32.mxu0 0.0
    %2286 = vmatmul.mubr.f32.gmra.mrb[0].mxu0 %v2216
    %v2287 = vpop.f32.mrb[0].mxu0
    %v2288 = vadd.f32 0.0, %v2287
    %v2289 = vpop.f32.mrb[0].mxu0
    %2290 = vdwg.mxu0
    %v2292 = vsel %vm1986, %v653, 0
    %v2295 = vsel %vm1986, %v1213, 0
    %2297 = vmatprep.subr.mxu0 0.0
    %2298 = vmatpush1.xpose.msra.mxu0 %v2295
    %2299 = vmatprep.subr.mxu0 0.0
    %2300 = vmatpush1.xpose.msra.mxu0 0.0
    %2301 = vmatprep.subr.mxu0 0.0
    %2302 = vmatpush1.xpose.msra.mxu0 0.0
    %2303 = vmatprep.subr.mxu0 0.0
    %2304 = vmatpush1.xpose.msra.mxu0 0.0
    %2305 = vmatprep.subr.mxu0 0.0
    %2306 = vmatpush1.xpose.msra.mxu0 0.0
    %2307 = vmatprep.subr.mxu0 0.0
    %2308 = vmatpush1.xpose.msra.mxu0 0.0
    %2309 = vmatprep.subr.mxu0 0.0
    %2310 = vmatpush1.xpose.msra.mxu0 0.0
    %2311 = vmatprep.subr.mxu0 0.0
    %2312 = vmatpush1.xpose.msra.mxu0 0.0
    %2313 = vmatprep.subr.mxu0 0.0
    %2314 = vmatpush1.xpose.msra.mxu0 0.0
    %2315 = vmatprep.subr.mxu0 0.0
    %2316 = vmatpush1.xpose.msra.mxu0 0.0
    %2317 = vmatprep.subr.mxu0 0.0
    %2318 = vmatpush1.xpose.msra.mxu0 0.0
    %2319 = vmatprep.subr.mxu0 0.0
    %2320 = vmatpush1.xpose.msra.mxu0 0.0
    %2321 = vmatprep.subr.mxu0 0.0
    %2322 = vmatpush1.xpose.msra.mxu0 0.0
    %2323 = vmatprep.subr.mxu0 0.0
    %2324 = vmatpush1.xpose.msra.mxu0 0.0
    %2325 = vmatprep.subr.mxu0 0.0
    %2326 = vmatpush1.xpose.msra.mxu0 0.0
    %2327 = vmatprep.subr.mxu0 0.0
    %2328 = vmatpush1.xpose.msra.mxu0 0.0
    %2329 = vmatprep.subr.mxu0 0.0
    %2330 = vmatpush1.xpose.msra.mxu0 0.0
    %2331 = vmatprep.subr.mxu0 0.0
    %2332 = vmatpush1.xpose.msra.mxu0 0.0
    %2333 = vmatprep.subr.mxu0 0.0
    %2334 = vmatpush1.xpose.msra.mxu0 0.0
    %2335 = vmatprep.subr.mxu0 0.0
    %2336 = vmatpush1.xpose.msra.mxu0 0.0
    %2337 = vmatprep.subr.mxu0 0.0
    %2338 = vmatpush1.xpose.msra.mxu0 0.0
    %2339 = vmatprep.subr.mxu0 0.0
    %2340 = vmatpush1.xpose.msra.mxu0 0.0
    %2341 = vmatprep.subr.mxu0 0.0
    %2342 = vmatpush1.xpose.msra.mxu0 0.0
    %2343 = vmatprep.subr.mxu0 0.0
    %2344 = vmatpush1.xpose.msra.mxu0 0.0
    %2345 = vmatprep.subr.mxu0 0.0
    %2346 = vmatpush1.xpose.msra.mxu0 0.0
    %2347 = vmatprep.subr.mxu0 0.0
    %2348 = vmatpush1.xpose.msra.mxu0 0.0
    %2349 = vmatprep.subr.mxu0 0.0
    %2350 = vmatpush1.xpose.msra.mxu0 0.0
    %2351 = vmatprep.subr.mxu0 0.0
    %2352 = vmatpush1.xpose.msra.mxu0 0.0
    %2353 = vmatprep.subr.mxu0 0.0
    %2354 = vmatpush1.xpose.msra.mxu0 0.0
    %2355 = vmatprep.subr.mxu0 0.0
    %2356 = vmatpush1.xpose.msra.mxu0 0.0
    %2357 = vmatprep.subr.mxu0 0.0
    %2358 = vmatpush1.xpose.msra.mxu0 0.0
    %2359 = vmatprep.subr.mxu0 0.0
    %2360 = vmatpush1.xpose.msra.mxu0 0.0
    %2361 = vmatprep.mubr.f32.mxu0 0.0
    %2362 = vmatmul.mubr.f32.gmra.mrb[0].mxu0 %v2292
    %v2363 = vpop.f32.mrb[0].mxu0
    %v2364 = vadd.f32 0.0, %v2363
    %v2365 = vpop.f32.mrb[0].mxu0
    %2366 = vdwg.mxu0
    %v2368 = vsel %vm1986, %v723, 0
    %v2371 = vsel %vm1986, %v1283, 0
    %2373 = vmatprep.subr.mxu0 0.0
    %2374 = vmatpush1.xpose.msra.mxu0 %v2371
    %2375 = vmatprep.subr.mxu0 0.0
    %2376 = vmatpush1.xpose.msra.mxu0 0.0
    %2377 = vmatprep.subr.mxu0 0.0
    %2378 = vmatpush1.xpose.msra.mxu0 0.0
    %2379 = vmatprep.subr.mxu0 0.0
    %2380 = vmatpush1.xpose.msra.mxu0 0.0
    %2381 = vmatprep.subr.mxu0 0.0
    %2382 = vmatpush1.xpose.msra.mxu0 0.0
    %2383 = vmatprep.subr.mxu0 0.0
    %2384 = vmatpush1.xpose.msra.mxu0 0.0
    %2385 = vmatprep.subr.mxu0 0.0
    %2386 = vmatpush1.xpose.msra.mxu0 0.0
    %2387 = vmatprep.subr.mxu0 0.0
    %2388 = vmatpush1.xpose.msra.mxu0 0.0
    %2389 = vmatprep.subr.mxu0 0.0
    %2390 = vmatpush1.xpose.msra.mxu0 0.0
    %2391 = vmatprep.subr.mxu0 0.0
    %2392 = vmatpush1.xpose.msra.mxu0 0.0
    %2393 = vmatprep.subr.mxu0 0.0
    %2394 = vmatpush1.xpose.msra.mxu0 0.0
    %2395 = vmatprep.subr.mxu0 0.0
    %2396 = vmatpush1.xpose.msra.mxu0 0.0
    %2397 = vmatprep.subr.mxu0 0.0
    %2398 = vmatpush1.xpose.msra.mxu0 0.0
    %2399 = vmatprep.subr.mxu0 0.0
    %2400 = vmatpush1.xpose.msra.mxu0 0.0
    %2401 = vmatprep.subr.mxu0 0.0
    %2402 = vmatpush1.xpose.msra.mxu0 0.0
    %2403 = vmatprep.subr.mxu0 0.0
    %2404 = vmatpush1.xpose.msra.mxu0 0.0
    %2405 = vmatprep.subr.mxu0 0.0
    %2406 = vmatpush1.xpose.msra.mxu0 0.0
    %2407 = vmatprep.subr.mxu0 0.0
    %2408 = vmatpush1.xpose.msra.mxu0 0.0
    %2409 = vmatprep.subr.mxu0 0.0
    %2410 = vmatpush1.xpose.msra.mxu0 0.0
    %2411 = vmatprep.subr.mxu0 0.0
    %2412 = vmatpush1.xpose.msra.mxu0 0.0
    %2413 = vmatprep.subr.mxu0 0.0
    %2414 = vmatpush1.xpose.msra.mxu0 0.0
    %2415 = vmatprep.subr.mxu0 0.0
    %2416 = vmatpush1.xpose.msra.mxu0 0.0
    %2417 = vmatprep.subr.mxu0 0.0
    %2418 = vmatpush1.xpose.msra.mxu0 0.0
    %2419 = vmatprep.subr.mxu0 0.0
    %2420 = vmatpush1.xpose.msra.mxu0 0.0
    %2421 = vmatprep.subr.mxu0 0.0
    %2422 = vmatpush1.xpose.msra.mxu0 0.0
    %2423 = vmatprep.subr.mxu0 0.0
    %2424 = vmatpush1.xpose.msra.mxu0 0.0
    %2425 = vmatprep.subr.mxu0 0.0
    %2426 = vmatpush1.xpose.msra.mxu0 0.0
    %2427 = vmatprep.subr.mxu0 0.0
    %2428 = vmatpush1.xpose.msra.mxu0 0.0
    %2429 = vmatprep.subr.mxu0 0.0
    %2430 = vmatpush1.xpose.msra.mxu0 0.0
    %2431 = vmatprep.subr.mxu0 0.0
    %2432 = vmatpush1.xpose.msra.mxu0 0.0
    %2433 = vmatprep.subr.mxu0 0.0
    %2434 = vmatpush1.xpose.msra.mxu0 0.0
    %2435 = vmatprep.subr.mxu0 0.0
    %2436 = vmatpush1.xpose.msra.mxu0 0.0
    %2437 = vmatprep.mubr.f32.mxu0 0.0
    %2438 = vmatmul.mubr.f32.gmra.mrb[0].mxu0 %v2368
    %v2439 = vpop.f32.mrb[0].mxu0
    %v2440 = vadd.f32 0.0, %v2439
    %v2441 = vpop.f32.mrb[0].mxu0
    %2442 = vdwg.mxu0
    %v2444 = vsel %vm1986, %v793, 0
    %v2447 = vsel %vm1986, %v1353, 0
    %2449 = vmatprep.subr.mxu0 0.0
    %2450 = vmatpush1.xpose.msra.mxu0 %v2447
    %2451 = vmatprep.subr.mxu0 0.0
    %2452 = vmatpush1.xpose.msra.mxu0 0.0
    %2453 = vmatprep.subr.mxu0 0.0
    %2454 = vmatpush1.xpose.msra.mxu0 0.0
    %2455 = vmatprep.subr.mxu0 0.0
    %2456 = vmatpush1.xpose.msra.mxu0 0.0
    %2457 = vmatprep.subr.mxu0 0.0
    %2458 = vmatpush1.xpose.msra.mxu0 0.0
    %2459 = vmatprep.subr.mxu0 0.0
    %2460 = vmatpush1.xpose.msra.mxu0 0.0
    %2461 = vmatprep.subr.mxu0 0.0
    %2462 = vmatpush1.xpose.msra.mxu0 0.0
    %2463 = vmatprep.subr.mxu0 0.0
    %2464 = vmatpush1.xpose.msra.mxu0 0.0
    %2465 = vmatprep.subr.mxu0 0.0
    %2466 = vmatpush1.xpose.msra.mxu0 0.0
    %2467 = vmatprep.subr.mxu0 0.0
    %2468 = vmatpush1.xpose.msra.mxu0 0.0
    %2469 = vmatprep.subr.mxu0 0.0
    %2470 = vmatpush1.xpose.msra.mxu0 0.0
    %2471 = vmatprep.subr.mxu0 0.0
    %2472 = vmatpush1.xpose.msra.mxu0 0.0
    %2473 = vmatprep.subr.mxu0 0.0
    %2474 = vmatpush1.xpose.msra.mxu0 0.0
    %2475 = vmatprep.subr.mxu0 0.0
    %2476 = vmatpush1.xpose.msra.mxu0 0.0
    %2477 = vmatprep.subr.mxu0 0.0
    %2478 = vmatpush1.xpose.msra.mxu0 0.0
    %2479 = vmatprep.subr.mxu0 0.0
    %2480 = vmatpush1.xpose.msra.mxu0 0.0
    %2481 = vmatprep.subr.mxu0 0.0
    %2482 = vmatpush1.xpose.msra.mxu0 0.0
    %2483 = vmatprep.subr.mxu0 0.0
    %2484 = vmatpush1.xpose.msra.mxu0 0.0
    %2485 = vmatprep.subr.mxu0 0.0
    %2486 = vmatpush1.xpose.msra.mxu0 0.0
    %2487 = vmatprep.subr.mxu0 0.0
    %2488 = vmatpush1.xpose.msra.mxu0 0.0
    %2489 = vmatprep.subr.mxu0 0.0
    %2490 = vmatpush1.xpose.msra.mxu0 0.0
    %2491 = vmatprep.subr.mxu0 0.0
    %2492 = vmatpush1.xpose.msra.mxu0 0.0
    %2493 = vmatprep.subr.mxu0 0.0
    %2494 = vmatpush1.xpose.msra.mxu0 0.0
    %2495 = vmatprep.subr.mxu0 0.0
    %2496 = vmatpush1.xpose.msra.mxu0 0.0
    %2497 = vmatprep.subr.mxu0 0.0
    %2498 = vmatpush1.xpose.msra.mxu0 0.0
    %2499 = vmatprep.subr.mxu0 0.0
    %2500 = vmatpush1.xpose.msra.mxu0 0.0
    %2501 = vmatprep.subr.mxu0 0.0
    %2502 = vmatpush1.xpose.msra.mxu0 0.0
    %2503 = vmatprep.subr.mxu0 0.0
    %2504 = vmatpush1.xpose.msra.mxu0 0.0
    %2505 = vmatprep.subr.mxu0 0.0
    %2506 = vmatpush1.xpose.msra.mxu0 0.0
    %2507 = vmatprep.subr.mxu0 0.0
    %2508 = vmatpush1.xpose.msra.mxu0 0.0
    %2509 = vmatprep.subr.mxu0 0.0
    %2510 = vmatpush1.xpose.msra.mxu0 0.0
    %2511 = vmatprep.subr.mxu0 0.0
    %2512 = vmatpush1.xpose.msra.mxu0 0.0
    %2513 = vmatprep.mubr.f32.mxu0 0.0
    %2514 = vmatmul.mubr.f32.gmra.mrb[0].mxu0 %v2444
    %v2515 = vpop.f32.mrb[0].mxu0
    %v2516 = vadd.f32 0.0, %v2515
    %v2517 = vpop.f32.mrb[0].mxu0
    %2518 = vdwg.mxu0
    %v2520 = vsel %vm1986, %v863, 0
    %v2523 = vsel %vm1986, %v1423, 0
    %2525 = vmatprep.subr.mxu0 0.0
    %2526 = vmatpush1.xpose.msra.mxu0 %v2523
    %2527 = vmatprep.subr.mxu0 0.0
    %2528 = vmatpush1.xpose.msra.mxu0 0.0
    %2529 = vmatprep.subr.mxu0 0.0
    %2530 = vmatpush1.xpose.msra.mxu0 0.0
    %2531 = vmatprep.subr.mxu0 0.0
    %2532 = vmatpush1.xpose.msra.mxu0 0.0
    %2533 = vmatprep.subr.mxu0 0.0
    %2534 = vmatpush1.xpose.msra.mxu0 0.0
    %2535 = vmatprep.subr.mxu0 0.0
    %2536 = vmatpush1.xpose.msra.mxu0 0.0
    %2537 = vmatprep.subr.mxu0 0.0
    %2538 = vmatpush1.xpose.msra.mxu0 0.0
    %2539 = vmatprep.subr.mxu0 0.0
    %2540 = vmatpush1.xpose.msra.mxu0 0.0
    %2541 = vmatprep.subr.mxu0 0.0
    %2542 = vmatpush1.xpose.msra.mxu0 0.0
    %2543 = vmatprep.subr.mxu0 0.0
    %2544 = vmatpush1.xpose.msra.mxu0 0.0
    %2545 = vmatprep.subr.mxu0 0.0
    %2546 = vmatpush1.xpose.msra.mxu0 0.0
    %2547 = vmatprep.subr.mxu0 0.0
    %2548 = vmatpush1.xpose.msra.mxu0 0.0
    %2549 = vmatprep.subr.mxu0 0.0
    %2550 = vmatpush1.xpose.msra.mxu0 0.0
    %2551 = vmatprep.subr.mxu0 0.0
    %2552 = vmatpush1.xpose.msra.mxu0 0.0
    %2553 = vmatprep.subr.mxu0 0.0
    %2554 = vmatpush1.xpose.msra.mxu0 0.0
    %2555 = vmatprep.subr.mxu0 0.0
    %2556 = vmatpush1.xpose.msra.mxu0 0.0
    %2557 = vmatprep.subr.mxu0 0.0
    %2558 = vmatpush1.xpose.msra.mxu0 0.0
    %2559 = vmatprep.subr.mxu0 0.0
    %2560 = vmatpush1.xpose.msra.mxu0 0.0
    %2561 = vmatprep.subr.mxu0 0.0
    %2562 = vmatpush1.xpose.msra.mxu0 0.0
    %2563 = vmatprep.subr.mxu0 0.0
    %2564 = vmatpush1.xpose.msra.mxu0 0.0
    %2565 = vmatprep.subr.mxu0 0.0
    %2566 = vmatpush1.xpose.msra.mxu0 0.0
    %2567 = vmatprep.subr.mxu0 0.0
    %2568 = vmatpush1.xpose.msra.mxu0 0.0
    %2569 = vmatprep.subr.mxu0 0.0
    %2570 = vmatpush1.xpose.msra.mxu0 0.0
    %2571 = vmatprep.subr.mxu0 0.0
    %2572 = vmatpush1.xpose.msra.mxu0 0.0
    %2573 = vmatprep.subr.mxu0 0.0
    %2574 = vmatpush1.xpose.msra.mxu0 0.0
    %2575 = vmatprep.subr.mxu0 0.0
    %2576 = vmatpush1.xpose.msra.mxu0 0.0
    %2577 = vmatprep.subr.mxu0 0.0
    %2578 = vmatpush1.xpose.msra.mxu0 0.0
    %2579 = vmatprep.subr.mxu0 0.0
    %2580 = vmatpush1.xpose.msra.mxu0 0.0
    %2581 = vmatprep.subr.mxu0 0.0
    %2582 = vmatpush1.xpose.msra.mxu0 0.0
    %2583 = vmatprep.subr.mxu0 0.0
    %2584 = vmatpush1.xpose.msra.mxu0 0.0
    %2585 = vmatprep.subr.mxu0 0.0
    %2586 = vmatpush1.xpose.msra.mxu0 0.0
    %2587 = vmatprep.subr.mxu0 0.0
    %2588 = vmatpush1.xpose.msra.mxu0 0.0
    %2589 = vmatprep.mubr.f32.mxu0 0.0
    %2590 = vmatmul.mubr.f32.gmra.mrb[0].mxu0 %v2520
    %v2591 = vpop.f32.mrb[0].mxu0
    %v2592 = vadd.f32 0.0, %v2591
    %v2593 = vpop.f32.mrb[0].mxu0
    %2594 = vdwg.mxu0
    %v2595 = vmul.f32 %v2060, 0.35355338
    %v2596 = vmul.f32 %v2136, 0.35355338
    %v2597 = vmul.f32 %v2212, 0.35355338
    %v2598 = vmul.f32 %v2288, 0.35355338
    %v2599 = vmul.f32 %v2364, 0.35355338
    %v2600 = vmul.f32 %v2440, 0.35355338
    %v2601 = vmul.f32 %v2516, 0.35355338
    %v2602 = vmul.f32 %v2592, 0.35355338
    %v2603 = vsel %vm1986, %v2595, -inf
    %2604 = vmax.xlane.f32.xlu0 %v2603
    %v2605 = vpop.xlane.xlu0 %2604
    %v2606 = vsel %vm1986, %v2596, -inf
    %2607 = vmax.xlane.f32.xlu0 %v2606
    %v2608 = vpop.xlane.xlu0 %2607
    %v2609 = vsel %vm1986, %v2597, -inf
    %2610 = vmax.xlane.f32.xlu0 %v2609
    %v2611 = vpop.xlane.xlu0 %2610
    %v2612 = vsel %vm1986, %v2598, -inf
    %2613 = vmax.xlane.f32.xlu0 %v2612
    %v2614 = vpop.xlane.xlu0 %2613
    %v2615 = vsel %vm1986, %v2599, -inf
    %2616 = vmax.xlane.f32.xlu0 %v2615
    %v2617 = vpop.xlane.xlu0 %2616
    %v2618 = vsel %vm1986, %v2600, -inf
    %2619 = vmax.xlane.f32.xlu0 %v2618
    %v2620 = vpop.xlane.xlu0 %2619
    %v2621 = vsel %vm1986, %v2601, -inf
    %2622 = vmax.xlane.f32.xlu0 %v2621
    %v2623 = vpop.xlane.xlu0 %2622
    %v2624 = vsel %vm1986, %v2602, -inf
    %2625 = vmax.xlane.f32.xlu0 %v2624
    %v2626 = vpop.xlane.xlu0 %2625
    %v2627 = vsub.f32 %v2595, %v2605
    %v2628 = vsub.f32 %v2596, %v2608
    %v2629 = vsub.f32 %v2597, %v2611
    %v2630 = vsub.f32 %v2598, %v2614
    %v2631 = vsub.f32 %v2599, %v2617
    %v2632 = vsub.f32 %v2600, %v2620
    %v2633 = vsub.f32 %v2601, %v2623
    %v2634 = vsub.f32 %v2602, %v2626
    %v2635 = vmul.f32 %v2627, 1.442695
    %v2636 = vpow.pop %v2635
    %v2637 = vmul.f32 %v2628, 1.442695
    %v2638 = vpow.pop %v2637
    %v2639 = vmul.f32 %v2629, 1.442695
    %v2640 = vpow.pop %v2639
    %v2641 = vmul.f32 %v2630, 1.442695
    %v2642 = vpow.pop %v2641
    %v2643 = vmul.f32 %v2631, 1.442695
    %v2644 = vpow.pop %v2643
    %v2645 = vmul.f32 %v2632, 1.442695
    %v2646 = vpow.pop %v2645
    %v2647 = vmul.f32 %v2633, 1.442695
    %v2648 = vpow.pop %v2647
    %v2649 = vmul.f32 %v2634, 1.442695
    %v2650 = vpow.pop %v2649
    %v2651 = vsel %vm1986, %v2636, 0.0
    %2652 = vadd.xlane.f32.xlu0 %v2651
    %v2653 = vpop.xlane.xlu0 %2652
    %v2654 = vsel %vm1986, %v2638, 0.0
    %2655 = vadd.xlane.f32.xlu0 %v2654
    %v2656 = vpop.xlane.xlu0 %2655
    %v2657 = vsel %vm1986, %v2640, 0.0
    %2658 = vadd.xlane.f32.xlu0 %v2657
    %v2659 = vpop.xlane.xlu0 %2658
    %v2660 = vsel %vm1986, %v2642, 0.0
    %2661 = vadd.xlane.f32.xlu0 %v2660
    %v2662 = vpop.xlane.xlu0 %2661
    %v2663 = vsel %vm1986, %v2644, 0.0
    %2664 = vadd.xlane.f32.xlu0 %v2663
    %v2665 = vpop.xlane.xlu0 %2664
    %v2666 = vsel %vm1986, %v2646, 0.0
    %2667 = vadd.xlane.f32.xlu0 %v2666
    %v2668 = vpop.xlane.xlu0 %2667
    %v2669 = vsel %vm1986, %v2648, 0.0
    %2670 = vadd.xlane.f32.xlu0 %v2669
    %v2671 = vpop.xlane.xlu0 %2670
    %v2672 = vsel %vm1986, %v2650, 0.0
    %2673 = vadd.xlane.f32.xlu0 %v2672
    %v2674 = vpop.xlane.xlu0 %2673
    %v2675 = vrcp.pop %v2653
    %v2676 = vrcp.pop %v2656
    %v2677 = vrcp.pop %v2659
    %v2678 = vrcp.pop %v2662
    %v2679 = vrcp.pop %v2665
    %v2680 = vrcp.pop %v2668
    %v2681 = vrcp.pop %v2671
    %v2682 = vrcp.pop %v2674
    %v2683 = vmul.f32 %v2636, %v2675
    %v2684 = vmul.f32 %v2638, %v2676
    %v2685 = vmul.f32 %v2640, %v2677
    %v2686 = vmul.f32 %v2642, %v2678
    %v2687 = vmul.f32 %v2644, %v2679
    %v2688 = vmul.f32 %v2646, %v2680
    %v2689 = vmul.f32 %v2648, %v2681
    %v2690 = vmul.f32 %v2650, %v2682
    %v2692 = vsel %vm1986, %v2683, 0
    %2694 = vmatprep.subr.mxu0 0.0
    %2695 = vmatpush1.msra.mxu0 %v1493
    %2696 = vmatprep.subr.mxu0 0.0
    %2697 = vmatpush1.msra.mxu0 0.0
    %2698 = vmatprep.subr.mxu0 0.0
    %2699 = vmatpush1.msra.mxu0 0.0
    %2700 = vmatprep.subr.mxu0 0.0
    %2701 = vmatpush1.msra.mxu0 0.0
    %2702 = vmatprep.subr.mxu0 0.0
    %2703 = vmatpush1.msra.mxu0 0.0
    %2704 = vmatprep.subr.mxu0 0.0
    %2705 = vmatpush1.msra.mxu0 0.0
    %2706 = vmatprep.subr.mxu0 0.0
    %2707 = vmatpush1.msra.mxu0 0.0
    %2708 = vmatprep.subr.mxu0 0.0
    %2709 = vmatpush1.msra.mxu0 0.0
    %2710 = vmatprep.subr.mxu0 0.0
    %2711 = vmatpush1.msra.mxu0 0.0
    %2712 = vmatprep.subr.mxu0 0.0
    %2713 = vmatpush1.msra.mxu0 0.0
    %2714 = vmatprep.subr.mxu0 0.0
    %2715 = vmatpush1.msra.mxu0 0.0
    %2716 = vmatprep.subr.mxu0 0.0
    %2717 = vmatpush1.msra.mxu0 0.0
    %2718 = vmatprep.subr.mxu0 0.0
    %2719 = vmatpush1.msra.mxu0 0.0
    %2720 = vmatprep.subr.mxu0 0.0
    %2721 = vmatpush1.msra.mxu0 0.0
    %2722 = vmatprep.subr.mxu0 0.0
    %2723 = vmatpush1.msra.mxu0 0.0
    %2724 = vmatprep.subr.mxu0 0.0
    %2725 = vmatpush1.msra.mxu0 0.0
    %2726 = vmatprep.subr.mxu0 0.0
    %2727 = vmatpush1.msra.mxu0 0.0
    %2728 = vmatprep.subr.mxu0 0.0
    %2729 = vmatpush1.msra.mxu0 0.0
    %2730 = vmatprep.subr.mxu0 0.0
    %2731 = vmatpush1.msra.mxu0 0.0
    %2732 = vmatprep.subr.mxu0 0.0
    %2733 = vmatpush1.msra.mxu0 0.0
    %2734 = vmatprep.subr.mxu0 0.0
    %2735 = vmatpush1.msra.mxu0 0.0
    %2736 = vmatprep.subr.mxu0 0.0
    %2737 = vmatpush1.msra.mxu0 0.0
    %2738 = vmatprep.subr.mxu0 0.0
    %2739 = vmatpush1.msra.mxu0 0.0
    %2740 = vmatprep.subr.mxu0 0.0
    %2741 = vmatpush1.msra.mxu0 0.0
    %2742 = vmatprep.subr.mxu0 0.0
    %2743 = vmatpush1.msra.mxu0 0.0
    %2744 = vmatprep.subr.mxu0 0.0
    %2745 = vmatpush1.msra.mxu0 0.0
    %2746 = vmatprep.subr.mxu0 0.0
    %2747 = vmatpush1.msra.mxu0 0.0
    %2748 = vmatprep.subr.mxu0 0.0
    %2749 = vmatpush1.msra.mxu0 0.0
    %2750 = vmatprep.subr.mxu0 0.0
    %2751 = vmatpush1.msra.mxu0 0.0
    %2752 = vmatprep.subr.mxu0 0.0
    %2753 = vmatpush1.msra.mxu0 0.0
    %2754 = vmatprep.subr.mxu0 0.0
    %2755 = vmatpush1.msra.mxu0 0.0
    %2756 = vmatprep.subr.mxu0 0.0
    %2757 = vmatpush1.msra.mxu0 0.0
    %2758 = vmatprep.mubr.f32.mxu0 0.0
    %2759 = vmatmul.mubr.f32.gmra.mrb[0].mxu0 %v2692
    %v2760 = vpop.f32.mrb[0].mxu0
    %v2761 = vadd.f32 0.0, %v2760
    %v2762 = vpop.f32.mrb[0].mxu0
    %2763 = vdwg.mxu0
    %v2765 = vsel %vm1986, %v2684, 0
    %2767 = vmatprep.subr.mxu0 0.0
    %2768 = vmatpush1.msra.mxu0 %v1563
    %2769 = vmatprep.subr.mxu0 0.0
    %2770 = vmatpush1.msra.mxu0 0.0
    %2771 = vmatprep.subr.mxu0 0.0
    %2772 = vmatpush1.msra.mxu0 0.0
    %2773 = vmatprep.subr.mxu0 0.0
    %2774 = vmatpush1.msra.mxu0 0.0
    %2775 = vmatprep.subr.mxu0 0.0
    %2776 = vmatpush1.msra.mxu0 0.0
    %2777 = vmatprep.subr.mxu0 0.0
    %2778 = vmatpush1.msra.mxu0 0.0
    %2779 = vmatprep.subr.mxu0 0.0
    %2780 = vmatpush1.msra.mxu0 0.0
    %2781 = vmatprep.subr.mxu0 0.0
    %2782 = vmatpush1.msra.mxu0 0.0
    %2783 = vmatprep.subr.mxu0 0.0
    %2784 = vmatpush1.msra.mxu0 0.0
    %2785 = vmatprep.subr.mxu0 0.0
    %2786 = vmatpush1.msra.mxu0 0.0
    %2787 = vmatprep.subr.mxu0 0.0
    %2788 = vmatpush1.msra.mxu0 0.0
    %2789 = vmatprep.subr.mxu0 0.0
    %2790 = vmatpush1.msra.mxu0 0.0
    %2791 = vmatprep.subr.mxu0 0.0
    %2792 = vmatpush1.msra.mxu0 0.0
    %2793 = vmatprep.subr.mxu0 0.0
    %2794 = vmatpush1.msra.mxu0 0.0
    %2795 = vmatprep.subr.mxu0 0.0
    %2796 = vmatpush1.msra.mxu0 0.0
    %2797 = vmatprep.subr.mxu0 0.0
    %2798 = vmatpush1.msra.mxu0 0.0
    %2799 = vmatprep.subr.mxu0 0.0
    %2800 = vmatpush1.msra.mxu0 0.0
    %2801 = vmatprep.subr.mxu0 0.0
    %2802 = vmatpush1.msra.mxu0 0.0
    %2803 = vmatprep.subr.mxu0 0.0
    %2804 = vmatpush1.msra.mxu0 0.0
    %2805 = vmatprep.subr.mxu0 0.0
    %2806 = vmatpush1.msra.mxu0 0.0
    %2807 = vmatprep.subr.mxu0 0.0
    %2808 = vmatpush1.msra.mxu0 0.0
    %2809 = vmatprep.subr.mxu0 0.0
    %2810 = vmatpush1.msra.mxu0 0.0
    %2811 = vmatprep.subr.mxu0 0.0
    %2812 = vmatpush1.msra.mxu0 0.0
    %2813 = vmatprep.subr.mxu0 0.0
    %2814 = vmatpush1.msra.mxu0 0.0
    %2815 = vmatprep.subr.mxu0 0.0
    %2816 = vmatpush1.msra.mxu0 0.0
    %2817 = vmatprep.subr.mxu0 0.0
    %2818 = vmatpush1.msra.mxu0 0.0
    %2819 = vmatprep.subr.mxu0 0.0
    %2820 = vmatpush1.msra.mxu0 0.0
    %2821 = vmatprep.subr.mxu0 0.0
    %2822 = vmatpush1.msra.mxu0 0.0
    %2823 = vmatprep.subr.mxu0 0.0
    %2824 = vmatpush1.msra.mxu0 0.0
    %2825 = vmatprep.subr.mxu0 0.0
    %2826 = vmatpush1.msra.mxu0 0.0
    %2827 = vmatprep.subr.mxu0 0.0
    %2828 = vmatpush1.msra.mxu0 0.0
    %2829 = vmatprep.subr.mxu0 0.0
    %2830 = vmatpush1.msra.mxu0 0.0
    %2831 = vmatprep.mubr.f32.mxu0 0.0
    %2832 = vmatmul.mubr.f32.gmra.mrb[0].mxu0 %v2765
    %v2833 = vpop.f32.mrb[0].mxu0
    %v2834 = vadd.f32 0.0, %v2833
    %v2835 = vpop.f32.mrb[0].mxu0
    %2836 = vdwg.mxu0
    %v2838 = vsel %vm1986, %v2685, 0
    %2840 = vmatprep.subr.mxu0 0.0
    %2841 = vmatpush1.msra.mxu0 %v1633
    %2842 = vmatprep.subr.mxu0 0.0
    %2843 = vmatpush1.msra.mxu0 0.0
    %2844 = vmatprep.subr.mxu0 0.0
    %2845 = vmatpush1.msra.mxu0 0.0
    %2846 = vmatprep.subr.mxu0 0.0
    %2847 = vmatpush1.msra.mxu0 0.0
    %2848 = vmatprep.subr.mxu0 0.0
    %2849 = vmatpush1.msra.mxu0 0.0
    %2850 = vmatprep.subr.mxu0 0.0
    %2851 = vmatpush1.msra.mxu0 0.0
    %2852 = vmatprep.subr.mxu0 0.0
    %2853 = vmatpush1.msra.mxu0 0.0
    %2854 = vmatprep.subr.mxu0 0.0
    %2855 = vmatpush1.msra.mxu0 0.0
    %2856 = vmatprep.subr.mxu0 0.0
    %2857 = vmatpush1.msra.mxu0 0.0
    %2858 = vmatprep.subr.mxu0 0.0
    %2859 = vmatpush1.msra.mxu0 0.0
    %2860 = vmatprep.subr.mxu0 0.0
    %2861 = vmatpush1.msra.mxu0 0.0
    %2862 = vmatprep.subr.mxu0 0.0
    %2863 = vmatpush1.msra.mxu0 0.0
    %2864 = vmatprep.subr.mxu0 0.0
    %2865 = vmatpush1.msra.mxu0 0.0
    %2866 = vmatprep.subr.mxu0 0.0
    %2867 = vmatpush1.msra.mxu0 0.0
    %2868 = vmatprep.subr.mxu0 0.0
    %2869 = vmatpush1.msra.mxu0 0.0
    %2870 = vmatprep.subr.mxu0 0.0
    %2871 = vmatpush1.msra.mxu0 0.0
    %2872 = vmatprep.subr.mxu0 0.0
    %2873 = vmatpush1.msra.mxu0 0.0
    %2874 = vmatprep.subr.mxu0 0.0
    %2875 = vmatpush1.msra.mxu0 0.0
    %2876 = vmatprep.subr.mxu0 0.0
    %2877 = vmatpush1.msra.mxu0 0.0
    %2878 = vmatprep.subr.mxu0 0.0
    %2879 = vmatpush1.msra.mxu0 0.0
    %2880 = vmatprep.subr.mxu0 0.0
    %2881 = vmatpush1.msra.mxu0 0.0
    %2882 = vmatprep.subr.mxu0 0.0
    %2883 = vmatpush1.msra.mxu0 0.0
    %2884 = vmatprep.subr.mxu0 0.0
    %2885 = vmatpush1.msra.mxu0 0.0
    %2886 = vmatprep.subr.mxu0 0.0
    %2887 = vmatpush1.msra.mxu0 0.0
    %2888 = vmatprep.subr.mxu0 0.0
    %2889 = vmatpush1.msra.mxu0 0.0
    %2890 = vmatprep.subr.mxu0 0.0
    %2891 = vmatpush1.msra.mxu0 0.0
    %2892 = vmatprep.subr.mxu0 0.0
    %2893 = vmatpush1.msra.mxu0 0.0
    %2894 = vmatprep.subr.mxu0 0.0
    %2895 = vmatpush1.msra.mxu0 0.0
    %2896 = vmatprep.subr.mxu0 0.0
    %2897 = vmatpush1.msra.mxu0 0.0
    %2898 = vmatprep.subr.mxu0 0.0
    %2899 = vmatpush1.msra.mxu0 0.0
    %2900 = vmatprep.subr.mxu0 0.0
    %2901 = vmatpush1.msra.mxu0 0.0
    %2902 = vmatprep.subr.mxu0 0.0
    %2903 = vmatpush1.msra.mxu0 0.0
    %2904 = vmatprep.mubr.f32.mxu0 0.0
    %2905 = vmatmul.mubr.f32.gmra.mrb[0].mxu0 %v2838
    %v2906 = vpop.f32.mrb[0].mxu0
    %v2907 = vadd.f32 0.0, %v2906
    %v2908 = vpop.f32.mrb[0].mxu0
    %2909 = vdwg.mxu0
    %v2911 = vsel %vm1986, %v2686, 0
    %2913 = vmatprep.subr.mxu0 0.0
    %2914 = vmatpush1.msra.mxu0 %v1703
    %2915 = vmatprep.subr.mxu0 0.0
    %2916 = vmatpush1.msra.mxu0 0.0
    %2917 = vmatprep.subr.mxu0 0.0
    %2918 = vmatpush1.msra.mxu0 0.0
    %2919 = vmatprep.subr.mxu0 0.0
    %2920 = vmatpush1.msra.mxu0 0.0
    %2921 = vmatprep.subr.mxu0 0.0
    %2922 = vmatpush1.msra.mxu0 0.0
    %2923 = vmatprep.subr.mxu0 0.0
    %2924 = vmatpush1.msra.mxu0 0.0
    %2925 = vmatprep.subr.mxu0 0.0
    %2926 = vmatpush1.msra.mxu0 0.0
    %2927 = vmatprep.subr.mxu0 0.0
    %2928 = vmatpush1.msra.mxu0 0.0
    %2929 = vmatprep.subr.mxu0 0.0
    %2930 = vmatpush1.msra.mxu0 0.0
    %2931 = vmatprep.subr.mxu0 0.0
    %2932 = vmatpush1.msra.mxu0 0.0
    %2933 = vmatprep.subr.mxu0 0.0
    %2934 = vmatpush1.msra.mxu0 0.0
    %2935 = vmatprep.subr.mxu0 0.0
    %2936 = vmatpush1.msra.mxu0 0.0
    %2937 = vmatprep.subr.mxu0 0.0
    %2938 = vmatpush1.msra.mxu0 0.0
    %2939 = vmatprep.subr.mxu0 0.0
    %2940 = vmatpush1.msra.mxu0 0.0
    %2941 = vmatprep.subr.mxu0 0.0
    %2942 = vmatpush1.msra.mxu0 0.0
    %2943 = vmatprep.subr.mxu0 0.0
    %2944 = vmatpush1.msra.mxu0 0.0
    %2945 = vmatprep.subr.mxu0 0.0
    %2946 = vmatpush1.msra.mxu0 0.0
    %2947 = vmatprep.subr.mxu0 0.0
    %2948 = vmatpush1.msra.mxu0 0.0
    %2949 = vmatprep.subr.mxu0 0.0
    %2950 = vmatpush1.msra.mxu0 0.0
    %2951 = vmatprep.subr.mxu0 0.0
    %2952 = vmatpush1.msra.mxu0 0.0
    %2953 = vmatprep.subr.mxu0 0.0
    %2954 = vmatpush1.msra.mxu0 0.0
    %2955 = vmatprep.subr.mxu0 0.0
    %2956 = vmatpush1.msra.mxu0 0.0
    %2957 = vmatprep.subr.mxu0 0.0
    %2958 = vmatpush1.msra.mxu0 0.0
    %2959 = vmatprep.subr.mxu0 0.0
    %2960 = vmatpush1.msra.mxu0 0.0
    %2961 = vmatprep.subr.mxu0 0.0
    %2962 = vmatpush1.msra.mxu0 0.0
    %2963 = vmatprep.subr.mxu0 0.0
    %2964 = vmatpush1.msra.mxu0 0.0
    %2965 = vmatprep.subr.mxu0 0.0
    %2966 = vmatpush1.msra.mxu0 0.0
    %2967 = vmatprep.subr.mxu0 0.0
    %2968 = vmatpush1.msra.mxu0 0.0
    %2969 = vmatprep.subr.mxu0 0.0
    %2970 = vmatpush1.msra.mxu0 0.0
    %2971 = vmatprep.subr.mxu0 0.0
    %2972 = vmatpush1.msra.mxu0 0.0
    %2973 = vmatprep.subr.mxu0 0.0
    %2974 = vmatpush1.msra.mxu0 0.0
    %2975 = vmatprep.subr.mxu0 0.0
    %2976 = vmatpush1.msra.mxu0 0.0
    %2977 = vmatprep.mubr.f32.mxu0 0.0
    %2978 = vmatmul.mubr.f32.gmra.mrb[0].mxu0 %v2911
    %v2979 = vpop.f32.mrb[0].mxu0
    %v2980 = vadd.f32 0.0, %v2979
    %v2981 = vpop.f32.mrb[0].mxu0
    %2982 = vdwg.mxu0
    %v2984 = vsel %vm1986, %v2687, 0
    %2986 = vmatprep.subr.mxu0 0.0
    %2987 = vmatpush1.msra.mxu0 %v1773
    %2988 = vmatprep.subr.mxu0 0.0
    %2989 = vmatpush1.msra.mxu0 0.0
    %2990 = vmatprep.subr.mxu0 0.0
    %2991 = vmatpush1.msra.mxu0 0.0
    %2992 = vmatprep.subr.mxu0 0.0
    %2993 = vmatpush1.msra.mxu0 0.0
    %2994 = vmatprep.subr.mxu0 0.0
    %2995 = vmatpush1.msra.mxu0 0.0
    %2996 = vmatprep.subr.mxu0 0.0
    %2997 = vmatpush1.msra.mxu0 0.0
    %2998 = vmatprep.subr.mxu0 0.0
    %2999 = vmatpush1.msra.mxu0 0.0
    %3000 = vmatprep.subr.mxu0 0.0
    %3001 = vmatpush1.msra.mxu0 0.0
    %3002 = vmatprep.subr.mxu0 0.0
    %3003 = vmatpush1.msra.mxu0 0.0
    %3004 = vmatprep.subr.mxu0 0.0
    %3005 = vmatpush1.msra.mxu0 0.0
    %3006 = vmatprep.subr.mxu0 0.0
    %3007 = vmatpush1.msra.mxu0 0.0
    %3008 = vmatprep.subr.mxu0 0.0
    %3009 = vmatpush1.msra.mxu0 0.0
    %3010 = vmatprep.subr.mxu0 0.0
    %3011 = vmatpush1.msra.mxu0 0.0
    %3012 = vmatprep.subr.mxu0 0.0
    %3013 = vmatpush1.msra.mxu0 0.0
    %3014 = vmatprep.subr.mxu0 0.0
    %3015 = vmatpush1.msra.mxu0 0.0
    %3016 = vmatprep.subr.mxu0 0.0
    %3017 = vmatpush1.msra.mxu0 0.0
    %3018 = vmatprep.subr.mxu0 0.0
    %3019 = vmatpush1.msra.mxu0 0.0
    %3020 = vmatprep.subr.mxu0 0.0
    %3021 = vmatpush1.msra.mxu0 0.0
    %3022 = vmatprep.subr.mxu0 0.0
    %3023 = vmatpush1.msra.mxu0 0.0
    %3024 = vmatprep.subr.mxu0 0.0
    %3025 = vmatpush1.msra.mxu0 0.0
    %3026 = vmatprep.subr.mxu0 0.0
    %3027 = vmatpush1.msra.mxu0 0.0
    %3028 = vmatprep.subr.mxu0 0.0
    %3029 = vmatpush1.msra.mxu0 0.0
    %3030 = vmatprep.subr.mxu0 0.0
    %3031 = vmatpush1.msra.mxu0 0.0
    %3032 = vmatprep.subr.mxu0 0.0
    %3033 = vmatpush1.msra.mxu0 0.0
    %3034 = vmatprep.subr.mxu0 0.0
    %3035 = vmatpush1.msra.mxu0 0.0
    %3036 = vmatprep.subr.mxu0 0.0
    %3037 = vmatpush1.msra.mxu0 0.0
    %3038 = vmatprep.subr.mxu0 0.0
    %3039 = vmatpush1.msra.mxu0 0.0
    %3040 = vmatprep.subr.mxu0 0.0
    %3041 = vmatpush1.msra.mxu0 0.0
    %3042 = vmatprep.subr.mxu0 0.0
    %3043 = vmatpush1.msra.mxu0 0.0
    %3044 = vmatprep.subr.mxu0 0.0
    %3045 = vmatpush1.msra.mxu0 0.0
    %3046 = vmatprep.subr.mxu0 0.0
    %3047 = vmatpush1.msra.mxu0 0.0
    %3048 = vmatprep.subr.mxu0 0.0
    %3049 = vmatpush1.msra.mxu0 0.0
    %3050 = vmatprep.mubr.f32.mxu0 0.0
    %3051 = vmatmul.mubr.f32.gmra.mrb[0].mxu0 %v2984
    %v3052 = vpop.f32.mrb[0].mxu0
    %v3053 = vadd.f32 0.0, %v3052
    %v3054 = vpop.f32.mrb[0].mxu0
    %3055 = vdwg.mxu0
    %v3057 = vsel %vm1986, %v2688, 0
    %3059 = vmatprep.subr.mxu0 0.0
    %3060 = vmatpush1.msra.mxu0 %v1843
    %3061 = vmatprep.subr.mxu0 0.0
    %3062 = vmatpush1.msra.mxu0 0.0
    %3063 = vmatprep.subr.mxu0 0.0
    %3064 = vmatpush1.msra.mxu0 0.0
    %3065 = vmatprep.subr.mxu0 0.0
    %3066 = vmatpush1.msra.mxu0 0.0
    %3067 = vmatprep.subr.mxu0 0.0
    %3068 = vmatpush1.msra.mxu0 0.0
    %3069 = vmatprep.subr.mxu0 0.0
    %3070 = vmatpush1.msra.mxu0 0.0
    %3071 = vmatprep.subr.mxu0 0.0
    %3072 = vmatpush1.msra.mxu0 0.0
    %3073 = vmatprep.subr.mxu0 0.0
    %3074 = vmatpush1.msra.mxu0 0.0
    %3075 = vmatprep.subr.mxu0 0.0
    %3076 = vmatpush1.msra.mxu0 0.0
    %3077 = vmatprep.subr.mxu0 0.0
    %3078 = vmatpush1.msra.mxu0 0.0
    %3079 = vmatprep.subr.mxu0 0.0
    %3080 = vmatpush1.msra.mxu0 0.0
    %3081 = vmatprep.subr.mxu0 0.0
    %3082 = vmatpush1.msra.mxu0 0.0
    %3083 = vmatprep.subr.mxu0 0.0
    %3084 = vmatpush1.msra.mxu0 0.0
    %3085 = vmatprep.subr.mxu0 0.0
    %3086 = vmatpush1.msra.mxu0 0.0
    %3087 = vmatprep.subr.mxu0 0.0
    %3088 = vmatpush1.msra.mxu0 0.0
    %3089 = vmatprep.subr.mxu0 0.0
    %3090 = vmatpush1.msra.mxu0 0.0
    %3091 = vmatprep.subr.mxu0 0.0
    %3092 = vmatpush1.msra.mxu0 0.0
    %3093 = vmatprep.subr.mxu0 0.0
    %3094 = vmatpush1.msra.mxu0 0.0
    %3095 = vmatprep.subr.mxu0 0.0
    %3096 = vmatpush1.msra.mxu0 0.0
    %3097 = vmatprep.subr.mxu0 0.0
    %3098 = vmatpush1.msra.mxu0 0.0
    %3099 = vmatprep.subr.mxu0 0.0
    %3100 = vmatpush1.msra.mxu0 0.0
    %3101 = vmatprep.subr.mxu0 0.0
    %3102 = vmatpush1.msra.mxu0 0.0
    %3103 = vmatprep.subr.mxu0 0.0
    %3104 = vmatpush1.msra.mxu0 0.0
    %3105 = vmatprep.subr.mxu0 0.0
    %3106 = vmatpush1.msra.mxu0 0.0
    %3107 = vmatprep.subr.mxu0 0.0
    %3108 = vmatpush1.msra.mxu0 0.0
    %3109 = vmatprep.subr.mxu0 0.0
    %3110 = vmatpush1.msra.mxu0 0.0
    %3111 = vmatprep.subr.mxu0 0.0
    %3112 = vmatpush1.msra.mxu0 0.0
    %3113 = vmatprep.subr.mxu0 0.0
    %3114 = vmatpush1.msra.mxu0 0.0
    %3115 = vmatprep.subr.mxu0 0.0
    %3116 = vmatpush1.msra.mxu0 0.0
    %3117 = vmatprep.subr.mxu0 0.0
    %3118 = vmatpush1.msra.mxu0 0.0
    %3119 = vmatprep.subr.mxu0 0.0
    %3120 = vmatpush1.msra.mxu0 0.0
    %3121 = vmatprep.subr.mxu0 0.0
    %3122 = vmatpush1.msra.mxu0 0.0
    %3123 = vmatprep.mubr.f32.mxu0 0.0
    %3124 = vmatmul.mubr.f32.gmra.mrb[0].mxu0 %v3057
    %v3125 = vpop.f32.mrb[0].mxu0
    %v3126 = vadd.f32 0.0, %v3125
    %v3127 = vpop.f32.mrb[0].mxu0
    %3128 = vdwg.mxu0
    %v3130 = vsel %vm1986, %v2689, 0
    %3132 = vmatprep.subr.mxu0 0.0
    %3133 = vmatpush1.msra.mxu0 %v1913
    %3134 = vmatprep.subr.mxu0 0.0
    %3135 = vmatpush1.msra.mxu0 0.0
    %3136 = vmatprep.subr.mxu0 0.0
    %3137 = vmatpush1.msra.mxu0 0.0
    %3138 = vmatprep.subr.mxu0 0.0
    %3139 = vmatpush1.msra.mxu0 0.0
    %3140 = vmatprep.subr.mxu0 0.0
    %3141 = vmatpush1.msra.mxu0 0.0
    %3142 = vmatprep.subr.mxu0 0.0
    %3143 = vmatpush1.msra.mxu0 0.0
    %3144 = vmatprep.subr.mxu0 0.0
    %3145 = vmatpush1.msra.mxu0 0.0
    %3146 = vmatprep.subr.mxu0 0.0
    %3147 = vmatpush1.msra.mxu0 0.0
    %3148 = vmatprep.subr.mxu0 0.0
    %3149 = vmatpush1.msra.mxu0 0.0
    %3150 = vmatprep.subr.mxu0 0.0
    %3151 = vmatpush1.msra.mxu0 0.0
    %3152 = vmatprep.subr.mxu0 0.0
    %3153 = vmatpush1.msra.mxu0 0.0
    %3154 = vmatprep.subr.mxu0 0.0
    %3155 = vmatpush1.msra.mxu0 0.0
    %3156 = vmatprep.subr.mxu0 0.0
    %3157 = vmatpush1.msra.mxu0 0.0
    %3158 = vmatprep.subr.mxu0 0.0
    %3159 = vmatpush1.msra.mxu0 0.0
    %3160 = vmatprep.subr.mxu0 0.0
    %3161 = vmatpush1.msra.mxu0 0.0
    %3162 = vmatprep.subr.mxu0 0.0
    %3163 = vmatpush1.msra.mxu0 0.0
    %3164 = vmatprep.subr.mxu0 0.0
    %3165 = vmatpush1.msra.mxu0 0.0
    %3166 = vmatprep.subr.mxu0 0.0
    %3167 = vmatpush1.msra.mxu0 0.0
    %3168 = vmatprep.subr.mxu0 0.0
    %3169 = vmatpush1.msra.mxu0 0.0
    %3170 = vmatprep.subr.mxu0 0.0
    %3171 = vmatpush1.msra.mxu0 0.0
    %3172 = vmatprep.subr.mxu0 0.0
    %3173 = vmatpush1.msra.mxu0 0.0
    %3174 = vmatprep.subr.mxu0 0.0
    %3175 = vmatpush1.msra.mxu0 0.0
    %3176 = vmatprep.subr.mxu0 0.0
    %3177 = vmatpush1.msra.mxu0 0.0
    %3178 = vmatprep.subr.mxu0 0.0
    %3179 = vmatpush1.msra.mxu0 0.0
    %3180 = vmatprep.subr.mxu0 0.0
    %3181 = vmatpush1.msra.mxu0 0.0
    %3182 = vmatprep.subr.mxu0 0.0
    %3183 = vmatpush1.msra.mxu0 0.0
    %3184 = vmatprep.subr.mxu0 0.0
    %3185 = vmatpush1.msra.mxu0 0.0
    %3186 = vmatprep.subr.mxu0 0.0
    %3187 = vmatpush1.msra.mxu0 0.0
    %3188 = vmatprep.subr.mxu0 0.0
    %3189 = vmatpush1.msra.mxu0 0.0
    %3190 = vmatprep.subr.mxu0 0.0
    %3191 = vmatpush1.msra.mxu0 0.0
    %3192 = vmatprep.subr.mxu0 0.0
    %3193 = vmatpush1.msra.mxu0 0.0
    %3194 = vmatprep.subr.mxu0 0.0
    %3195 = vmatpush1.msra.mxu0 0.0
    %3196 = vmatprep.mubr.f32.mxu0 0.0
    %3197 = vmatmul.mubr.f32.gmra.mrb[0].mxu0 %v3130
    %v3198 = vpop.f32.mrb[0].mxu0
    %v3199 = vadd.f32 0.0, %v3198
    %v3200 = vpop.f32.mrb[0].mxu0
    %3201 = vdwg.mxu0
    %v3203 = vsel %vm1986, %v2690, 0
    %3205 = vmatprep.subr.mxu0 0.0
    %3206 = vmatpush1.msra.mxu0 %v1983
    %3207 = vmatprep.subr.mxu0 0.0
    %3208 = vmatpush1.msra.mxu0 0.0
    %3209 = vmatprep.subr.mxu0 0.0
    %3210 = vmatpush1.msra.mxu0 0.0
    %3211 = vmatprep.subr.mxu0 0.0
    %3212 = vmatpush1.msra.mxu0 0.0
    %3213 = vmatprep.subr.mxu0 0.0
    %3214 = vmatpush1.msra.mxu0 0.0
    %3215 = vmatprep.subr.mxu0 0.0
    %3216 = vmatpush1.msra.mxu0 0.0
    %3217 = vmatprep.subr.mxu0 0.0
    %3218 = vmatpush1.msra.mxu0 0.0
    %3219 = vmatprep.subr.mxu0 0.0
    %3220 = vmatpush1.msra.mxu0 0.0
    %3221 = vmatprep.subr.mxu0 0.0
    %3222 = vmatpush1.msra.mxu0 0.0
    %3223 = vmatprep.subr.mxu0 0.0
    %3224 = vmatpush1.msra.mxu0 0.0
    %3225 = vmatprep.subr.mxu0 0.0
    %3226 = vmatpush1.msra.mxu0 0.0
    %3227 = vmatprep.subr.mxu0 0.0
    %3228 = vmatpush1.msra.mxu0 0.0
    %3229 = vmatprep.subr.mxu0 0.0
    %3230 = vmatpush1.msra.mxu0 0.0
    %3231 = vmatprep.subr.mxu0 0.0
    %3232 = vmatpush1.msra.mxu0 0.0
    %3233 = vmatprep.subr.mxu0 0.0
    %3234 = vmatpush1.msra.mxu0 0.0
    %3235 = vmatprep.subr.mxu0 0.0
    %3236 = vmatpush1.msra.mxu0 0.0
    %3237 = vmatprep.subr.mxu0 0.0
    %3238 = vmatpush1.msra.mxu0 0.0
    %3239 = vmatprep.subr.mxu0 0.0
    %3240 = vmatpush1.msra.mxu0 0.0
    %3241 = vmatprep.subr.mxu0 0.0
    %3242 = vmatpush1.msra.mxu0 0.0
    %3243 = vmatprep.subr.mxu0 0.0
    %3244 = vmatpush1.msra.mxu0 0.0
    %3245 = vmatprep.subr.mxu0 0.0
    %3246 = vmatpush1.msra.mxu0 0.0
    %3247 = vmatprep.subr.mxu0 0.0
    %3248 = vmatpush1.msra.mxu0 0.0
    %3249 = vmatprep.subr.mxu0 0.0
    %3250 = vmatpush1.msra.mxu0 0.0
    %3251 = vmatprep.subr.mxu0 0.0
    %3252 = vmatpush1.msra.mxu0 0.0
    %3253 = vmatprep.subr.mxu0 0.0
    %3254 = vmatpush1.msra.mxu0 0.0
    %3255 = vmatprep.subr.mxu0 0.0
    %3256 = vmatpush1.msra.mxu0 0.0
    %3257 = vmatprep.subr.mxu0 0.0
    %3258 = vmatpush1.msra.mxu0 0.0
    %3259 = vmatprep.subr.mxu0 0.0
    %3260 = vmatpush1.msra.mxu0 0.0
    %3261 = vmatprep.subr.mxu0 0.0
    %3262 = vmatpush1.msra.mxu0 0.0
    %3263 = vmatprep.subr.mxu0 0.0
    %3264 = vmatpush1.msra.mxu0 0.0
    %3265 = vmatprep.subr.mxu0 0.0
    %3266 = vmatpush1.msra.mxu0 0.0
    %3267 = vmatprep.subr.mxu0 0.0
    %3268 = vmatpush1.msra.mxu0 0.0
    %3269 = vmatprep.mubr.f32.mxu0 0.0
    %3270 = vmatmul.mubr.f32.gmra.mrb[0].mxu0 %v3203
    %v3271 = vpop.f32.mrb[0].mxu0
    %v3272 = vadd.f32 0.0, %v3271
    %v3273 = vpop.f32.mrb[0].mxu0
    %3274 = vdwg.mxu0
    %v3275 = vld [vmem:[%s3] sm:$0xff]
    %v3276 = vld [vmem:[%s3 + $0x8] sm:$0xff]
    %v3277 = vld [vmem:[%s3 + $0x10] sm:$0xff]
    %v3278 = vld [vmem:[%s3 + $0x18] sm:$0xff]
    %v3279 = vld [vmem:[%s3 + $0x20] sm:$0xff]
    %v3280 = vld [vmem:[%s3 + $0x28] sm:$0xff]
    %v3281 = vld [vmem:[%s3 + $0x30] sm:$0xff]
    %v3282 = vld [vmem:[%s3 + $0x38] sm:$0xff]
    %v3284 = vsel %vm1986, %v2761, 0
    %3286 = vmatprep.subr.mxu0 0.0
    %3287 = vmatpush1.msra.mxu0 %v3275
    %3288 = vmatprep.subr.mxu0 0.0
    %3289 = vmatpush1.msra.mxu0 0.0
    %3290 = vmatprep.subr.mxu0 0.0
    %3291 = vmatpush1.msra.mxu0 0.0
    %3292 = vmatprep.subr.mxu0 0.0
    %3293 = vmatpush1.msra.mxu0 0.0
    %3294 = vmatprep.subr.mxu0 0.0
    %3295 = vmatpush1.msra.mxu0 0.0
    %3296 = vmatprep.subr.mxu0 0.0
    %3297 = vmatpush1.msra.mxu0 0.0
    %3298 = vmatprep.subr.mxu0 0.0
    %3299 = vmatpush1.msra.mxu0 0.0
    %3300 = vmatprep.subr.mxu0 0.0
    %3301 = vmatpush1.msra.mxu0 0.0
    %3302 = vmatprep.subr.mxu0 0.0
    %3303 = vmatpush1.msra.mxu0 0.0
    %3304 = vmatprep.subr.mxu0 0.0
    %3305 = vmatpush1.msra.mxu0 0.0
    %3306 = vmatprep.subr.mxu0 0.0
    %3307 = vmatpush1.msra.mxu0 0.0
    %3308 = vmatprep.subr.mxu0 0.0
    %3309 = vmatpush1.msra.mxu0 0.0
    %3310 = vmatprep.subr.mxu0 0.0
    %3311 = vmatpush1.msra.mxu0 0.0
    %3312 = vmatprep.subr.mxu0 0.0
    %3313 = vmatpush1.msra.mxu0 0.0
    %3314 = vmatprep.subr.mxu0 0.0
    %3315 = vmatpush1.msra.mxu0 0.0
    %3316 = vmatprep.subr.mxu0 0.0
    %3317 = vmatpush1.msra.mxu0 0.0
    %3318 = vmatprep.subr.mxu0 0.0
    %3319 = vmatpush1.msra.mxu0 0.0
    %3320 = vmatprep.subr.mxu0 0.0
    %3321 = vmatpush1.msra.mxu0 0.0
    %3322 = vmatprep.subr.mxu0 0.0
    %3323 = vmatpush1.msra.mxu0 0.0
    %3324 = vmatprep.subr.mxu0 0.0
    %3325 = vmatpush1.msra.mxu0 0.0
    %3326 = vmatprep.subr.mxu0 0.0
    %3327 = vmatpush1.msra.mxu0 0.0
    %3328 = vmatprep.subr.mxu0 0.0
    %3329 = vmatpush1.msra.mxu0 0.0
    %3330 = vmatprep.subr.mxu0 0.0
    %3331 = vmatpush1.msra.mxu0 0.0
    %3332 = vmatprep.subr.mxu0 0.0
    %3333 = vmatpush1.msra.mxu0 0.0
    %3334 = vmatprep.subr.mxu0 0.0
    %3335 = vmatpush1.msra.mxu0 0.0
    %3336 = vmatprep.subr.mxu0 0.0
    %3337 = vmatpush1.msra.mxu0 0.0
    %3338 = vmatprep.subr.mxu0 0.0
    %3339 = vmatpush1.msra.mxu0 0.0
    %3340 = vmatprep.subr.mxu0 0.0
    %3341 = vmatpush1.msra.mxu0 0.0
    %3342 = vmatprep.subr.mxu0 0.0
    %3343 = vmatpush1.msra.mxu0 0.0
    %3344 = vmatprep.subr.mxu0 0.0
    %3345 = vmatpush1.msra.mxu0 0.0
    %3346 = vmatprep.subr.mxu0 0.0
    %3347 = vmatpush1.msra.mxu0 0.0
    %3348 = vmatprep.subr.mxu0 0.0
    %3349 = vmatpush1.msra.mxu0 0.0
    %3350 = vmatprep.mubr.f32.mxu0 0.0
    %3351 = vmatmul.mubr.f32.gmra.mrb[0].mxu0 %v3284
    %v3352 = vpop.f32.mrb[0].mxu0
    %v3353 = vadd.f32 0.0, %v3352
    %v3354 = vpop.f32.mrb[0].mxu0
    %3355 = vdwg.mxu0
    %v3357 = vsel %vm1986, %v2834, 0
    %3359 = vmatprep.subr.mxu0 0.0
    %3360 = vmatpush1.msra.mxu0 %v3276
    %3361 = vmatprep.subr.mxu0 0.0
    %3362 = vmatpush1.msra.mxu0 0.0
    %3363 = vmatprep.subr.mxu0 0.0
    %3364 = vmatpush1.msra.mxu0 0.0
    %3365 = vmatprep.subr.mxu0 0.0
    %3366 = vmatpush1.msra.mxu0 0.0
    %3367 = vmatprep.subr.mxu0 0.0
    %3368 = vmatpush1.msra.mxu0 0.0
    %3369 = vmatprep.subr.mxu0 0.0
    %3370 = vmatpush1.msra.mxu0 0.0
    %3371 = vmatprep.subr.mxu0 0.0
    %3372 = vmatpush1.msra.mxu0 0.0
    %3373 = vmatprep.subr.mxu0 0.0
    %3374 = vmatpush1.msra.mxu0 0.0
    %3375 = vmatprep.subr.mxu0 0.0
    %3376 = vmatpush1.msra.mxu0 0.0
    %3377 = vmatprep.subr.mxu0 0.0
    %3378 = vmatpush1.msra.mxu0 0.0
    %3379 = vmatprep.subr.mxu0 0.0
    %3380 = vmatpush1.msra.mxu0 0.0
    %3381 = vmatprep.subr.mxu0 0.0
    %3382 = vmatpush1.msra.mxu0 0.0
    %3383 = vmatprep.subr.mxu0 0.0
    %3384 = vmatpush1.msra.mxu0 0.0
    %3385 = vmatprep.subr.mxu0 0.0
    %3386 = vmatpush1.msra.mxu0 0.0
    %3387 = vmatprep.subr.mxu0 0.0
    %3388 = vmatpush1.msra.mxu0 0.0
    %3389 = vmatprep.subr.mxu0 0.0
    %3390 = vmatpush1.msra.mxu0 0.0
    %3391 = vmatprep.subr.mxu0 0.0
    %3392 = vmatpush1.msra.mxu0 0.0
    %3393 = vmatprep.subr.mxu0 0.0
    %3394 = vmatpush1.msra.mxu0 0.0
    %3395 = vmatprep.subr.mxu0 0.0
    %3396 = vmatpush1.msra.mxu0 0.0
    %3397 = vmatprep.subr.mxu0 0.0
    %3398 = vmatpush1.msra.mxu0 0.0
    %3399 = vmatprep.subr.mxu0 0.0
    %3400 = vmatpush1.msra.mxu0 0.0
    %3401 = vmatprep.subr.mxu0 0.0
    %3402 = vmatpush1.msra.mxu0 0.0
    %3403 = vmatprep.subr.mxu0 0.0
    %3404 = vmatpush1.msra.mxu0 0.0
    %3405 = vmatprep.subr.mxu0 0.0
    %3406 = vmatpush1.msra.mxu0 0.0
    %3407 = vmatprep.subr.mxu0 0.0
    %3408 = vmatpush1.msra.mxu0 0.0
    %3409 = vmatprep.subr.mxu0 0.0
    %3410 = vmatpush1.msra.mxu0 0.0
    %3411 = vmatprep.subr.mxu0 0.0
    %3412 = vmatpush1.msra.mxu0 0.0
    %3413 = vmatprep.subr.mxu0 0.0
    %3414 = vmatpush1.msra.mxu0 0.0
    %3415 = vmatprep.subr.mxu0 0.0
    %3416 = vmatpush1.msra.mxu0 0.0
    %3417 = vmatprep.subr.mxu0 0.0
    %3418 = vmatpush1.msra.mxu0 0.0
    %3419 = vmatprep.subr.mxu0 0.0
    %3420 = vmatpush1.msra.mxu0 0.0
    %3421 = vmatprep.subr.mxu0 0.0
    %3422 = vmatpush1.msra.mxu0 0.0
    %3423 = vmatprep.mubr.f32.mxu0 0.0
    %3424 = vmatmul.mubr.f32.gmra.mrb[0].mxu0 %v3357
    %v3425 = vpop.f32.mrb[0].mxu0
    %v3426 = vadd.f32 0.0, %v3425
    %v3427 = vpop.f32.mrb[0].mxu0
    %3428 = vdwg.mxu0
    %v3430 = vsel %vm1986, %v2907, 0
    %3432 = vmatprep.subr.mxu0 0.0
    %3433 = vmatpush1.msra.mxu0 %v3277
    %3434 = vmatprep.subr.mxu0 0.0
    %3435 = vmatpush1.msra.mxu0 0.0
    %3436 = vmatprep.subr.mxu0 0.0
    %3437 = vmatpush1.msra.mxu0 0.0
    %3438 = vmatprep.subr.mxu0 0.0
    %3439 = vmatpush1.msra.mxu0 0.0
    %3440 = vmatprep.subr.mxu0 0.0
    %3441 = vmatpush1.msra.mxu0 0.0
    %3442 = vmatprep.subr.mxu0 0.0
    %3443 = vmatpush1.msra.mxu0 0.0
    %3444 = vmatprep.subr.mxu0 0.0
    %3445 = vmatpush1.msra.mxu0 0.0
    %3446 = vmatprep.subr.mxu0 0.0
    %3447 = vmatpush1.msra.mxu0 0.0
    %3448 = vmatprep.subr.mxu0 0.0
    %3449 = vmatpush1.msra.mxu0 0.0
    %3450 = vmatprep.subr.mxu0 0.0
    %3451 = vmatpush1.msra.mxu0 0.0
    %3452 = vmatprep.subr.mxu0 0.0
    %3453 = vmatpush1.msra.mxu0 0.0
    %3454 = vmatprep.subr.mxu0 0.0
    %3455 = vmatpush1.msra.mxu0 0.0
    %3456 = vmatprep.subr.mxu0 0.0
    %3457 = vmatpush1.msra.mxu0 0.0
    %3458 = vmatprep.subr.mxu0 0.0
    %3459 = vmatpush1.msra.mxu0 0.0
    %3460 = vmatprep.subr.mxu0 0.0
    %3461 = vmatpush1.msra.mxu0 0.0
    %3462 = vmatprep.subr.mxu0 0.0
    %3463 = vmatpush1.msra.mxu0 0.0
    %3464 = vmatprep.subr.mxu0 0.0
    %3465 = vmatpush1.msra.mxu0 0.0
    %3466 = vmatprep.subr.mxu0 0.0
    %3467 = vmatpush1.msra.mxu0 0.0
    %3468 = vmatprep.subr.mxu0 0.0
    %3469 = vmatpush1.msra.mxu0 0.0
    %3470 = vmatprep.subr.mxu0 0.0
    %3471 = vmatpush1.msra.mxu0 0.0
    %3472 = vmatprep.subr.mxu0 0.0
    %3473 = vmatpush1.msra.mxu0 0.0
    %3474 = vmatprep.subr.mxu0 0.0
    %3475 = vmatpush1.msra.mxu0 0.0
    %3476 = vmatprep.subr.mxu0 0.0
    %3477 = vmatpush1.msra.mxu0 0.0
    %3478 = vmatprep.subr.mxu0 0.0
    %3479 = vmatpush1.msra.mxu0 0.0
    %3480 = vmatprep.subr.mxu0 0.0
    %3481 = vmatpush1.msra.mxu0 0.0
    %3482 = vmatprep.subr.mxu0 0.0
    %3483 = vmatpush1.msra.mxu0 0.0
    %3484 = vmatprep.subr.mxu0 0.0
    %3485 = vmatpush1.msra.mxu0 0.0
    %3486 = vmatprep.subr.mxu0 0.0
    %3487 = vmatpush1.msra.mxu0 0.0
    %3488 = vmatprep.subr.mxu0 0.0
    %3489 = vmatpush1.msra.mxu0 0.0
    %3490 = vmatprep.subr.mxu0 0.0
    %3491 = vmatpush1.msra.mxu0 0.0
    %3492 = vmatprep.subr.mxu0 0.0
    %3493 = vmatpush1.msra.mxu0 0.0
    %3494 = vmatprep.subr.mxu0 0.0
    %3495 = vmatpush1.msra.mxu0 0.0
    %3496 = vmatprep.mubr.f32.mxu0 0.0
    %3497 = vmatmul.mubr.f32.gmra.mrb[0].mxu0 %v3430
    %v3498 = vpop.f32.mrb[0].mxu0
    %v3499 = vadd.f32 0.0, %v3498
    %v3500 = vpop.f32.mrb[0].mxu0
    %3501 = vdwg.mxu0
    %v3503 = vsel %vm1986, %v2980, 0
    %3505 = vmatprep.subr.mxu0 0.0
    %3506 = vmatpush1.msra.mxu0 %v3278
    %3507 = vmatprep.subr.mxu0 0.0
    %3508 = vmatpush1.msra.mxu0 0.0
    %3509 = vmatprep.subr.mxu0 0.0
    %3510 = vmatpush1.msra.mxu0 0.0
    %3511 = vmatprep.subr.mxu0 0.0
    %3512 = vmatpush1.msra.mxu0 0.0
    %3513 = vmatprep.subr.mxu0 0.0
    %3514 = vmatpush1.msra.mxu0 0.0
    %3515 = vmatprep.subr.mxu0 0.0
    %3516 = vmatpush1.msra.mxu0 0.0
    %3517 = vmatprep.subr.mxu0 0.0
    %3518 = vmatpush1.msra.mxu0 0.0
    %3519 = vmatprep.subr.mxu0 0.0
    %3520 = vmatpush1.msra.mxu0 0.0
    %3521 = vmatprep.subr.mxu0 0.0
    %3522 = vmatpush1.msra.mxu0 0.0
    %3523 = vmatprep.subr.mxu0 0.0
    %3524 = vmatpush1.msra.mxu0 0.0
    %3525 = vmatprep.subr.mxu0 0.0
    %3526 = vmatpush1.msra.mxu0 0.0
    %3527 = vmatprep.subr.mxu0 0.0
    %3528 = vmatpush1.msra.mxu0 0.0
    %3529 = vmatprep.subr.mxu0 0.0
    %3530 = vmatpush1.msra.mxu0 0.0
    %3531 = vmatprep.subr.mxu0 0.0
    %3532 = vmatpush1.msra.mxu0 0.0
    %3533 = vmatprep.subr.mxu0 0.0
    %3534 = vmatpush1.msra.mxu0 0.0
    %3535 = vmatprep.subr.mxu0 0.0
    %3536 = vmatpush1.msra.mxu0 0.0
    %3537 = vmatprep.subr.mxu0 0.0
    %3538 = vmatpush1.msra.mxu0 0.0
    %3539 = vmatprep.subr.mxu0 0.0
    %3540 = vmatpush1.msra.mxu0 0.0
    %3541 = vmatprep.subr.mxu0 0.0
    %3542 = vmatpush1.msra.mxu0 0.0
    %3543 = vmatprep.subr.mxu0 0.0
    %3544 = vmatpush1.msra.mxu0 0.0
    %3545 = vmatprep.subr.mxu0 0.0
    %3546 = vmatpush1.msra.mxu0 0.0
    %3547 = vmatprep.subr.mxu0 0.0
    %3548 = vmatpush1.msra.mxu0 0.0
    %3549 = vmatprep.subr.mxu0 0.0
    %3550 = vmatpush1.msra.mxu0 0.0
    %3551 = vmatprep.subr.mxu0 0.0
    %3552 = vmatpush1.msra.mxu0 0.0
    %3553 = vmatprep.subr.mxu0 0.0
    %3554 = vmatpush1.msra.mxu0 0.0
    %3555 = vmatprep.subr.mxu0 0.0
    %3556 = vmatpush1.msra.mxu0 0.0
    %3557 = vmatprep.subr.mxu0 0.0
    %3558 = vmatpush1.msra.mxu0 0.0
    %3559 = vmatprep.subr.mxu0 0.0
    %3560 = vmatpush1.msra.mxu0 0.0
    %3561 = vmatprep.subr.mxu0 0.0
    %3562 = vmatpush1.msra.mxu0 0.0
    %3563 = vmatprep.subr.mxu0 0.0
    %3564 = vmatpush1.msra.mxu0 0.0
    %3565 = vmatprep.subr.mxu0 0.0
    %3566 = vmatpush1.msra.mxu0 0.0
    %3567 = vmatprep.subr.mxu0 0.0
    %3568 = vmatpush1.msra.mxu0 0.0
    %3569 = vmatprep.mubr.f32.mxu0 0.0
    %3570 = vmatmul.mubr.f32.gmra.mrb[0].mxu0 %v3503
    %v3571 = vpop.f32.mrb[0].mxu0
    %v3572 = vadd.f32 0.0, %v3571
    %v3573 = vpop.f32.mrb[0].mxu0
    %3574 = vdwg.mxu0
    %v3576 = vsel %vm1986, %v3053, 0
    %3578 = vmatprep.subr.mxu0 0.0
    %3579 = vmatpush1.msra.mxu0 %v3279
    %3580 = vmatprep.subr.mxu0 0.0
    %3581 = vmatpush1.msra.mxu0 0.0
    %3582 = vmatprep.subr.mxu0 0.0
    %3583 = vmatpush1.msra.mxu0 0.0
    %3584 = vmatprep.subr.mxu0 0.0
    %3585 = vmatpush1.msra.mxu0 0.0
    %3586 = vmatprep.subr.mxu0 0.0
    %3587 = vmatpush1.msra.mxu0 0.0
    %3588 = vmatprep.subr.mxu0 0.0
    %3589 = vmatpush1.msra.mxu0 0.0
    %3590 = vmatprep.subr.mxu0 0.0
    %3591 = vmatpush1.msra.mxu0 0.0
    %3592 = vmatprep.subr.mxu0 0.0
    %3593 = vmatpush1.msra.mxu0 0.0
    %3594 = vmatprep.subr.mxu0 0.0
    %3595 = vmatpush1.msra.mxu0 0.0
    %3596 = vmatprep.subr.mxu0 0.0
    %3597 = vmatpush1.msra.mxu0 0.0
    %3598 = vmatprep.subr.mxu0 0.0
    %3599 = vmatpush1.msra.mxu0 0.0
    %3600 = vmatprep.subr.mxu0 0.0
    %3601 = vmatpush1.msra.mxu0 0.0
    %3602 = vmatprep.subr.mxu0 0.0
    %3603 = vmatpush1.msra.mxu0 0.0
    %3604 = vmatprep.subr.mxu0 0.0
    %3605 = vmatpush1.msra.mxu0 0.0
    %3606 = vmatprep.subr.mxu0 0.0
    %3607 = vmatpush1.msra.mxu0 0.0
    %3608 = vmatprep.subr.mxu0 0.0
    %3609 = vmatpush1.msra.mxu0 0.0
    %3610 = vmatprep.subr.mxu0 0.0
    %3611 = vmatpush1.msra.mxu0 0.0
    %3612 = vmatprep.subr.mxu0 0.0
    %3613 = vmatpush1.msra.mxu0 0.0
    %3614 = vmatprep.subr.mxu0 0.0
    %3615 = vmatpush1.msra.mxu0 0.0
    %3616 = vmatprep.subr.mxu0 0.0
    %3617 = vmatpush1.msra.mxu0 0.0
    %3618 = vmatprep.subr.mxu0 0.0
    %3619 = vmatpush1.msra.mxu0 0.0
    %3620 = vmatprep.subr.mxu0 0.0
    %3621 = vmatpush1.msra.mxu0 0.0
    %3622 = vmatprep.subr.mxu0 0.0
    %3623 = vmatpush1.msra.mxu0 0.0
    %3624 = vmatprep.subr.mxu0 0.0
    %3625 = vmatpush1.msra.mxu0 0.0
    %3626 = vmatprep.subr.mxu0 0.0
    %3627 = vmatpush1.msra.mxu0 0.0
    %3628 = vmatprep.subr.mxu0 0.0
    %3629 = vmatpush1.msra.mxu0 0.0
    %3630 = vmatprep.subr.mxu0 0.0
    %3631 = vmatpush1.msra.mxu0 0.0
    %3632 = vmatprep.subr.mxu0 0.0
    %3633 = vmatpush1.msra.mxu0 0.0
    %3634 = vmatprep.subr.mxu0 0.0
    %3635 = vmatpush1.msra.mxu0 0.0
    %3636 = vmatprep.subr.mxu0 0.0
    %3637 = vmatpush1.msra.mxu0 0.0
    %3638 = vmatprep.subr.mxu0 0.0
    %3639 = vmatpush1.msra.mxu0 0.0
    %3640 = vmatprep.subr.mxu0 0.0
    %3641 = vmatpush1.msra.mxu0 0.0
    %3642 = vmatprep.mubr.f32.mxu0 0.0
    %3643 = vmatmul.mubr.f32.gmra.mrb[0].mxu0 %v3576
    %v3644 = vpop.f32.mrb[0].mxu0
    %v3645 = vadd.f32 0.0, %v3644
    %v3646 = vpop.f32.mrb[0].mxu0
    %3647 = vdwg.mxu0
    %v3649 = vsel %vm1986, %v3126, 0
    %3651 = vmatprep.subr.mxu0 0.0
    %3652 = vmatpush1.msra.mxu0 %v3280
    %3653 = vmatprep.subr.mxu0 0.0
    %3654 = vmatpush1.msra.mxu0 0.0
    %3655 = vmatprep.subr.mxu0 0.0
    %3656 = vmatpush1.msra.mxu0 0.0
    %3657 = vmatprep.subr.mxu0 0.0
    %3658 = vmatpush1.msra.mxu0 0.0
    %3659 = vmatprep.subr.mxu0 0.0
    %3660 = vmatpush1.msra.mxu0 0.0
    %3661 = vmatprep.subr.mxu0 0.0
    %3662 = vmatpush1.msra.mxu0 0.0
    %3663 = vmatprep.subr.mxu0 0.0
    %3664 = vmatpush1.msra.mxu0 0.0
    %3665 = vmatprep.subr.mxu0 0.0
    %3666 = vmatpush1.msra.mxu0 0.0
    %3667 = vmatprep.subr.mxu0 0.0
    %3668 = vmatpush1.msra.mxu0 0.0
    %3669 = vmatprep.subr.mxu0 0.0
    %3670 = vmatpush1.msra.mxu0 0.0
    %3671 = vmatprep.subr.mxu0 0.0
    %3672 = vmatpush1.msra.mxu0 0.0
    %3673 = vmatprep.subr.mxu0 0.0
    %3674 = vmatpush1.msra.mxu0 0.0
    %3675 = vmatprep.subr.mxu0 0.0
    %3676 = vmatpush1.msra.mxu0 0.0
    %3677 = vmatprep.subr.mxu0 0.0
    %3678 = vmatpush1.msra.mxu0 0.0
    %3679 = vmatprep.subr.mxu0 0.0
    %3680 = vmatpush1.msra.mxu0 0.0
    %3681 = vmatprep.subr.mxu0 0.0
    %3682 = vmatpush1.msra.mxu0 0.0
    %3683 = vmatprep.subr.mxu0 0.0
    %3684 = vmatpush1.msra.mxu0 0.0
    %3685 = vmatprep.subr.mxu0 0.0
    %3686 = vmatpush1.msra.mxu0 0.0
    %3687 = vmatprep.subr.mxu0 0.0
    %3688 = vmatpush1.msra.mxu0 0.0
    %3689 = vmatprep.subr.mxu0 0.0
    %3690 = vmatpush1.msra.mxu0 0.0
    %3691 = vmatprep.subr.mxu0 0.0
    %3692 = vmatpush1.msra.mxu0 0.0
    %3693 = vmatprep.subr.mxu0 0.0
    %3694 = vmatpush1.msra.mxu0 0.0
    %3695 = vmatprep.subr.mxu0 0.0
    %3696 = vmatpush1.msra.mxu0 0.0
    %3697 = vmatprep.subr.mxu0 0.0
    %3698 = vmatpush1.msra.mxu0 0.0
    %3699 = vmatprep.subr.mxu0 0.0
    %3700 = vmatpush1.msra.mxu0 0.0
    %3701 = vmatprep.subr.mxu0 0.0
    %3702 = vmatpush1.msra.mxu0 0.0
    %3703 = vmatprep.subr.mxu0 0.0
    %3704 = vmatpush1.msra.mxu0 0.0
    %3705 = vmatprep.subr.mxu0 0.0
    %3706 = vmatpush1.msra.mxu0 0.0
    %3707 = vmatprep.subr.mxu0 0.0
    %3708 = vmatpush1.msra.mxu0 0.0
    %3709 = vmatprep.subr.mxu0 0.0
    %3710 = vmatpush1.msra.mxu0 0.0
    %3711 = vmatprep.subr.mxu0 0.0
    %3712 = vmatpush1.msra.mxu0 0.0
    %3713 = vmatprep.subr.mxu0 0.0
    %3714 = vmatpush1.msra.mxu0 0.0
    %3715 = vmatprep.mubr.f32.mxu0 0.0
    %3716 = vmatmul.mubr.f32.gmra.mrb[0].mxu0 %v3649
    %v3717 = vpop.f32.mrb[0].mxu0
    %v3718 = vadd.f32 0.0, %v3717
    %v3719 = vpop.f32.mrb[0].mxu0
    %3720 = vdwg.mxu0
    %v3722 = vsel %vm1986, %v3199, 0
    %3724 = vmatprep.subr.mxu0 0.0
    %3725 = vmatpush1.msra.mxu0 %v3281
    %3726 = vmatprep.subr.mxu0 0.0
    %3727 = vmatpush1.msra.mxu0 0.0
    %3728 = vmatprep.subr.mxu0 0.0
    %3729 = vmatpush1.msra.mxu0 0.0
    %3730 = vmatprep.subr.mxu0 0.0
    %3731 = vmatpush1.msra.mxu0 0.0
    %3732 = vmatprep.subr.mxu0 0.0
    %3733 = vmatpush1.msra.mxu0 0.0
    %3734 = vmatprep.subr.mxu0 0.0
    %3735 = vmatpush1.msra.mxu0 0.0
    %3736 = vmatprep.subr.mxu0 0.0
    %3737 = vmatpush1.msra.mxu0 0.0
    %3738 = vmatprep.subr.mxu0 0.0
    %3739 = vmatpush1.msra.mxu0 0.0
    %3740 = vmatprep.subr.mxu0 0.0
    %3741 = vmatpush1.msra.mxu0 0.0
    %3742 = vmatprep.subr.mxu0 0.0
    %3743 = vmatpush1.msra.mxu0 0.0
    %3744 = vmatprep.subr.mxu0 0.0
    %3745 = vmatpush1.msra.mxu0 0.0
    %3746 = vmatprep.subr.mxu0 0.0
    %3747 = vmatpush1.msra.mxu0 0.0
    %3748 = vmatprep.subr.mxu0 0.0
    %3749 = vmatpush1.msra.mxu0 0.0
    %3750 = vmatprep.subr.mxu0 0.0
    %3751 = vmatpush1.msra.mxu0 0.0
    %3752 = vmatprep.subr.mxu0 0.0
    %3753 = vmatpush1.msra.mxu0 0.0
    %3754 = vmatprep.subr.mxu0 0.0
    %3755 = vmatpush1.msra.mxu0 0.0
    %3756 = vmatprep.subr.mxu0 0.0
    %3757 = vmatpush1.msra.mxu0 0.0
    %3758 = vmatprep.subr.mxu0 0.0
    %3759 = vmatpush1.msra.mxu0 0.0
    %3760 = vmatprep.subr.mxu0 0.0
    %3761 = vmatpush1.msra.mxu0 0.0
    %3762 = vmatprep.subr.mxu0 0.0
    %3763 = vmatpush1.msra.mxu0 0.0
    %3764 = vmatprep.subr.mxu0 0.0
    %3765 = vmatpush1.msra.mxu0 0.0
    %3766 = vmatprep.subr.mxu0 0.0
    %3767 = vmatpush1.msra.mxu0 0.0
    %3768 = vmatprep.subr.mxu0 0.0
    %3769 = vmatpush1.msra.mxu0 0.0
    %3770 = vmatprep.subr.mxu0 0.0
    %3771 = vmatpush1.msra.mxu0 0.0
    %3772 = vmatprep.subr.mxu0 0.0
    %3773 = vmatpush1.msra.mxu0 0.0
    %3774 = vmatprep.subr.mxu0 0.0
    %3775 = vmatpush1.msra.mxu0 0.0
    %3776 = vmatprep.subr.mxu0 0.0
    %3777 = vmatpush1.msra.mxu0 0.0
    %3778 = vmatprep.subr.mxu0 0.0
    %3779 = vmatpush1.msra.mxu0 0.0
    %3780 = vmatprep.subr.mxu0 0.0
    %3781 = vmatpush1.msra.mxu0 0.0
    %3782 = vmatprep.subr.mxu0 0.0
    %3783 = vmatpush1.msra.mxu0 0.0
    %3784 = vmatprep.subr.mxu0 0.0
    %3785 = vmatpush1.msra.mxu0 0.0
    %3786 = vmatprep.subr.mxu0 0.0
    %3787 = vmatpush1.msra.mxu0 0.0
    %3788 = vmatprep.mubr.f32.mxu0 0.0
    %3789 = vmatmul.mubr.f32.gmra.mrb[0].mxu0 %v3722
    %v3790 = vpop.f32.mrb[0].mxu0
    %v3791 = vadd.f32 0.0, %v3790
    %v3792 = vpop.f32.mrb[0].mxu0
    %3793 = vdwg.mxu0
    %v3795 = vsel %vm1986, %v3272, 0
    %3797 = vmatprep.subr.mxu0 0.0
    %3798 = vmatpush1.msra.mxu0 %v3282
    %3799 = vmatprep.subr.mxu0 0.0
    %3800 = vmatpush1.msra.mxu0 0.0
    %3801 = vmatprep.subr.mxu0 0.0
    %3802 = vmatpush1.msra.mxu0 0.0
    %3803 = vmatprep.subr.mxu0 0.0
    %3804 = vmatpush1.msra.mxu0 0.0
    %3805 = vmatprep.subr.mxu0 0.0
    %3806 = vmatpush1.msra.mxu0 0.0
    %3807 = vmatprep.subr.mxu0 0.0
    %3808 = vmatpush1.msra.mxu0 0.0
    %3809 = vmatprep.subr.mxu0 0.0
    %3810 = vmatpush1.msra.mxu0 0.0
    %3811 = vmatprep.subr.mxu0 0.0
    %3812 = vmatpush1.msra.mxu0 0.0
    %3813 = vmatprep.subr.mxu0 0.0
    %3814 = vmatpush1.msra.mxu0 0.0
    %3815 = vmatprep.subr.mxu0 0.0
    %3816 = vmatpush1.msra.mxu0 0.0
    %3817 = vmatprep.subr.mxu0 0.0
    %3818 = vmatpush1.msra.mxu0 0.0
    %3819 = vmatprep.subr.mxu0 0.0
    %3820 = vmatpush1.msra.mxu0 0.0
    %3821 = vmatprep.subr.mxu0 0.0
    %3822 = vmatpush1.msra.mxu0 0.0
    %3823 = vmatprep.subr.mxu0 0.0
    %3824 = vmatpush1.msra.mxu0 0.0
    %3825 = vmatprep.subr.mxu0 0.0
    %3826 = vmatpush1.msra.mxu0 0.0
    %3827 = vmatprep.subr.mxu0 0.0
    %3828 = vmatpush1.msra.mxu0 0.0
    %3829 = vmatprep.subr.mxu0 0.0
    %3830 = vmatpush1.msra.mxu0 0.0
    %3831 = vmatprep.subr.mxu0 0.0
    %3832 = vmatpush1.msra.mxu0 0.0
    %3833 = vmatprep.subr.mxu0 0.0
    %3834 = vmatpush1.msra.mxu0 0.0
    %3835 = vmatprep.subr.mxu0 0.0
    %3836 = vmatpush1.msra.mxu0 0.0
    %3837 = vmatprep.subr.mxu0 0.0
    %3838 = vmatpush1.msra.mxu0 0.0
    %3839 = vmatprep.subr.mxu0 0.0
    %3840 = vmatpush1.msra.mxu0 0.0
    %3841 = vmatprep.subr.mxu0 0.0
    %3842 = vmatpush1.msra.mxu0 0.0
    %3843 = vmatprep.subr.mxu0 0.0
    %3844 = vmatpush1.msra.mxu0 0.0
    %3845 = vmatprep.subr.mxu0 0.0
    %3846 = vmatpush1.msra.mxu0 0.0
    %3847 = vmatprep.subr.mxu0 0.0
    %3848 = vmatpush1.msra.mxu0 0.0
    %3849 = vmatprep.subr.mxu0 0.0
    %3850 = vmatpush1.msra.mxu0 0.0
    %3851 = vmatprep.subr.mxu0 0.0
    %3852 = vmatpush1.msra.mxu0 0.0
    %3853 = vmatprep.subr.mxu0 0.0
    %3854 = vmatpush1.msra.mxu0 0.0
    %3855 = vmatprep.subr.mxu0 0.0
    %3856 = vmatpush1.msra.mxu0 0.0
    %3857 = vmatprep.subr.mxu0 0.0
    %3858 = vmatpush1.msra.mxu0 0.0
    %3859 = vmatprep.subr.mxu0 0.0
    %3860 = vmatpush1.msra.mxu0 0.0
    %3861 = vmatprep.mubr.f32.mxu0 0.0
    %3862 = vmatmul.mubr.f32.gmra.mrb[0].mxu0 %v3795
    %v3863 = vpop.f32.mrb[0].mxu0
    %v3864 = vadd.f32 0.0, %v3863
    %v3865 = vpop.f32.mrb[0].mxu0
    %3866 = vdwg.mxu0
    %v3867 = vsel %vm299, %v3353, 0.0
    %v3868 = vsel %vm299, %v3426, 0.0
    %v3869 = vadd.f32 %v3867, %v3868
    %v3870 = vsel %vm299, %v3499, 0.0
    %v3871 = vadd.f32 %v3869, %v3870
    %v3872 = vsel %vm299, %v3572, 0.0
    %v3873 = vadd.f32 %v3871, %v3872
    %v3874 = vsel %vm299, %v3645, 0.0
    %v3875 = vsel %vm299, %v3718, 0.0
    %v3876 = vadd.f32 %v3874, %v3875
    %v3877 = vsel %vm299, %v3791, 0.0
    %v3878 = vadd.f32 %v3876, %v3877
    %v3879 = vsel %vm299, %v3864, 0.0
    %v3880 = vadd.f32 %v3878, %v3879
    %v3881 = vld [vmem:[%s4] sm:$0x1]
    %v3883 = vlaneseq
    %v3884 = vshrl.u32 %v3883, 7
    %v3885 = vsub.s32 0, %v3884
    %v3886 = vrot.slane %v3881, %v3885
    %v3888 = vadd.f32 %v3873, %v3886
    %v3889 = vadd.f32 %v3880, %v3886
    %v3890 = vadd.f32 %v33, %v3888
    %v3891 = vadd.f32 %v34, %v3889
    %v3892 = vld [vmem:[%s5] sm:$0xff]
    %v3893 = vld [vmem:[%s5 + $0x8] sm:$0xff]
    %v3894 = vld [vmem:[%s5 + $0x10] sm:$0xff]
    %v3895 = vld [vmem:[%s5 + $0x18] sm:$0xff]
    %v3896 = vld [vmem:[%s6] sm:$0x1]
    %v3898 = vlaneseq
    %v3899 = vshrl.u32 %v3898, 7
    %v3900 = vsub.s32 0, %v3899
    %v3901 = vrot.slane %v3896, %v3900
    %v3904 = vsel %vm299, %v3890, 0
    %v3907 = vsel %vm299, %v3891, 0
    %3909 = vmatprep.subr.mxu0 0.0
    %3910 = vmatpush1.msra.mxu0 %v3892
    %3911 = vmatprep.subr.mxu0 0.0
    %3912 = vmatpush1.msra.mxu0 %v3893
    %3913 = vmatprep.subr.mxu0 0.0
    %3914 = vmatpush1.msra.mxu0 %v3894
    %3915 = vmatprep.subr.mxu0 0.0
    %3916 = vmatpush1.msra.mxu0 %v3895
    %3917 = vmatprep.subr.mxu0 0.0
    %3918 = vmatpush1.msra.mxu0 0.0
    %3919 = vmatprep.subr.mxu0 0.0
    %3920 = vmatpush1.msra.mxu0 0.0
    %3921 = vmatprep.subr.mxu0 0.0
    %3922 = vmatpush1.msra.mxu0 0.0
    %3923 = vmatprep.subr.mxu0 0.0
    %3924 = vmatpush1.msra.mxu0 0.0
    %3925 = vmatprep.subr.mxu0 0.0
    %3926 = vmatpush1.msra.mxu0 0.0
    %3927 = vmatprep.subr.mxu0 0.0
    %3928 = vmatpush1.msra.mxu0 0.0
    %3929 = vmatprep.subr.mxu0 0.0
    %3930 = vmatpush1.msra.mxu0 0.0
    %3931 = vmatprep.subr.mxu0 0.0
    %3932 = vmatpush1.msra.mxu0 0.0
    %3933 = vmatprep.subr.mxu0 0.0
    %3934 = vmatpush1.msra.mxu0 0.0
    %3935 = vmatprep.subr.mxu0 0.0
    %3936 = vmatpush1.msra.mxu0 0.0
    %3937 = vmatprep.subr.mxu0 0.0
    %3938 = vmatpush1.msra.mxu0 0.0
    %3939 = vmatprep.subr.mxu0 0.0
    %3940 = vmatpush1.msra.mxu0 0.0
    %3941 = vmatprep.subr.mxu0 0.0
    %3942 = vmatpush1.msra.mxu0 0.0
    %3943 = vmatprep.subr.mxu0 0.0
    %3944 = vmatpush1.msra.mxu0 0.0
    %3945 = vmatprep.subr.mxu0 0.0
    %3946 = vmatpush1.msra.mxu0 0.0
    %3947 = vmatprep.subr.mxu0 0.0
    %3948 = vmatpush1.msra.mxu0 0.0
    %3949 = vmatprep.subr.mxu0 0.0
    %3950 = vmatpush1.msra.mxu0 0.0
    %3951 = vmatprep.subr.mxu0 0.0
    %3952 = vmatpush1.msra.mxu0 0.0
    %3953 = vmatprep.subr.mxu0 0.0
    %3954 = vmatpush1.msra.mxu0 0.0
    %3955 = vmatprep.subr.mxu0 0.0
    %3956 = vmatpush1.msra.mxu0 0.0
    %3957 = vmatprep.subr.mxu0 0.0
    %3958 = vmatpush1.msra.mxu0 0.0
    %3959 = vmatprep.subr.mxu0 0.0
    %3960 = vmatpush1.msra.mxu0 0.0
    %3961 = vmatprep.subr.mxu0 0.0
    %3962 = vmatpush1.msra.mxu0 0.0
    %3963 = vmatprep.subr.mxu0 0.0
    %3964 = vmatpush1.msra.mxu0 0.0
    %3965 = vmatprep.subr.mxu0 0.0
    %3966 = vmatpush1.msra.mxu0 0.0
    %3967 = vmatprep.subr.mxu0 0.0
    %3968 = vmatpush1.msra.mxu0 0.0
    %3969 = vmatprep.subr.mxu0 0.0
    %3970 = vmatpush1.msra.mxu0 0.0
    %3971 = vmatprep.subr.mxu0 0.0
    %3972 = vmatpush1.msra.mxu0 0.0
    %3973 = vmatprep.mubr.f32.mxu0 0.0
    %3974 = vmatmul.mubr.f32.gmra.mrb[0].mxu0 %v3904
    %v3975 = vpop.f32.mrb[0].mxu0
    %v3976 = vadd.f32 %v3901, %v3975
    %v3977 = vpop.f32.mrb[0].mxu0
    %3978 = vmatprep.mubr.f32.mxu0 0.0
    %3979 = vmatmul.mubr.f32.gmra.mrb[0].mxu0 %v3907
    %v3980 = vpop.f32.mrb[0].mxu0
    %v3981 = vadd.f32 %v3901, %v3980
    %v3982 = vpop.f32.mrb[0].mxu0
    %3983 = vdwg.mxu0
    %v3984 = vmax.f32 %v3976, 0.0
    %v3985 = vmax.f32 %v3981, 0.0
    %v3986 = vld [vmem:[%s7] sm:$0xff]
    %v3987 = vld [vmem:[%s7 + $0x8] sm:$0xff]
    %v3988 = vld [vmem:[%s7 + $0x10] sm:$0xff]
    %v3989 = vld [vmem:[%s7 + $0x18] sm:$0xff]
    %v3990 = vld [vmem:[%s7 + $0x20] sm:$0xff]
    %v3991 = vld [vmem:[%s7 + $0x28] sm:$0xff]
    %v3992 = vld [vmem:[%s7 + $0x30] sm:$0xff]
    %v3993 = vld [vmem:[%s7 + $0x38] sm:$0xff]
    %v3994 = vld [vmem:[%s8] sm:$0x1]
    %v3996 = vlaneseq
    %v3997 = vshrl.u32 %v3996, 7
    %v3998 = vsub.s32 0, %v3997
    %v3999 = vrot.slane %v3994, %v3998
    %vm4001 = vcmask 523264
    %v4003 = vsel %vm4001, %v3984, 0
    %v4006 = vsel %vm4001, %v3985, 0
    %4008 = vmatprep.subr.mxu0 0.0
    %4009 = vmatpush1.msra.mxu0 %v3986
    %4010 = vmatprep.subr.mxu0 0.0
    %4011 = vmatpush1.msra.mxu0 %v3987
    %4012 = vmatprep.subr.mxu0 0.0
    %4013 = vmatpush1.msra.mxu0 %v3988
    %4014 = vmatprep.subr.mxu0 0.0
    %4015 = vmatpush1.msra.mxu0 %v3989
    %4016 = vmatprep.subr.mxu0 0.0
    %4017 = vmatpush1.msra.mxu0 %v3990
    %4018 = vmatprep.subr.mxu0 0.0
    %4019 = vmatpush1.msra.mxu0 %v3991
    %4020 = vmatprep.subr.mxu0 0.0
    %4021 = vmatpush1.msra.mxu0 %v3992
    %4022 = vmatprep.subr.mxu0 0.0
    %4023 = vmatpush1.msra.mxu0 %v3993
    %4024 = vmatprep.subr.mxu0 0.0
    %4025 = vmatpush1.msra.mxu0 0.0
    %4026 = vmatprep.subr.mxu0 0.0
    %4027 = vmatpush1.msra.mxu0 0.0
    %4028 = vmatprep.subr.mxu0 0.0
    %4029 = vmatpush1.msra.mxu0 0.0
    %4030 = vmatprep.subr.mxu0 0.0
    %4031 = vmatpush1.msra.mxu0 0.0
    %4032 = vmatprep.subr.mxu0 0.0
    %4033 = vmatpush1.msra.mxu0 0.0
    %4034 = vmatprep.subr.mxu0 0.0
    %4035 = vmatpush1.msra.mxu0 0.0
    %4036 = vmatprep.subr.mxu0 0.0
    %4037 = vmatpush1.msra.mxu0 0.0
    %4038 = vmatprep.subr.mxu0 0.0
    %4039 = vmatpush1.msra.mxu0 0.0
    %4040 = vmatprep.subr.mxu0 0.0
    %4041 = vmatpush1.msra.mxu0 0.0
    %4042 = vmatprep.subr.mxu0 0.0
    %4043 = vmatpush1.msra.mxu0 0.0
    %4044 = vmatprep.subr.mxu0 0.0
    %4045 = vmatpush1.msra.mxu0 0.0
    %4046 = vmatprep.subr.mxu0 0.0
    %4047 = vmatpush1.msra.mxu0 0.0
    %4048 = vmatprep.subr.mxu0 0.0
    %4049 = vmatpush1.msra.mxu0 0.0
    %4050 = vmatprep.subr.mxu0 0.0
    %4051 = vmatpush1.msra.mxu0 0.0
    %4052 = vmatprep.subr.mxu0 0.0
    %4053 = vmatpush1.msra.mxu0 0.0
    %4054 = vmatprep.subr.mxu0 0.0
    %4055 = vmatpush1.msra.mxu0 0.0
    %4056 = vmatprep.subr.mxu0 0.0
    %4057 = vmatpush1.msra.mxu0 0.0
    %4058 = vmatprep.subr.mxu0 0.0
    %4059 = vmatpush1.msra.mxu0 0.0
    %4060 = vmatprep.subr.mxu0 0.0
    %4061 = vmatpush1.msra.mxu0 0.0
    %4062 = vmatprep.subr.mxu0 0.0
    %4063 = vmatpush1.msra.mxu0 0.0
    %4064 = vmatprep.subr.mxu0 0.0
    %4065 = vmatpush1.msra.mxu0 0.0
    %4066 = vmatprep.subr.mxu0 0.0
    %4067 = vmatpush1.msra.mxu0 0.0
    %4068 = vmatprep.subr.mxu0 0.0
    %4069 = vmatpush1.msra.mxu0 0.0
    %4070 = vmatprep.subr.mxu0 0.0
    %4071 = vmatpush1.msra.mxu0 0.0
    %4072 = vmatprep.mubr.f32.mxu0 0.0
    %4073 = vmatmul.mubr.f32.gmra.mrb[0].mxu0 %v4003
    %v4074 = vpop.f32.mrb[0].mxu0
    %v4075 = vadd.f32 %v3999, %v4074
    %v4076 = vpop.f32.mrb[0].mxu0
    %4077 = vmatprep.mubr.f32.mxu0 0.0
    %4078 = vmatmul.mubr.f32.gmra.mrb[0].mxu0 %v4006
    %v4079 = vpop.f32.mrb[0].mxu0
    %v4080 = vadd.f32 %v3999, %v4079
    %v4081 = vpop.f32.mrb[0].mxu0
    %4082 = vdwg.mxu0
    %v4083 = vadd.f32 %v3890, %v4075
    %v4084 = vadd.f32 %v3891, %v4080
    %4085 = vst.msk [vmem:[#allocation2] sm:$0xff] %vm299, %v4083
    %4086 = vst.msk [vmem:[#allocation2 + $0x8] sm:$0xff] %vm299, %v4084
    // Predicated region
    $region38: #{encoder_block.1} parent=1 // pred_check
      _
    $region39: #{encoder_block.1} parent=1 // pred_check_branch
      %4088 = sbr.rel (0) target = $region41
    $region40: #{encoder_block.1} parent=1 // pred_region
      %s4090 = ssub.s32 256, 256
      %4091 = vsyncadd [#allocation3], %s4090
      %s4092 = sshll.u32 [#allocation2], 4
      %s4093 = int_to_ptr.vmem [resolvable:$true] %s4092
      %4098 = dma.vmem_to_hbm [thread:$0]  %s4093, 256, %s9, [#allocation3], 128, 128, 8
    $region41: #{encoder_block.1} parent=1 // pred_fallthru
      _
    // Predicated region
    $region42: #{encoder_block.1} parent=1 // pred_check
      _
    $region43: #{encoder_block.1} parent=1 // pred_check_branch
      %4100 = sbr.rel (0) target = $region45
    $region44: #{encoder_block.1} parent=1 // pred_region
      %4101 = dma.done [#allocation3], 256
    $region45: #{encoder_block.1} parent=1 // pred_fallthru
      _
    %4102 = vsyncpa [#allocation3], 1

</llo_original>
